<compile_context>
chip_gen: v6e
topology: v6e:2x2x1
jax: 0.10.0
libtpu: 0.0.40
codegen_flags: <defaults>
</compile_context>

<pallas_src>
import functools

import jax
import jax.numpy as jnp
from jax import lax
from jax.experimental import pallas as pl
from jax.experimental.pallas import tpu as pltpu

EPS = 1e-5
LANES = 128


def _round_up(x, m):
    return (x + m - 1) // m * m


def _basic_block_kernel(valid_w, x_hbm, w1_ref, s1_ref, b1_ref,
                        w2_ref, s2_ref, b2_ref, out_ref,
                        xwin_ref, h1_ref, sem):
    TH, Wp, Cp = out_ref.shape
    R1 = TH + 2                       # h1 rows: TH output rows + 1-row halo each side
    n = pl.program_id(0)
    rb = pl.program_id(1)
    RB = pl.num_programs(1)
    slot = rb % 2

    def window_copy(row_block, buf_slot):
        # (TH+4) input rows (2-row halo) of image n, full width, all channels.
        return pltpu.make_async_copy(
            x_hbm.at[n, pl.ds(row_block * TH, TH + 4)],
            xwin_ref.at[buf_slot],
            sem.at[buf_slot])

    @pl.when(rb == 0)                 # prime at the start of each image's row sweep
    def _():
        window_copy(rb, slot).start()

    @pl.when(rb + 1 < RB)             # prefetch next row block while computing this one
    def _():
        window_copy(rb + 1, 1 - slot).start()

    window_copy(rb, slot).wait()

    def conv3x3(load_slab, w_ref, rows):
        # 3 MXU matmuls (one per kh); the 3 kw taps are fused along the matmul's
        # output dim (RHS (Cp, 3*Cp)).  Accumulation is value-chained in f32 (no
        # scratch round trips); the +/-1 column shift is applied on the f32 result.
        acc = None
        for kh in range(3):
            lhs = load_slab(kh).reshape(rows * Wp, Cp)     # contiguous, aligned
            y = jnp.dot(lhs, w_ref[kh], preferred_element_type=jnp.float32)
            acc = y if acc is None else acc + y
        y = acc.reshape(rows, Wp, 3 * Cp)
        zc = jnp.zeros((rows, 1, Cp), jnp.float32)
        left = y[:, :Wp - 1, 0 * Cp:1 * Cp]    # kw=0 tap -> contributes to column c+1
        mid = y[:, :, 1 * Cp:2 * Cp]           # kw=1 tap -> column c
        right = y[:, 1:, 2 * Cp:3 * Cp]        # kw=2 tap -> column c-1
        return (mid + jnp.concatenate([zc, left], axis=1)
                + jnp.concatenate([right, zc], axis=1))

    # ---- conv1 + folded bn1 + relu over TH+2 rows (1-row halo for conv2) ----
    h1 = conv3x3(lambda kh: xwin_ref[slot, pl.ds(kh, R1), :, :], w1_ref, R1)
    h1 = jnp.maximum(h1 * s1_ref[...] + b1_ref[...], 0.0)
    if Wp != valid_w:
        # Width was padded to a packing-friendly multiple: force h1 columns >= valid_w
        # to zero so conv2 sees the true zero padding at column valid_w.
        h1 = jnp.concatenate(
            [h1[:, :valid_w, :],
             jnp.zeros((R1, Wp - valid_w, Cp), h1.dtype)], axis=1)
    h1_ref[...] = h1.astype(h1_ref.dtype)       # single aligned full-width store

    # Halo rows of h1 that fall outside the image are conv2's zero padding.
    zrow = jnp.zeros((1, Wp, Cp), h1_ref.dtype)

    @pl.when(rb == 0)                 # row above the image
    def _():
        h1_ref[pl.ds(0, 1), :, :] = zrow

    @pl.when(rb == RB - 1)            # row below the image
    def _():
        h1_ref[pl.ds(R1 - 1, 1), :, :] = zrow

    # ---- conv2 + folded bn2 + identity residual + relu (fused f32 epilogue) ----
    o = conv3x3(lambda kh: h1_ref[pl.ds(kh, TH), :, :], w2_ref, TH)
    res = xwin_ref[slot, pl.ds(2, TH), :, :].astype(jnp.float32)   # residual from the
    o = jnp.maximum(o * s2_ref[...] + b2_ref[...] + res, 0.0)      # same bf16 window
    out_ref[...] = o.astype(out_ref.dtype)


def basic_block_forward(x_nchw, params, *, max_tile_h=32):
    """Forward pass of BasicBlock (stride=1, downsample=None). x_nchw: (N,C,H,W) f32."""
    x = jnp.transpose(x_nchw, (0, 2, 3, 1)).astype(jnp.float32)   # NHWC
    N, H, W, Cin = x.shape
    planes, inplanes = params["conv1_w"].shape[:2]
    if not (inplanes == planes == Cin):
        # TODO(synk): downsample / stride>1 BasicBlock variants are not implemented.
        raise NotImplementedError("identity-residual BasicBlock only")

    Cp = _round_up(Cin, LANES)          # lane-dense channel padding
    Wp = _round_up(W, 16)               # bf16 sublane packing -> relayout-free reshapes

    # Row tile: largest divisor of H (<= max_tile_h) whose working set fits the budget.
    def vmem_bytes(th_):
        r1 = th_ + 2
        win = 2 * (th_ + 4) * Wp * Cp * 2          # double-buffered x windows (bf16)
        h1b = r1 * Wp * Cp * 2                     # h1 scratch (bf16)
        outb = 2 * th_ * Wp * Cp * 2               # double-buffered output block (bf16)
        wts = 2 * 2 * (3 * Cp * 3 * Cp) * 2        # two weight sets, double-buffered
        vals = (r1 + th_) * Wp * 3 * Cp * 4 + 3 * r1 * Wp * Cp * 4   # f32 value temps
        return win + h1b + outb + wts + vals

    budget = 20 * 1024 * 1024
    th = 1
    for cand in range(min(H, max_tile_h), 0, -1):
        if H % cand == 0 and vmem_bytes(cand) <= budget:
            th = cand
            break
    RB = H // th

    # Single bf16 activation stream (also provides the residual): width/channels
    # zero-padded to (Wp, Cp), rows padded by 2 for uniform halo windows.
    x_conv = jnp.pad(x, ((0, 0), (0, 0), (0, Wp - W), (0, Cp - Cin)))
    x_conv = jnp.pad(x_conv.astype(jnp.bfloat16), ((0, 0), (2, 2), (0, 0), (0, 0)))

    def conv_w(w):
        # torch (Cout, Cin, kh, kw) -> (kh, Cin_pad, kw*Cp + Cout_pad), bf16:
        # the 3 kw taps are fused along the matmul's output dimension.
        w = jnp.transpose(w, (2, 3, 1, 0)).astype(jnp.float32)       # (kh, kw, ci, co)
        w = jnp.pad(w, ((0, 0), (0, 0),
                        (0, Cp - w.shape[2]), (0, Cp - w.shape[3])))
        w = jnp.transpose(w, (0, 2, 1, 3)).reshape(3, Cp, 3 * Cp)    # (kh, ci, kw*Cp+co)
        return w.astype(jnp.bfloat16)

    w1 = conv_w(params["conv1_w"])
    w2 = conv_w(params["conv2_w"])

    def fold_bn(w, b, rm, rv):          # eval-mode BN -> per-channel scale/shift
        s = (w / jnp.sqrt(rv + EPS)).astype(jnp.float32)
        t = (b - rm * s).astype(jnp.float32)
        s = jnp.pad(s, (0, Cp - s.shape[0]))
        t = jnp.pad(t, (0, Cp - t.shape[0]))
        return s[None, :], t[None, :]

    s1, b1 = fold_bn(params["bn1_w"], params["bn1_b"],
                     params["bn1_rm"], params["bn1_rv"])
    s2, b2 = fold_bn(params["bn2_w"], params["bn2_b"],
                     params["bn2_rm"], params["bn2_rv"])

    flops = 36 * N * H * Wp * Cp * Cp                      # two 3x3 convs (kw-fused RHS)
    bytes_accessed = (x_conv.size * 2 + N * H * Wp * Cp * 2
                      + w1.size * 2 + w2.size * 2 + 4 * Cp * 4)

    vmem_limit = max(24 * 1024 * 1024, int(1.5 * vmem_bytes(th)))
    vmem_limit = min(vmem_limit, 40 * 1024 * 1024)         # v7x-safe; ample for v5e/v6e

    kernel = functools.partial(_basic_block_kernel, W)

    out = pl.pallas_call(
        kernel,
        out_shape=jax.ShapeDtypeStruct((N, H, Wp, Cp), jnp.bfloat16),
        grid_spec=pltpu.PrefetchScalarGridSpec(
            num_scalar_prefetch=0,
            grid=(N, RB),
            in_specs=[
                pl.BlockSpec(memory_space=pl.ANY),                        # x (HBM, manual halo DMA)
                pl.BlockSpec((3, Cp, 3 * Cp), lambda n, r: (0, 0, 0)),    # w1 (resident)
                pl.BlockSpec((1, Cp), lambda n, r: (0, 0)),               # s1
                pl.BlockSpec((1, Cp), lambda n, r: (0, 0)),               # b1
                pl.BlockSpec((3, Cp, 3 * Cp), lambda n, r: (0, 0, 0)),    # w2 (resident)
                pl.BlockSpec((1, Cp), lambda n, r: (0, 0)),               # s2
                pl.BlockSpec((1, Cp), lambda n, r: (0, 0)),               # b2
            ],
            out_specs=pl.BlockSpec((None, th, Wp, Cp), lambda n, r: (n, r, 0, 0)),
            scratch_shapes=[
                pltpu.VMEM((2, th + 4, Wp, Cp), jnp.bfloat16),    # halo'd x windows
                pltpu.VMEM((th + 2, Wp, Cp), jnp.bfloat16),       # h1 (conv2 input)
                pltpu.SemaphoreType.DMA((2,)),
            ]),
        compiler_params=pltpu.CompilerParams(
            dimension_semantics=("parallel", "arbitrary"),
            vmem_limit_bytes=vmem_limit),
        cost_estimate=pl.CostEstimate(flops=flops, transcendentals=0,
                                      bytes_accessed=bytes_accessed),
    )(x_conv, w1, s1, b1, w2, s2, b2)

    out = out[:, :, :W, :Cin].astype(jnp.float32)
    return jnp.transpose(out, (0, 3, 1, 2))                # back to NCHW


def _ref_forward(x, params):
    """Pure-JAX f32 reference (NCHW) mirroring the PyTorch forward."""
    def conv(a, w):
        return lax.conv_general_dilated(
            a, w, window_strides=(1, 1), padding=((1, 1), (1, 1)),
            dimension_numbers=("NCHW", "OIHW", "NCHW"))

    def bn(a, w, b, rm, rv):
        sh = (1, -1, 1, 1)
        return ((a - rm.reshape(sh)) / jnp.sqrt(rv.reshape(sh) + EPS)
                * w.reshape(sh) + b.reshape(sh))

    out = jnp.maximum(bn(conv(x, params["conv1_w"]), params["bn1_w"],
                         params["bn1_b"], params["bn1_rm"], params["bn1_rv"]), 0.0)
    out = bn(conv(out, params["conv2_w"]), params["bn2_w"],
             params["bn2_b"], params["bn2_rm"], params["bn2_rv"])
    return jnp.maximum(out + x, 0.0)


def init_params(key, inplanes, planes):
    ks = jax.random.split(key, 8)
    fan1 = inplanes * 9
    fan2 = planes * 9
    return {
        "conv1_w": jax.random.normal(ks[0], (planes, inplanes, 3, 3),
                                     jnp.float32) * (2.0 / fan1) ** 0.5,
        "conv2_w": jax.random.normal(ks[1], (planes, planes, 3, 3),
                                     jnp.float32) * (2.0 / fan2) ** 0.5,
        "bn1_w": 1.0 + 0.1 * jax.random.normal(ks[2], (planes,), jnp.float32),
        "bn1_b": 0.1 * jax.random.normal(ks[3], (planes,), jnp.float32),
        "bn1_rm": 0.1 * jax.random.normal(ks[4], (planes,), jnp.float32),
        "bn1_rv": 1.0 + 0.1 * jax.random.uniform(ks[5], (planes,), jnp.float32),
        "bn2_w": 1.0 + 0.1 * jax.random.normal(ks[6], (planes,), jnp.float32),
        "bn2_b": 0.1 * jax.random.normal(ks[7], (planes,), jnp.float32),
        "bn2_rm": jnp.zeros((planes,), jnp.float32),
        "bn2_rv": jnp.ones((planes,), jnp.float32),
    }


if __name__ == "__main__":
    key = jax.random.PRNGKey(0)
    kx, kp = jax.random.split(key)

    N, C, H, W = 2, 4, 16, 16          # inplanes == planes (identity residual)
    x = jax.random.normal(kx, (N, C, H, W), jnp.float32)
    params = init_params(kp, inplanes=C, planes=C)

    fwd = jax.jit(basic_block_forward)
    out = jax.block_until_ready(fwd(x, params))

    ref = _ref_forward(x, params)
    assert out.shape == ref.shape == (N, C, H, W)
    err = float(jnp.max(jnp.abs(out - ref)))
    # bf16 MXU operands / intermediate / residual / output with f32 accumulation:
    # compare against the f32 reference with a tolerance sized for bf16 rounding.
    assert jnp.allclose(out, ref, atol=1e-1, rtol=5e-2), f"max err {err}"

    print("KERNEL_OK")
</pallas_src>

<mosaic_0001>
module attributes {stable_mosaic.version = 11 : i64} {
  func.func @_basic_block_kernel(%arg0: i32, %arg1: i32, %arg2: memref<2x20x16x128xbf16, #tpu.memory_space<any>>, %arg3: memref<3x128x384xbf16, #tpu.memory_space<vmem>>, %arg4: memref<1x128xf32, #tpu.memory_space<vmem>>, %arg5: memref<1x128xf32, #tpu.memory_space<vmem>>, %arg6: memref<3x128x384xbf16, #tpu.memory_space<vmem>>, %arg7: memref<1x128xf32, #tpu.memory_space<vmem>>, %arg8: memref<1x128xf32, #tpu.memory_space<vmem>>, %arg9: memref<1x16x16x128xbf16, #tpu.memory_space<vmem>>, %arg10: memref<2x20x16x128xbf16, #tpu.memory_space<vmem>>, %arg11: memref<18x16x128xbf16, #tpu.memory_space<vmem>>, %arg12: memref<2x!tpu.dma_semaphore, #tpu.memory_space<semaphore_mem>>) attributes {dimension_semantics = [#tpu.dimension_semantics<parallel>, #tpu.dimension_semantics<arbitrary>], iteration_bounds = array<i64: 2, 1>, scalar_prefetch = 0 : i64, scratch_operands = 3 : i64, tpu.core_type = #tpu.core_type<tc>, window_params = [{}, {pipeline_mode = #tpu.pipeline_mode<synchronous>, transform_indices = @transform_1, window_bounds = array<i64: 3, 128, 384>}, {pipeline_mode = #tpu.pipeline_mode<synchronous>, transform_indices = @transform_2, window_bounds = array<i64: 1, 128>}, {pipeline_mode = #tpu.pipeline_mode<synchronous>, transform_indices = @transform_3, window_bounds = array<i64: 1, 128>}, {pipeline_mode = #tpu.pipeline_mode<synchronous>, transform_indices = @transform_4, window_bounds = array<i64: 3, 128, 384>}, {pipeline_mode = #tpu.pipeline_mode<synchronous>, transform_indices = @transform_5, window_bounds = array<i64: 1, 128>}, {pipeline_mode = #tpu.pipeline_mode<synchronous>, transform_indices = @transform_6, window_bounds = array<i64: 1, 128>}, {transform_indices = @transform_7, window_bounds = array<i64: 1, 16, 16, 128>}]} {
    %c2_i32 = arith.constant 2 : i32
    %c0_i32 = arith.constant 0 : i32
    %0 = arith.cmpi eq, %c2_i32, %c0_i32 : i32
    %c1_i32 = arith.constant 1 : i32
    %1 = arith.select %0, %c1_i32, %c2_i32 : i32
    %2 = arith.remsi %arg1, %1 : i32
    %c0_i32_0 = arith.constant 0 : i32
    %3 = arith.cmpi ne, %2, %c0_i32_0 : i32
    %c0_i32_1 = arith.constant 0 : i32
    %4 = arith.cmpi slt, %2, %c0_i32_1 : i32
    %c0_i32_2 = arith.constant 0 : i32
    %5 = arith.cmpi slt, %1, %c0_i32_2 : i32
    %6 = arith.xori %4, %5 : i1
    %7 = arith.andi %6, %3 : i1
    %8 = arith.addi %2, %1 : i32
    %9 = arith.select %7, %8, %2 : i32
    %c0_i32_3 = arith.constant 0 : i32
    %10 = arith.cmpi eq, %arg1, %c0_i32_3 : i32
    %11 = arith.extui %10 : i1 to i32
    %c0_i32_4 = arith.constant 0 : i32
    %12 = arith.cmpi ne, %11, %c0_i32_4 : i32
    scf.if %12 {
      %c16_i32_78 = arith.constant 16 : i32
      %120 = arith.muli %arg1, %c16_i32_78 : i32
      %c0_i32_79 = arith.constant 0 : i32
      %c0_i32_80 = arith.constant 0 : i32
      %121 = tpu.memref_slice %arg2[%arg0, %120, %c0_i32_79, %c0_i32_80] : memref<2x20x16x128xbf16, #tpu.memory_space<any>> -> memref<1x20x16x128xbf16, #tpu.memory_space<any>>
      %122 = tpu.memref_squeeze %121 : memref<1x20x16x128xbf16, #tpu.memory_space<any>> -> memref<20x16x128xbf16, #tpu.memory_space<any>>
      %c0_i32_81 = arith.constant 0 : i32
      %c0_i32_82 = arith.constant 0 : i32
      %c0_i32_83 = arith.constant 0 : i32
      %123 = tpu.memref_slice %arg10[%9, %c0_i32_81, %c0_i32_82, %c0_i32_83] : memref<2x20x16x128xbf16, #tpu.memory_space<vmem>> -> memref<1x20x16x128xbf16, #tpu.memory_space<vmem>>
      %124 = tpu.memref_squeeze %123 : memref<1x20x16x128xbf16, #tpu.memory_space<vmem>> -> memref<20x16x128xbf16, #tpu.memory_space<vmem>>
      %125 = tpu.memref_slice %arg12[%9] : memref<2x!tpu.dma_semaphore, #tpu.memory_space<semaphore_mem>> -> memref<1x!tpu.dma_semaphore, #tpu.memory_space<semaphore_mem>>
      %126 = tpu.memref_squeeze %125 : memref<1x!tpu.dma_semaphore, #tpu.memory_space<semaphore_mem>> -> memref<!tpu.dma_semaphore, #tpu.memory_space<semaphore_mem>>
      tpu.enqueue_dma source(%122 : memref<20x16x128xbf16, #tpu.memory_space<any>>) target(%124 : memref<20x16x128xbf16, #tpu.memory_space<vmem>>) target_semaphore(%126 : memref<!tpu.dma_semaphore, #tpu.memory_space<semaphore_mem>>)
    } else {
    }
    %c1_i32_5 = arith.constant 1 : i32
    %13 = arith.addi %arg1, %c1_i32_5 : i32
    %c1_i32_6 = arith.constant 1 : i32
    %14 = arith.cmpi slt, %13, %c1_i32_6 : i32
    %15 = arith.extui %14 : i1 to i32
    %c0_i32_7 = arith.constant 0 : i32
    %16 = arith.cmpi ne, %15, %c0_i32_7 : i32
    scf.if %16 {
      %c1_i32_78 = arith.constant 1 : i32
      %120 = arith.addi %arg1, %c1_i32_78 : i32
      %c1_i32_79 = arith.constant 1 : i32
      %121 = arith.subi %c1_i32_79, %9 : i32
      %c16_i32_80 = arith.constant 16 : i32
      %122 = arith.muli %120, %c16_i32_80 : i32
      %c0_i32_81 = arith.constant 0 : i32
      %c0_i32_82 = arith.constant 0 : i32
      %123 = tpu.memref_slice %arg2[%arg0, %122, %c0_i32_81, %c0_i32_82] : memref<2x20x16x128xbf16, #tpu.memory_space<any>> -> memref<1x20x16x128xbf16, #tpu.memory_space<any>>
      %124 = tpu.memref_squeeze %123 : memref<1x20x16x128xbf16, #tpu.memory_space<any>> -> memref<20x16x128xbf16, #tpu.memory_space<any>>
      %c0_i32_83 = arith.constant 0 : i32
      %c0_i32_84 = arith.constant 0 : i32
      %c0_i32_85 = arith.constant 0 : i32
      %125 = tpu.memref_slice %arg10[%121, %c0_i32_83, %c0_i32_84, %c0_i32_85] : memref<2x20x16x128xbf16, #tpu.memory_space<vmem>> -> memref<1x20x16x128xbf16, #tpu.memory_space<vmem>>
      %126 = tpu.memref_squeeze %125 : memref<1x20x16x128xbf16, #tpu.memory_space<vmem>> -> memref<20x16x128xbf16, #tpu.memory_space<vmem>>
      %127 = tpu.memref_slice %arg12[%121] : memref<2x!tpu.dma_semaphore, #tpu.memory_space<semaphore_mem>> -> memref<1x!tpu.dma_semaphore, #tpu.memory_space<semaphore_mem>>
      %128 = tpu.memref_squeeze %127 : memref<1x!tpu.dma_semaphore, #tpu.memory_space<semaphore_mem>> -> memref<!tpu.dma_semaphore, #tpu.memory_space<semaphore_mem>>
      tpu.enqueue_dma source(%124 : memref<20x16x128xbf16, #tpu.memory_space<any>>) target(%126 : memref<20x16x128xbf16, #tpu.memory_space<vmem>>) target_semaphore(%128 : memref<!tpu.dma_semaphore, #tpu.memory_space<semaphore_mem>>)
    } else {
    }
    %c16_i32 = arith.constant 16 : i32
    %17 = arith.muli %arg1, %c16_i32 : i32
    %c0_i32_8 = arith.constant 0 : i32
    %c0_i32_9 = arith.constant 0 : i32
    %18 = tpu.memref_slice %arg2[%arg0, %17, %c0_i32_8, %c0_i32_9] : memref<2x20x16x128xbf16, #tpu.memory_space<any>> -> memref<1x20x16x128xbf16, #tpu.memory_space<any>>
    %19 = tpu.memref_squeeze %18 : memref<1x20x16x128xbf16, #tpu.memory_space<any>> -> memref<20x16x128xbf16, #tpu.memory_space<any>>
    %c0_i32_10 = arith.constant 0 : i32
    %c0_i32_11 = arith.constant 0 : i32
    %c0_i32_12 = arith.constant 0 : i32
    %20 = tpu.memref_slice %arg10[%9, %c0_i32_10, %c0_i32_11, %c0_i32_12] : memref<2x20x16x128xbf16, #tpu.memory_space<vmem>> -> memref<1x20x16x128xbf16, #tpu.memory_space<vmem>>
    %21 = tpu.memref_squeeze %20 : memref<1x20x16x128xbf16, #tpu.memory_space<vmem>> -> memref<20x16x128xbf16, #tpu.memory_space<vmem>>
    %22 = tpu.memref_slice %arg12[%9] : memref<2x!tpu.dma_semaphore, #tpu.memory_space<semaphore_mem>> -> memref<1x!tpu.dma_semaphore, #tpu.memory_space<semaphore_mem>>
    %23 = tpu.memref_squeeze %22 : memref<1x!tpu.dma_semaphore, #tpu.memory_space<semaphore_mem>> -> memref<!tpu.dma_semaphore, #tpu.memory_space<semaphore_mem>>
    tpu.wait_dma2 semaphore(%23 : memref<!tpu.dma_semaphore, #tpu.memory_space<semaphore_mem>>) src(%19 : memref<20x16x128xbf16, #tpu.memory_space<any>>) dst(%21 : memref<20x16x128xbf16, #tpu.memory_space<vmem>>)
    %24 = arith.index_cast %9 : i32 to index
    %c0 = arith.constant 0 : index
    %c0_13 = arith.constant 0 : index
    %c0_14 = arith.constant 0 : index
    %25 = vector.load %arg10[%24, %c0, %c0_13, %c0_14] : memref<2x20x16x128xbf16, #tpu.memory_space<vmem>>, vector<1x18x16x128xbf16>
    %26 = vector.shape_cast %25 : vector<1x18x16x128xbf16> to vector<18x16x128xbf16>
    %27 = vector.shape_cast %26 : vector<18x16x128xbf16> to vector<288x128xbf16>
    %c0_15 = arith.constant 0 : index
    %c0_16 = arith.constant 0 : index
    %c0_17 = arith.constant 0 : index
    %28 = vector.load %arg3[%c0_15, %c0_16, %c0_17] : memref<3x128x384xbf16, #tpu.memory_space<vmem>>, vector<1x128x384xbf16>
    %29 = vector.shape_cast %28 : vector<1x128x384xbf16> to vector<128x384xbf16>
    %cst = arith.constant dense<0.000000e+00> : vector<288x384xf32>
    %30 = tpu.matmul %27, %29, %cst {dimension_numbers = #tpu.dot_dimension_numbers<[1], [0], [0], [1], [0, 0, 1, 1], [], []>} : vector<288x128xbf16>, vector<128x384xbf16>, vector<288x384xf32> -> vector<288x384xf32>
    %31 = arith.index_cast %9 : i32 to index
    %c1 = arith.constant 1 : index
    %c0_18 = arith.constant 0 : index
    %c0_19 = arith.constant 0 : index
    %32 = vector.load %arg10[%31, %c1, %c0_18, %c0_19] : memref<2x20x16x128xbf16, #tpu.memory_space<vmem>>, vector<1x18x16x128xbf16>
    %33 = vector.shape_cast %32 : vector<1x18x16x128xbf16> to vector<18x16x128xbf16>
    %34 = vector.shape_cast %33 : vector<18x16x128xbf16> to vector<288x128xbf16>
    %c1_20 = arith.constant 1 : index
    %c0_21 = arith.constant 0 : index
    %c0_22 = arith.constant 0 : index
    %35 = vector.load %arg3[%c1_20, %c0_21, %c0_22] : memref<3x128x384xbf16, #tpu.memory_space<vmem>>, vector<1x128x384xbf16>
    %36 = vector.shape_cast %35 : vector<1x128x384xbf16> to vector<128x384xbf16>
    %cst_23 = arith.constant dense<0.000000e+00> : vector<288x384xf32>
    %37 = tpu.matmul %34, %36, %cst_23 {dimension_numbers = #tpu.dot_dimension_numbers<[1], [0], [0], [1], [0, 0, 1, 1], [], []>} : vector<288x128xbf16>, vector<128x384xbf16>, vector<288x384xf32> -> vector<288x384xf32>
    %38 = arith.addf %30, %37 : vector<288x384xf32>
    %39 = arith.index_cast %9 : i32 to index
    %c2 = arith.constant 2 : index
    %c0_24 = arith.constant 0 : index
    %c0_25 = arith.constant 0 : index
    %40 = vector.load %arg10[%39, %c2, %c0_24, %c0_25] : memref<2x20x16x128xbf16, #tpu.memory_space<vmem>>, vector<1x18x16x128xbf16>
    %41 = vector.shape_cast %40 : vector<1x18x16x128xbf16> to vector<18x16x128xbf16>
    %42 = vector.shape_cast %41 : vector<18x16x128xbf16> to vector<288x128xbf16>
    %c2_26 = arith.constant 2 : index
    %c0_27 = arith.constant 0 : index
    %c0_28 = arith.constant 0 : index
    %43 = vector.load %arg3[%c2_26, %c0_27, %c0_28] : memref<3x128x384xbf16, #tpu.memory_space<vmem>>, vector<1x128x384xbf16>
    %44 = vector.shape_cast %43 : vector<1x128x384xbf16> to vector<128x384xbf16>
    %cst_29 = arith.constant dense<0.000000e+00> : vector<288x384xf32>
    %45 = tpu.matmul %42, %44, %cst_29 {dimension_numbers = #tpu.dot_dimension_numbers<[1], [0], [0], [1], [0, 0, 1, 1], [], []>} : vector<288x128xbf16>, vector<128x384xbf16>, vector<288x384xf32> -> vector<288x384xf32>
    %46 = arith.addf %38, %45 : vector<288x384xf32>
    %47 = vector.shape_cast %46 : vector<288x384xf32> to vector<18x16x384xf32>
    %cst_30 = arith.constant 0.000000e+00 : f32
    %48 = vector.broadcast %cst_30 : f32 to vector<18x1x128xf32>
    %49 = vector.extract_strided_slice %47 {offsets = [0, 0, 0], sizes = [18, 15, 128], strides = [1, 1, 1]} : vector<18x16x384xf32> to vector<18x15x128xf32>
    %50 = vector.extract_strided_slice %47 {offsets = [0, 0, 128], sizes = [18, 16, 128], strides = [1, 1, 1]} : vector<18x16x384xf32> to vector<18x16x128xf32>
    %51 = vector.extract_strided_slice %47 {offsets = [0, 1, 256], sizes = [18, 15, 128], strides = [1, 1, 1]} : vector<18x16x384xf32> to vector<18x15x128xf32>
    %52 = tpu.concatenate %48, %49 in 1 : vector<18x1x128xf32>, vector<18x15x128xf32> -> vector<18x16x128xf32>
    %53 = arith.addf %50, %52 : vector<18x16x128xf32>
    %54 = tpu.concatenate %51, %48 in 1 : vector<18x15x128xf32>, vector<18x1x128xf32> -> vector<18x16x128xf32>
    %55 = arith.addf %53, %54 : vector<18x16x128xf32>
    %c0_31 = arith.constant 0 : index
    %c0_32 = arith.constant 0 : index
    %56 = vector.load %arg4[%c0_31, %c0_32] : memref<1x128xf32, #tpu.memory_space<vmem>>, vector<1x128xf32>
    %57 = vector.shape_cast %56 : vector<1x128xf32> to vector<1x1x128xf32>
    %58 = vector.broadcast %57 : vector<1x1x128xf32> to vector<18x16x128xf32>
    %59 = arith.mulf %55, %58 : vector<18x16x128xf32>
    %c0_33 = arith.constant 0 : index
    %c0_34 = arith.constant 0 : index
    %60 = vector.load %arg5[%c0_33, %c0_34] : memref<1x128xf32, #tpu.memory_space<vmem>>, vector<1x128xf32>
    %61 = vector.shape_cast %60 : vector<1x128xf32> to vector<1x1x128xf32>
    %62 = vector.broadcast %61 : vector<1x1x128xf32> to vector<18x16x128xf32>
    %63 = arith.addf %59, %62 : vector<18x16x128xf32>
    %cst_35 = arith.constant 0.000000e+00 : f32
    %64 = vector.broadcast %cst_35 : f32 to vector<18x16x128xf32>
    %65 = arith.maximumf %63, %64 : vector<18x16x128xf32>
    %66 = arith.truncf %65 : vector<18x16x128xf32> to vector<18x16x128xbf16>
    %c0_36 = arith.constant 0 : index
    %c0_37 = arith.constant 0 : index
    %c0_38 = arith.constant 0 : index
    %67 = vector.load %arg11[%c0_36, %c0_37, %c0_38] : memref<18x16x128xbf16, #tpu.memory_space<vmem>>, vector<18x16x128xbf16>
    tpu.vector_store %arg11[%c0_36, %c0_37, %c0_38], %66 {strides = array<i32>} : memref<18x16x128xbf16, #tpu.memory_space<vmem>>, vector<18x16x128xbf16>,
    %cst_39 = arith.constant 0.000000e+00 : bf16
    %68 = vector.broadcast %cst_39 : bf16 to vector<1x16x128xbf16>
    %c0_i32_40 = arith.constant 0 : i32
    %69 = arith.cmpi eq, %arg1, %c0_i32_40 : i32
    %70 = arith.extui %69 : i1 to i32
    %c0_i32_41 = arith.constant 0 : i32
    %71 = arith.cmpi ne, %70, %c0_i32_41 : i32
    scf.if %71 {
      %c0_78 = arith.constant 0 : index
      %c0_79 = arith.constant 0 : index
      %c0_80 = arith.constant 0 : index
      %120 = vector.load %arg11[%c0_78, %c0_79, %c0_80] : memref<18x16x128xbf16, #tpu.memory_space<vmem>>, vector<1x16x128xbf16>
      tpu.vector_store %arg11[%c0_78, %c0_79, %c0_80], %68 {strides = array<i32>} : memref<18x16x128xbf16, #tpu.memory_space<vmem>>, vector<1x16x128xbf16>,
    } else {
    }
    %c0_i32_42 = arith.constant 0 : i32
    %72 = arith.cmpi eq, %arg1, %c0_i32_42 : i32
    %73 = arith.extui %72 : i1 to i32
    %c0_i32_43 = arith.constant 0 : i32
    %74 = arith.cmpi ne, %73, %c0_i32_43 : i32
    scf.if %74 {
      %c17 = arith.constant 17 : index
      %c0_78 = arith.constant 0 : index
      %c0_79 = arith.constant 0 : index
      %120 = vector.load %arg11[%c17, %c0_78, %c0_79] : memref<18x16x128xbf16, #tpu.memory_space<vmem>>, vector<1x16x128xbf16>
      tpu.vector_store %arg11[%c17, %c0_78, %c0_79], %68 {strides = array<i32>} : memref<18x16x128xbf16, #tpu.memory_space<vmem>>, vector<1x16x128xbf16>,
    } else {
    }
    %c0_44 = arith.constant 0 : index
    %c0_45 = arith.constant 0 : index
    %c0_46 = arith.constant 0 : index
    %75 = vector.load %arg11[%c0_44, %c0_45, %c0_46] : memref<18x16x128xbf16, #tpu.memory_space<vmem>>, vector<16x16x128xbf16>
    %76 = vector.shape_cast %75 : vector<16x16x128xbf16> to vector<256x128xbf16>
    %c0_47 = arith.constant 0 : index
    %c0_48 = arith.constant 0 : index
    %c0_49 = arith.constant 0 : index
    %77 = vector.load %arg6[%c0_47, %c0_48, %c0_49] : memref<3x128x384xbf16, #tpu.memory_space<vmem>>, vector<1x128x384xbf16>
    %78 = vector.shape_cast %77 : vector<1x128x384xbf16> to vector<128x384xbf16>
    %cst_50 = arith.constant dense<0.000000e+00> : vector<256x384xf32>
    %79 = tpu.matmul %76, %78, %cst_50 {dimension_numbers = #tpu.dot_dimension_numbers<[1], [0], [0], [1], [0, 0, 1, 1], [], []>} : vector<256x128xbf16>, vector<128x384xbf16>, vector<256x384xf32> -> vector<256x384xf32>
    %c1_51 = arith.constant 1 : index
    %c0_52 = arith.constant 0 : index
    %c0_53 = arith.constant 0 : index
    %80 = vector.load %arg11[%c1_51, %c0_52, %c0_53] : memref<18x16x128xbf16, #tpu.memory_space<vmem>>, vector<16x16x128xbf16>
    %81 = vector.shape_cast %80 : vector<16x16x128xbf16> to vector<256x128xbf16>
    %c1_54 = arith.constant 1 : index
    %c0_55 = arith.constant 0 : index
    %c0_56 = arith.constant 0 : index
    %82 = vector.load %arg6[%c1_54, %c0_55, %c0_56] : memref<3x128x384xbf16, #tpu.memory_space<vmem>>, vector<1x128x384xbf16>
    %83 = vector.shape_cast %82 : vector<1x128x384xbf16> to vector<128x384xbf16>
    %cst_57 = arith.constant dense<0.000000e+00> : vector<256x384xf32>
    %84 = tpu.matmul %81, %83, %cst_57 {dimension_numbers = #tpu.dot_dimension_numbers<[1], [0], [0], [1], [0, 0, 1, 1], [], []>} : vector<256x128xbf16>, vector<128x384xbf16>, vector<256x384xf32> -> vector<256x384xf32>
    %85 = arith.addf %79, %84 : vector<256x384xf32>
    %c2_58 = arith.constant 2 : index
    %c0_59 = arith.constant 0 : index
    %c0_60 = arith.constant 0 : index
    %86 = vector.load %arg11[%c2_58, %c0_59, %c0_60] : memref<18x16x128xbf16, #tpu.memory_space<vmem>>, vector<16x16x128xbf16>
    %87 = vector.shape_cast %86 : vector<16x16x128xbf16> to vector<256x128xbf16>
    %c2_61 = arith.constant 2 : index
    %c0_62 = arith.constant 0 : index
    %c0_63 = arith.constant 0 : index
    %88 = vector.load %arg6[%c2_61, %c0_62, %c0_63] : memref<3x128x384xbf16, #tpu.memory_space<vmem>>, vector<1x128x384xbf16>
    %89 = vector.shape_cast %88 : vector<1x128x384xbf16> to vector<128x384xbf16>
    %cst_64 = arith.constant dense<0.000000e+00> : vector<256x384xf32>
    %90 = tpu.matmul %87, %89, %cst_64 {dimension_numbers = #tpu.dot_dimension_numbers<[1], [0], [0], [1], [0, 0, 1, 1], [], []>} : vector<256x128xbf16>, vector<128x384xbf16>, vector<256x384xf32> -> vector<256x384xf32>
    %91 = arith.addf %85, %90 : vector<256x384xf32>
    %92 = vector.shape_cast %91 : vector<256x384xf32> to vector<16x16x384xf32>
    %cst_65 = arith.constant 0.000000e+00 : f32
    %93 = vector.broadcast %cst_65 : f32 to vector<16x1x128xf32>
    %94 = vector.extract_strided_slice %92 {offsets = [0, 0, 0], sizes = [16, 15, 128], strides = [1, 1, 1]} : vector<16x16x384xf32> to vector<16x15x128xf32>
    %95 = vector.extract_strided_slice %92 {offsets = [0, 0, 128], sizes = [16, 16, 128], strides = [1, 1, 1]} : vector<16x16x384xf32> to vector<16x16x128xf32>
    %96 = vector.extract_strided_slice %92 {offsets = [0, 1, 256], sizes = [16, 15, 128], strides = [1, 1, 1]} : vector<16x16x384xf32> to vector<16x15x128xf32>
    %97 = tpu.concatenate %93, %94 in 1 : vector<16x1x128xf32>, vector<16x15x128xf32> -> vector<16x16x128xf32>
    %98 = arith.addf %95, %97 : vector<16x16x128xf32>
    %99 = tpu.concatenate %96, %93 in 1 : vector<16x15x128xf32>, vector<16x1x128xf32> -> vector<16x16x128xf32>
    %100 = arith.addf %98, %99 : vector<16x16x128xf32>
    %101 = arith.index_cast %9 : i32 to index
    %c2_66 = arith.constant 2 : index
    %c0_67 = arith.constant 0 : index
    %c0_68 = arith.constant 0 : index
    %102 = vector.load %arg10[%101, %c2_66, %c0_67, %c0_68] : memref<2x20x16x128xbf16, #tpu.memory_space<vmem>>, vector<1x16x16x128xbf16>
    %103 = vector.shape_cast %102 : vector<1x16x16x128xbf16> to vector<16x16x128xbf16>
    %104 = arith.extf %103 : vector<16x16x128xbf16> to vector<16x16x128xf32>
    %c0_69 = arith.constant 0 : index
    %c0_70 = arith.constant 0 : index
    %105 = vector.load %arg7[%c0_69, %c0_70] : memref<1x128xf32, #tpu.memory_space<vmem>>, vector<1x128xf32>
    %106 = vector.shape_cast %105 : vector<1x128xf32> to vector<1x1x128xf32>
    %107 = vector.broadcast %106 : vector<1x1x128xf32> to vector<16x16x128xf32>
    %108 = arith.mulf %100, %107 : vector<16x16x128xf32>
    %c0_71 = arith.constant 0 : index
    %c0_72 = arith.constant 0 : index
    %109 = vector.load %arg8[%c0_71, %c0_72] : memref<1x128xf32, #tpu.memory_space<vmem>>, vector<1x128xf32>
    %110 = vector.shape_cast %109 : vector<1x128xf32> to vector<1x1x128xf32>
    %111 = vector.broadcast %110 : vector<1x1x128xf32> to vector<16x16x128xf32>
    %112 = arith.addf %108, %111 : vector<16x16x128xf32>
    %113 = arith.addf %112, %104 : vector<16x16x128xf32>
    %cst_73 = arith.constant 0.000000e+00 : f32
    %114 = vector.broadcast %cst_73 : f32 to vector<16x16x128xf32>
    %115 = arith.maximumf %113, %114 : vector<16x16x128xf32>
    %116 = arith.truncf %115 : vector<16x16x128xf32> to vector<16x16x128xbf16>
    %c0_74 = arith.constant 0 : index
    %c0_75 = arith.constant 0 : index
    %c0_76 = arith.constant 0 : index
    %c0_77 = arith.constant 0 : index
    %117 = vector.load %arg9[%c0_74, %c0_75, %c0_76, %c0_77] : memref<1x16x16x128xbf16, #tpu.memory_space<vmem>>, vector<1x16x16x128xbf16>
    %118 = vector.shape_cast %117 : vector<1x16x16x128xbf16> to vector<16x16x128xbf16>
    %119 = vector.shape_cast %116 : vector<16x16x128xbf16> to vector<1x16x16x128xbf16>
    tpu.vector_store %arg9[%c0_74, %c0_75, %c0_76, %c0_77], %119 {strides = array<i32>} : memref<1x16x16x128xbf16, #tpu.memory_space<vmem>>, vector<1x16x16x128xbf16>,
    return
  }
  func.func @transform_1(%arg0: i32, %arg1: i32) -> (i32, i32, i32) {
    %c0_i32 = arith.constant 0 : i32
    %c0_i32_0 = arith.constant 0 : i32
    %c0_i32_1 = arith.constant 0 : i32
    %c0_i32_2 = arith.constant 0 : i32
    return %c0_i32, %c0_i32_0, %c0_i32_1 : i32, i32, i32
  }
  func.func @transform_2(%arg0: i32, %arg1: i32) -> (i32, i32) {
    %c0_i32 = arith.constant 0 : i32
    %c0_i32_0 = arith.constant 0 : i32
    %c0_i32_1 = arith.constant 0 : i32
    return %c0_i32, %c0_i32_0 : i32, i32
  }
  func.func @transform_3(%arg0: i32, %arg1: i32) -> (i32, i32) {
    %c0_i32 = arith.constant 0 : i32
    %c0_i32_0 = arith.constant 0 : i32
    %c0_i32_1 = arith.constant 0 : i32
    return %c0_i32, %c0_i32_0 : i32, i32
  }
  func.func @transform_4(%arg0: i32, %arg1: i32) -> (i32, i32, i32) {
    %c0_i32 = arith.constant 0 : i32
    %c0_i32_0 = arith.constant 0 : i32
    %c0_i32_1 = arith.constant 0 : i32
    %c0_i32_2 = arith.constant 0 : i32
    return %c0_i32, %c0_i32_0, %c0_i32_1 : i32, i32, i32
  }
  func.func @transform_5(%arg0: i32, %arg1: i32) -> (i32, i32) {
    %c0_i32 = arith.constant 0 : i32
    %c0_i32_0 = arith.constant 0 : i32
    %c0_i32_1 = arith.constant 0 : i32
    return %c0_i32, %c0_i32_0 : i32, i32
  }
  func.func @transform_6(%arg0: i32, %arg1: i32) -> (i32, i32) {
    %c0_i32 = arith.constant 0 : i32
    %c0_i32_0 = arith.constant 0 : i32
    %c0_i32_1 = arith.constant 0 : i32
    return %c0_i32, %c0_i32_0 : i32, i32
  }
  func.func @transform_7(%arg0: i32, %arg1: i32) -> (i32, i32, i32, i32) {
    %c0_i32 = arith.constant 0 : i32
    %c0_i32_0 = arith.constant 0 : i32
    %c0_i32_1 = arith.constant 0 : i32
    return %arg0, %arg1, %c0_i32, %c0_i32_0 : i32, i32, i32, i32
  }
}

</mosaic_0001>

<llo_original>
// kernel: basic_block_forward.1
$region0: #{basic_block_forward.1}
  #allocation0 [shape = 'u32[]', space=smem, size = 0x4, offset = 0x4, fixed_abs, tag = 'smem constant byte address 0x4 - core index']
  #allocation1 [shape = 'u32[144,128]{1,0:T(1,128)}', space=vmem, size = 0x12000, scoped, tag = 'internal scratch']
  #allocation2 [shape = 'bf16[2,20,16,128]{3,2,1,0:T(8,128)(2,1)}', space=vmem, size = 0x28000, scoped, tag = 'scratch operand']
  #allocation3 [shape = 'bf16[18,16,128]{2,1,0:T(8,128)(2,1)}', space=vmem, size = 0x12000, scoped, tag = 'scratch operand']
  #allocation4 [shape = 's32[2]{0}', space=sflag, size = 0x8, scoped, tag = 'scratch operand']
  #allocation5 [shape = 's32[]', space=sflag, size = 0x4, offset = 0, fixed_abs, tag = 'sflag constant byte address 0x0 - dummy sync flag']
  #allocation6 [shape = 's32[]', space=sflag, size = 0x4, offset = 0, fixed_abs, tag = 'sflag constant byte address 0x0 - dummy sync flag']
  %s0 = inlined_call_operand.vmem [shape: bf16[2,20,16,128], index: 0, kind: input, shape index: {}]
  %s1 = inlined_call_operand.vmem [shape: bf16[3,128,384], index: 1, kind: input, shape index: {}]
  %s2 = inlined_call_operand.vmem [shape: f32[1,128], index: 2, kind: input, shape index: {}]
  %s3 = inlined_call_operand.vmem [shape: f32[1,128], index: 3, kind: input, shape index: {}]
  %s4 = inlined_call_operand.vmem [shape: bf16[3,128,384], index: 4, kind: input, shape index: {}]
  %s5 = inlined_call_operand.vmem [shape: f32[1,128], index: 5, kind: input, shape index: {}]
  %s6 = inlined_call_operand.vmem [shape: f32[1,128], index: 6, kind: input, shape index: {}]
  %s7 = inlined_call_operand.vmem [shape: bf16[2,16,16,128], index: 7, kind: output, shape index: {}]
  %s8 = sld [smem:[#allocation0]]
  $region137: #{basic_block_forward.1} parent=0
    _
  %s10 = ssub.s32 1, %s8
  %s11 = scalar_select 0, %s10, %s8
  loop: start=0, step=1, limit=4
  $region2: #{basic_block_forward.1} parent=0 // loop_pre_header
    _
  $region3: #{basic_block_forward.1} parent=0 // loop_header
    %s13 = sphi 0, %s17
    %p14 = scmp.ge.s32.totalorder %s13, 4
    %s20 = sphi 0, %s32
    %s21 = sphi 0, %s28
    %s22 = sphi 0, %s20
    %s23 = sphi 0, %s21
    %s24 = sphi 0, %s22
    %s25 = sphi 0, %s23
    %s33 = sphi 0, %s33
    %s35 = sphi 0, %s33
    %s36 = sphi 0, %s35
    %s50 = sphi 0, %s36
    %s54 = sphi 0, %s54
    %s56 = sphi 0, %s54
    %s57 = sphi 0, %s56
    %s71 = sphi 0, %s57
    %s75 = sphi 0, %s75
    %s77 = sphi 0, %s75
    %s78 = sphi 0, %s77
    %s92 = sphi 0, %s78
    %s96 = sphi 0, %s96
    %s98 = sphi 0, %s96
    %s99 = sphi 0, %s98
    %s113 = sphi 0, %s99
    %s117 = sphi 0, %s117
    %s119 = sphi 0, %s117
    %s120 = sphi 0, %s119
    %s134 = sphi 0, %s120
    %s138 = sphi 0, %s138
    %s140 = sphi 0, %s138
    %s141 = sphi 0, %s140
    %s155 = sphi 0, %s141
    %s163 = sphi 0, %s165
    %s166 = sphi 0, %s163
    %s167 = sphi 0, %s166
    %s183 = sphi 0, %s167
  $region4: #{basic_block_forward.1} parent=0 // loop_header_branch
    %16 = sbr.rel (%p14) target = $region8
  $region5: #{basic_block_forward.1} parent=0 // loop_body
    %s18 = ssub.s32 %s13, 1
    %s19 = ssub.s32 %s13, 2
    %s26 = sadd.s32 1, %s21
    %p27 = scmp.ge.s32.totalorder %s26, 1
    %s28 = scalar_select %p27, 0, %s26
    %s29 = sadd.s32 1, %s20
    %s30 = scalar_select %p27, %s29, %s20
    %p31 = scmp.ge.s32.totalorder %s30, 2
    %s32 = scalar_select %p31, 0, %s30
    %s34 = sadd.s32 %s33, 1
    %p37 = scmp.eq.s32.totalorder %s13, 1
    %p38 = scmp.ne.s32.totalorder %s33, %s35
    %p39 = scmp.eq.s32.totalorder %s13, 0
    %p40 = por %p38, %p39
    %p41 = scmp.ne.s32.totalorder %s33, %s35
    %p42 = scmp.eq.s32.totalorder %s18, 1
    %p43 = por %p41, %p42
    %p44 = scmp.ne.s32.totalorder %s35, %s36
    %p45 = scmp.eq.s32.totalorder %s18, 0
    %p46 = por %p44, %p45
    %p47 = scmp.ne.s32.totalorder %s35, %s36
    %p48 = scmp.eq.s32.totalorder %s19, 1
    %p49 = por %p47, %p48
    %p51 = scmp.ne.s32.totalorder %s36, %s50
    %p52 = scmp.eq.s32.totalorder %s19, 0
    %p53 = por %p51, %p52
    %s55 = sadd.s32 %s54, 1
    %p58 = scmp.eq.s32.totalorder %s13, 1
    %p59 = scmp.ne.s32.totalorder %s54, %s56
    %p60 = scmp.eq.s32.totalorder %s13, 0
    %p61 = por %p59, %p60
    %p62 = scmp.ne.s32.totalorder %s54, %s56
    %p63 = scmp.eq.s32.totalorder %s18, 1
    %p64 = por %p62, %p63
    %p65 = scmp.ne.s32.totalorder %s56, %s57
    %p66 = scmp.eq.s32.totalorder %s18, 0
    %p67 = por %p65, %p66
    %p68 = scmp.ne.s32.totalorder %s56, %s57
    %p69 = scmp.eq.s32.totalorder %s19, 1
    %p70 = por %p68, %p69
    %p72 = scmp.ne.s32.totalorder %s57, %s71
    %p73 = scmp.eq.s32.totalorder %s19, 0
    %p74 = por %p72, %p73
    %s76 = sadd.s32 %s75, 1
    %p79 = scmp.eq.s32.totalorder %s13, 1
    %p80 = scmp.ne.s32.totalorder %s75, %s77
    %p81 = scmp.eq.s32.totalorder %s13, 0
    %p82 = por %p80, %p81
    %p83 = scmp.ne.s32.totalorder %s75, %s77
    %p84 = scmp.eq.s32.totalorder %s18, 1
    %p85 = por %p83, %p84
    %p86 = scmp.ne.s32.totalorder %s77, %s78
    %p87 = scmp.eq.s32.totalorder %s18, 0
    %p88 = por %p86, %p87
    %p89 = scmp.ne.s32.totalorder %s77, %s78
    %p90 = scmp.eq.s32.totalorder %s19, 1
    %p91 = por %p89, %p90
    %p93 = scmp.ne.s32.totalorder %s78, %s92
    %p94 = scmp.eq.s32.totalorder %s19, 0
    %p95 = por %p93, %p94
    %s97 = sadd.s32 %s96, 1
    %p100 = scmp.eq.s32.totalorder %s13, 1
    %p101 = scmp.ne.s32.totalorder %s96, %s98
    %p102 = scmp.eq.s32.totalorder %s13, 0
    %p103 = por %p101, %p102
    %p104 = scmp.ne.s32.totalorder %s96, %s98
    %p105 = scmp.eq.s32.totalorder %s18, 1
    %p106 = por %p104, %p105
    %p107 = scmp.ne.s32.totalorder %s98, %s99
    %p108 = scmp.eq.s32.totalorder %s18, 0
    %p109 = por %p107, %p108
    %p110 = scmp.ne.s32.totalorder %s98, %s99
    %p111 = scmp.eq.s32.totalorder %s19, 1
    %p112 = por %p110, %p111
    %p114 = scmp.ne.s32.totalorder %s99, %s113
    %p115 = scmp.eq.s32.totalorder %s19, 0
    %p116 = por %p114, %p115
    %s118 = sadd.s32 %s117, 1
    %p121 = scmp.eq.s32.totalorder %s13, 1
    %p122 = scmp.ne.s32.totalorder %s117, %s119
    %p123 = scmp.eq.s32.totalorder %s13, 0
    %p124 = por %p122, %p123
    %p125 = scmp.ne.s32.totalorder %s117, %s119
    %p126 = scmp.eq.s32.totalorder %s18, 1
    %p127 = por %p125, %p126
    %p128 = scmp.ne.s32.totalorder %s119, %s120
    %p129 = scmp.eq.s32.totalorder %s18, 0
    %p130 = por %p128, %p129
    %p131 = scmp.ne.s32.totalorder %s119, %s120
    %p132 = scmp.eq.s32.totalorder %s19, 1
    %p133 = por %p131, %p132
    %p135 = scmp.ne.s32.totalorder %s120, %s134
    %p136 = scmp.eq.s32.totalorder %s19, 0
    %p137 = por %p135, %p136
    %s139 = sadd.s32 %s138, 1
    %p142 = scmp.eq.s32.totalorder %s13, 1
    %p143 = scmp.ne.s32.totalorder %s138, %s140
    %p144 = scmp.eq.s32.totalorder %s13, 0
    %p145 = por %p143, %p144
    %p146 = scmp.ne.s32.totalorder %s138, %s140
    %p147 = scmp.eq.s32.totalorder %s18, 1
    %p148 = por %p146, %p147
    %p149 = scmp.ne.s32.totalorder %s140, %s141
    %p150 = scmp.eq.s32.totalorder %s18, 0
    %p151 = por %p149, %p150
    %p152 = scmp.ne.s32.totalorder %s140, %s141
    %p153 = scmp.eq.s32.totalorder %s19, 1
    %p154 = por %p152, %p153
    %p156 = scmp.ne.s32.totalorder %s141, %s155
    %p157 = scmp.eq.s32.totalorder %s19, 0
    %p158 = por %p156, %p157
    %s159 = ssub.s32 %s20, %s32
    %s160 = ssub.s32 %s21, %s28
    %s161 = sor.u32 %s159, %s160
    %p162 = scmp.eq.s32.totalorder %s161, 0
    %s164 = sadd.s32 %s163, 1
    %s165 = scalar_select %p162, %s163, %s164
    %p168 = pneg %p162
    %p169 = scmp.eq.s32.totalorder %s13, 1
    %p170 = por %p168, %p169
    %p171 = scmp.ne.s32.totalorder %s163, %s166
    %p172 = scmp.eq.s32.totalorder %s13, 0
    %p173 = por %p171, %p172
    %p174 = scmp.ne.s32.totalorder %s163, %s166
    %p175 = scmp.eq.s32.totalorder %s18, 1
    %p176 = por %p174, %p175
    %p177 = scmp.ne.s32.totalorder %s166, %s167
    %p178 = scmp.eq.s32.totalorder %s18, 0
    %p179 = por %p177, %p178
    %p180 = scmp.ne.s32.totalorder %s166, %s167
    %p181 = scmp.eq.s32.totalorder %s19, 1
    %p182 = por %p180, %p181
    %p184 = scmp.ne.s32.totalorder %s167, %s183
    %p185 = scmp.eq.s32.totalorder %s19, 0
    %p186 = por %p184, %p185
    %p187 = scmp.le.s32.totalorder 1, %s13
    %p188 = scmp.lt.s32.totalorder %s13, 3
    %p189 = pnand %p187, %p188
    %p190 = pneg %p189
    // Predicated region
    $region9: #{basic_block_forward.1} parent=5 // pred_check
      _
    $region10: #{basic_block_forward.1} parent=5 // pred_check_branch
      %192 = sbr.rel (%p189) target = $region12
    $region11: #{basic_block_forward.1} parent=5 // pred_region
      %s193 = ssub.s32 %s13, 1
      // Predicated region
      $region13: #{basic_block_forward.1} parent=11 // pred_check
        %p194 = pneg %p46
      $region14: #{basic_block_forward.1} parent=11 // pred_check_branch
        %196 = sbr.rel (%p194) target = $region16
      $region15: #{basic_block_forward.1} parent=11 // pred_region
        _
      $region16: #{basic_block_forward.1} parent=11 // pred_fallthru
        _
      // Predicated region
      $region17: #{basic_block_forward.1} parent=11 // pred_check
        %p197 = pneg %p67
      $region18: #{basic_block_forward.1} parent=11 // pred_check_branch
        %199 = sbr.rel (%p197) target = $region20
      $region19: #{basic_block_forward.1} parent=11 // pred_region
        _
      $region20: #{basic_block_forward.1} parent=11 // pred_fallthru
        _
      // Predicated region
      $region21: #{basic_block_forward.1} parent=11 // pred_check
        %p200 = pneg %p88
      $region22: #{basic_block_forward.1} parent=11 // pred_check_branch
        %202 = sbr.rel (%p200) target = $region24
      $region23: #{basic_block_forward.1} parent=11 // pred_region
        _
      $region24: #{basic_block_forward.1} parent=11 // pred_fallthru
        _
      // Predicated region
      $region25: #{basic_block_forward.1} parent=11 // pred_check
        %p203 = pneg %p109
      $region26: #{basic_block_forward.1} parent=11 // pred_check_branch
        %205 = sbr.rel (%p203) target = $region28
      $region27: #{basic_block_forward.1} parent=11 // pred_region
        _
      $region28: #{basic_block_forward.1} parent=11 // pred_fallthru
        _
      // Predicated region
      $region29: #{basic_block_forward.1} parent=11 // pred_check
        %p206 = pneg %p130
      $region30: #{basic_block_forward.1} parent=11 // pred_check_branch
        %208 = sbr.rel (%p206) target = $region32
      $region31: #{basic_block_forward.1} parent=11 // pred_region
        _
      $region32: #{basic_block_forward.1} parent=11 // pred_fallthru
        _
      // Predicated region
      $region33: #{basic_block_forward.1} parent=11 // pred_check
        %p209 = pneg %p151
      $region34: #{basic_block_forward.1} parent=11 // pred_check_branch
        %211 = sbr.rel (%p209) target = $region36
      $region35: #{basic_block_forward.1} parent=11 // pred_region
        _
      $region36: #{basic_block_forward.1} parent=11 // pred_fallthru
        _
    $region12: #{basic_block_forward.1} parent=5 // pred_fallthru
      _
    %p212 = scmp.lt.s32.totalorder %s13, 2
    // Predicated region
    $region37: #{basic_block_forward.1} parent=5 // pred_check
      %p213 = pneg %p212
    $region38: #{basic_block_forward.1} parent=5 // pred_check_branch
      %215 = sbr.rel (%p213) target = $region40
    $region39: #{basic_block_forward.1} parent=5 // pred_region
      _
    $region40: #{basic_block_forward.1} parent=5 // pred_fallthru
      _
    %p216 = scmp.le.s32.totalorder 1, %s13
    %p217 = scmp.lt.s32.totalorder %s13, 3
    %p218 = pnand %p216, %p217
    %p219 = pneg %p218
    // Predicated region
    $region41: #{basic_block_forward.1} parent=5 // pred_check
      _
    $region42: #{basic_block_forward.1} parent=5 // pred_check_branch
      %221 = sbr.rel (%p218) target = $region44
    $region43: #{basic_block_forward.1} parent=5 // pred_region
      %s222 = ssub.s32 %s13, 1
      %p223 = pneg %p46
      %p224 = pneg %p43
      %p225 = pneg %p67
      %p226 = pneg %p64
      %p227 = pneg %p88
      %p228 = pneg %p85
      %p229 = pneg %p109
      %p230 = pneg %p106
      %p231 = pneg %p130
      %p232 = pneg %p127
      %p233 = pneg %p151
      %p234 = pneg %p148
      %p235 = pneg %p179
      %p236 = pneg %p176
      %s237 = smul.u32 16, %s23
      %p238 = scmp.lt.s32.totalorder %s22, 1
      %s239 = scalar_select %p238, %s22, 1
      %p240 = scmp.lt.s32.totalorder %s237, 15
      %s241 = scalar_select %p240, %s237, 15
      %s242 = smul.addr %s241, 2
      %s243 = smul.addr %s239, 32
      %s244 = sadd.s32 %s242, %s243
      %s245 = smul.addr %s244, 4
      %s246 = scalar_lea.vmem %s7, %s245
      %s247 = smul.u32 16, %s23
      %p248 = scmp.lt.s32.totalorder %s22, 1
      %s249 = scalar_select %p248, %s22, 1
      %p250 = scmp.lt.s32.totalorder %s247, 15
      %s251 = scalar_select %p250, %s247, 15
      %s252 = smul.addr %s251, 2
      %s253 = smul.addr %s249, 32
      %s254 = sadd.s32 %s252, %s253
      %s255 = smul.addr %s254, 4
      %s256 = scalar_lea.vmem %s7, %s255
      %s257 = smul.u32 16, %s23
      %p259 = scmp.lt.s32.totalorder %s23, 0
      %s260 = ssub.s32 0, %s23
      %s261 = scalar_select %p259, %s260, %s23
      %s262 = sand.u32 %s261, 1
      %s263 = ssub.s32 0, %s262
      %s264 = scalar_select %p259, %s263, %s262
      %p265 = scmp.ne.s32.totalorder %s264, 0
      %p266 = scmp.lt.s32.totalorder %s264, 0
      %p267 = pnand %p266, %p265
      %p268 = pneg %p267
      %s269 = sadd.s32 %s264, 2
      %s270 = scalar_select %p268, %s269, %s264
      %p271 = scmp.eq.s32.totalorder %s23, 0
      // Predicated region
      $region45: #{basic_block_forward.1} parent=43 // pred_check
        %p272 = pneg %p271
      $region46: #{basic_block_forward.1} parent=43 // pred_check_branch
        %274 = sbr.rel (%p272) target = $region48
      $region47: #{basic_block_forward.1} parent=43 // pred_region
        %s275 = smul.u32 %s23, 16
        %s276 = smul.u32 %s275, 2
        %s277 = smul.u32 %s22, 40
        %s278 = sadd.s32 %s276, %s277
        %s279 = smul.addr %s278, 4
        %s280 = scalar_lea.vmem %s0, %s279
        %s281 = smul.u32 %s270, 40
        %s282 = smul.addr %s281, 4
        %s283 = scalar_lea.vmem [#allocation2], %s282
        %s284 = scalar_lea.sflag [#allocation4], %s270
        %p286 = scmp.lt.u32.totalorder 160, 8
        %p287 = pneg %p286
        // Predicated region
        $region49: #{basic_block_forward.1} parent=47 // pred_check
          _
        $region50: #{basic_block_forward.1} parent=47 // pred_check_branch
          %289 = sbr.rel (%p286) target = $region52
        $region51: #{basic_block_forward.1} parent=47 // pred_region
          %s305 = sand.u32 160, 7
          %p306 = scmp.eq.s32.totalorder %s305, 0
          // Predicated region
          $region64: #{basic_block_forward.1} parent=51 // pred_check
            %p307 = pneg %p306
          $region65: #{basic_block_forward.1} parent=51 // pred_check_branch
            %309 = sbr.rel (%p307) target = $region67
          $region66: #{basic_block_forward.1} parent=51 // pred_region
            loop: start=0, step=1, limit=1
            $region68: #{basic_block_forward.1} parent=66 // loop_pre_header
              _
            $region69: #{basic_block_forward.1} parent=66 // loop_header
              %s311 = sphi 0, %s315
              %p312 = scmp.ge.s32.totalorder %s311, 1
              %s316 = sphi %s280, %s280
              %s317 = sphi %s283, %s283
            $region70: #{basic_block_forward.1} parent=66 // loop_header_branch
              %314 = sbr.rel (%p312) target = $region74
            $region71: #{basic_block_forward.1} parent=66 // loop_body
              %v318 = vld [vmem:[%s316] sm:$0xff]
              %319 = vst [vmem:[%s317] sm:$0xff] %v318
              %v320 = vld [vmem:[%s316 + $0x8] sm:$0xff]
              %321 = vst [vmem:[%s317 + $0x8] sm:$0xff] %v320
              %v322 = vld [vmem:[%s316 + $0x10] sm:$0xff]
              %323 = vst [vmem:[%s317 + $0x10] sm:$0xff] %v322
              %v324 = vld [vmem:[%s316 + $0x18] sm:$0xff]
              %325 = vst [vmem:[%s317 + $0x18] sm:$0xff] %v324
              %v326 = vld [vmem:[%s316 + $0x20] sm:$0xff]
              %327 = vst [vmem:[%s317 + $0x20] sm:$0xff] %v326
              %v328 = vld [vmem:[%s316 + $0x28] sm:$0xff]
              %329 = vst [vmem:[%s317 + $0x28] sm:$0xff] %v328
              %v330 = vld [vmem:[%s316 + $0x30] sm:$0xff]
              %331 = vst [vmem:[%s317 + $0x30] sm:$0xff] %v330
              %v332 = vld [vmem:[%s316 + $0x38] sm:$0xff]
              %333 = vst [vmem:[%s317 + $0x38] sm:$0xff] %v332
              %v334 = vld [vmem:[%s316 + $0x40] sm:$0xff]
              %335 = vst [vmem:[%s317 + $0x40] sm:$0xff] %v334
              %v336 = vld [vmem:[%s316 + $0x48] sm:$0xff]
              %337 = vst [vmem:[%s317 + $0x48] sm:$0xff] %v336
              %v338 = vld [vmem:[%s316 + $0x50] sm:$0xff]
              %339 = vst [vmem:[%s317 + $0x50] sm:$0xff] %v338
              %v340 = vld [vmem:[%s316 + $0x58] sm:$0xff]
              %341 = vst [vmem:[%s317 + $0x58] sm:$0xff] %v340
              %v342 = vld [vmem:[%s316 + $0x60] sm:$0xff]
              %343 = vst [vmem:[%s317 + $0x60] sm:$0xff] %v342
              %v344 = vld [vmem:[%s316 + $0x68] sm:$0xff]
              %345 = vst [vmem:[%s317 + $0x68] sm:$0xff] %v344
              %v346 = vld [vmem:[%s316 + $0x70] sm:$0xff]
              %347 = vst [vmem:[%s317 + $0x70] sm:$0xff] %v346
              %v348 = vld [vmem:[%s316 + $0x78] sm:$0xff]
              %349 = vst [vmem:[%s317 + $0x78] sm:$0xff] %v348
              %v350 = vld [vmem:[%s316 + $0x80] sm:$0xff]
              %351 = vst [vmem:[%s317 + $0x80] sm:$0xff] %v350
              %v352 = vld [vmem:[%s316 + $0x88] sm:$0xff]
              %353 = vst [vmem:[%s317 + $0x88] sm:$0xff] %v352
              %v354 = vld [vmem:[%s316 + $0x90] sm:$0xff]
              %355 = vst [vmem:[%s317 + $0x90] sm:$0xff] %v354
              %v356 = vld [vmem:[%s316 + $0x98] sm:$0xff]
              %357 = vst [vmem:[%s317 + $0x98] sm:$0xff] %v356
            $region72: #{basic_block_forward.1} parent=66 // loop_footer
              %s315 = sadd.s32 1, %s311
            $region73: #{basic_block_forward.1} parent=66 // loop_footer_branch
              %310 = sbr.rel target = $region69
            $region74: #{basic_block_forward.1} parent=66 // loop_exit
              _
          $region67: #{basic_block_forward.1} parent=51 // pred_fallthru
            _
          %p358 = pneg %p306
          // Predicated region
          $region75: #{basic_block_forward.1} parent=51 // pred_check
            _
          $region76: #{basic_block_forward.1} parent=51 // pred_check_branch
            %360 = sbr.rel (%p306) target = $region78
          $region77: #{basic_block_forward.1} parent=51 // pred_region
            %s361 = sand.u32 160, 7
          $region78: #{basic_block_forward.1} parent=51 // pred_fallthru
            _
        $region52: #{basic_block_forward.1} parent=47 // pred_fallthru
          _
        // Predicated region
        $region53: #{basic_block_forward.1} parent=47 // pred_check
          %p290 = pneg %p286
        $region54: #{basic_block_forward.1} parent=47 // pred_check_branch
          %292 = sbr.rel (%p290) target = $region56
        $region55: #{basic_block_forward.1} parent=47 // pred_region
          %s293 = sshll.u32 1, 160
          %s294 = ssub.s32 %s293, 1
          loop: start=0, step=1, limit=1
          $region57: #{basic_block_forward.1} parent=55 // loop_pre_header
            _
          $region58: #{basic_block_forward.1} parent=55 // loop_header
            %s296 = sphi 0, %s300
            %p297 = scmp.ge.s32.totalorder %s296, 1
            %s301 = sphi %s280, %s280
            %s302 = sphi %s283, %s283
          $region59: #{basic_block_forward.1} parent=55 // loop_header_branch
            %299 = sbr.rel (%p297) target = $region63
          $region60: #{basic_block_forward.1} parent=55 // loop_body
            %v303 = vld [vmem:[%s301] sm:%s294]
            %304 = vst [vmem:[%s302] sm:%s294] %v303
          $region61: #{basic_block_forward.1} parent=55 // loop_footer
            %s300 = sadd.s32 1, %s296
          $region62: #{basic_block_forward.1} parent=55 // loop_footer_branch
            %295 = sbr.rel target = $region58
          $region63: #{basic_block_forward.1} parent=55 // loop_exit
            _
        $region56: #{basic_block_forward.1} parent=47 // pred_fallthru
          _
        // Predicated region
        $region79: #{basic_block_forward.1} parent=47 // pred_check
          _
        $region80: #{basic_block_forward.1} parent=47 // pred_check_branch
          %364 = sbr.rel (0) target = $region82
        $region81: #{basic_block_forward.1} parent=47 // pred_region
          %365 = vsyncadd %s284, 2560
        $region82: #{basic_block_forward.1} parent=47 // pred_fallthru
          _
      $region48: #{basic_block_forward.1} parent=43 // pred_fallthru
        _
      %s366 = sadd.s32 %s23, 1
      %p367 = scmp.lt.s32.totalorder %s366, 1
      // Predicated region
      $region83: #{basic_block_forward.1} parent=43 // pred_check
        %p368 = pneg %p367
      $region84: #{basic_block_forward.1} parent=43 // pred_check_branch
        %370 = sbr.rel (%p368) target = $region86
      $region85: #{basic_block_forward.1} parent=43 // pred_region
        %s371 = ssub.s32 1, %s270
        %s372 = smul.u32 %s366, 16
        %s373 = smul.u32 %s372, 2
        %s374 = smul.u32 %s22, 40
        %s375 = sadd.s32 %s373, %s374
        %s376 = smul.addr %s375, 4
        %s377 = scalar_lea.vmem %s0, %s376
        %s378 = smul.u32 %s371, 40
        %s379 = smul.addr %s378, 4
        %s380 = scalar_lea.vmem [#allocation2], %s379
        %s381 = scalar_lea.sflag [#allocation4], %s371
        %p383 = scmp.lt.u32.totalorder 160, 8
        %p384 = pneg %p383
        // Predicated region
        $region87: #{basic_block_forward.1} parent=85 // pred_check
          _
        $region88: #{basic_block_forward.1} parent=85 // pred_check_branch
          %386 = sbr.rel (%p383) target = $region90
        $region89: #{basic_block_forward.1} parent=85 // pred_region
          %s402 = sand.u32 160, 7
          %p403 = scmp.eq.s32.totalorder %s402, 0
          // Predicated region
          $region102: #{basic_block_forward.1} parent=89 // pred_check
            %p404 = pneg %p403
          $region103: #{basic_block_forward.1} parent=89 // pred_check_branch
            %406 = sbr.rel (%p404) target = $region105
          $region104: #{basic_block_forward.1} parent=89 // pred_region
            loop: start=0, step=1, limit=1
            $region106: #{basic_block_forward.1} parent=104 // loop_pre_header
              _
            $region107: #{basic_block_forward.1} parent=104 // loop_header
              %s408 = sphi 0, %s412
              %p409 = scmp.ge.s32.totalorder %s408, 1
              %s413 = sphi %s377, %s377
              %s414 = sphi %s380, %s380
            $region108: #{basic_block_forward.1} parent=104 // loop_header_branch
              %411 = sbr.rel (%p409) target = $region112
            $region109: #{basic_block_forward.1} parent=104 // loop_body
              %v415 = vld [vmem:[%s413] sm:$0xff]
              %416 = vst [vmem:[%s414] sm:$0xff] %v415
              %v417 = vld [vmem:[%s413 + $0x8] sm:$0xff]
              %418 = vst [vmem:[%s414 + $0x8] sm:$0xff] %v417
              %v419 = vld [vmem:[%s413 + $0x10] sm:$0xff]
              %420 = vst [vmem:[%s414 + $0x10] sm:$0xff] %v419
              %v421 = vld [vmem:[%s413 + $0x18] sm:$0xff]
              %422 = vst [vmem:[%s414 + $0x18] sm:$0xff] %v421
              %v423 = vld [vmem:[%s413 + $0x20] sm:$0xff]
              %424 = vst [vmem:[%s414 + $0x20] sm:$0xff] %v423
              %v425 = vld [vmem:[%s413 + $0x28] sm:$0xff]
              %426 = vst [vmem:[%s414 + $0x28] sm:$0xff] %v425
              %v427 = vld [vmem:[%s413 + $0x30] sm:$0xff]
              %428 = vst [vmem:[%s414 + $0x30] sm:$0xff] %v427
              %v429 = vld [vmem:[%s413 + $0x38] sm:$0xff]
              %430 = vst [vmem:[%s414 + $0x38] sm:$0xff] %v429
              %v431 = vld [vmem:[%s413 + $0x40] sm:$0xff]
              %432 = vst [vmem:[%s414 + $0x40] sm:$0xff] %v431
              %v433 = vld [vmem:[%s413 + $0x48] sm:$0xff]
              %434 = vst [vmem:[%s414 + $0x48] sm:$0xff] %v433
              %v435 = vld [vmem:[%s413 + $0x50] sm:$0xff]
              %436 = vst [vmem:[%s414 + $0x50] sm:$0xff] %v435
              %v437 = vld [vmem:[%s413 + $0x58] sm:$0xff]
              %438 = vst [vmem:[%s414 + $0x58] sm:$0xff] %v437
              %v439 = vld [vmem:[%s413 + $0x60] sm:$0xff]
              %440 = vst [vmem:[%s414 + $0x60] sm:$0xff] %v439
              %v441 = vld [vmem:[%s413 + $0x68] sm:$0xff]
              %442 = vst [vmem:[%s414 + $0x68] sm:$0xff] %v441
              %v443 = vld [vmem:[%s413 + $0x70] sm:$0xff]
              %444 = vst [vmem:[%s414 + $0x70] sm:$0xff] %v443
              %v445 = vld [vmem:[%s413 + $0x78] sm:$0xff]
              %446 = vst [vmem:[%s414 + $0x78] sm:$0xff] %v445
              %v447 = vld [vmem:[%s413 + $0x80] sm:$0xff]
              %448 = vst [vmem:[%s414 + $0x80] sm:$0xff] %v447
              %v449 = vld [vmem:[%s413 + $0x88] sm:$0xff]
              %450 = vst [vmem:[%s414 + $0x88] sm:$0xff] %v449
              %v451 = vld [vmem:[%s413 + $0x90] sm:$0xff]
              %452 = vst [vmem:[%s414 + $0x90] sm:$0xff] %v451
              %v453 = vld [vmem:[%s413 + $0x98] sm:$0xff]
              %454 = vst [vmem:[%s414 + $0x98] sm:$0xff] %v453
            $region110: #{basic_block_forward.1} parent=104 // loop_footer
              %s412 = sadd.s32 1, %s408
            $region111: #{basic_block_forward.1} parent=104 // loop_footer_branch
              %407 = sbr.rel target = $region107
            $region112: #{basic_block_forward.1} parent=104 // loop_exit
              _
          $region105: #{basic_block_forward.1} parent=89 // pred_fallthru
            _
          %p455 = pneg %p403
          // Predicated region
          $region113: #{basic_block_forward.1} parent=89 // pred_check
            _
          $region114: #{basic_block_forward.1} parent=89 // pred_check_branch
            %457 = sbr.rel (%p403) target = $region116
          $region115: #{basic_block_forward.1} parent=89 // pred_region
            %s458 = sand.u32 160, 7
          $region116: #{basic_block_forward.1} parent=89 // pred_fallthru
            _
        $region90: #{basic_block_forward.1} parent=85 // pred_fallthru
          _
        // Predicated region
        $region91: #{basic_block_forward.1} parent=85 // pred_check
          %p387 = pneg %p383
        $region92: #{basic_block_forward.1} parent=85 // pred_check_branch
          %389 = sbr.rel (%p387) target = $region94
        $region93: #{basic_block_forward.1} parent=85 // pred_region
          %s390 = sshll.u32 1, 160
          %s391 = ssub.s32 %s390, 1
          loop: start=0, step=1, limit=1
          $region95: #{basic_block_forward.1} parent=93 // loop_pre_header
            _
          $region96: #{basic_block_forward.1} parent=93 // loop_header
            %s393 = sphi 0, %s397
            %p394 = scmp.ge.s32.totalorder %s393, 1
            %s398 = sphi %s377, %s377
            %s399 = sphi %s380, %s380
          $region97: #{basic_block_forward.1} parent=93 // loop_header_branch
            %396 = sbr.rel (%p394) target = $region101
          $region98: #{basic_block_forward.1} parent=93 // loop_body
            %v400 = vld [vmem:[%s398] sm:%s391]
            %401 = vst [vmem:[%s399] sm:%s391] %v400
          $region99: #{basic_block_forward.1} parent=93 // loop_footer
            %s397 = sadd.s32 1, %s393
          $region100: #{basic_block_forward.1} parent=93 // loop_footer_branch
            %392 = sbr.rel target = $region96
          $region101: #{basic_block_forward.1} parent=93 // loop_exit
            _
        $region94: #{basic_block_forward.1} parent=85 // pred_fallthru
          _
        // Predicated region
        $region117: #{basic_block_forward.1} parent=85 // pred_check
          _
        $region118: #{basic_block_forward.1} parent=85 // pred_check_branch
          %461 = sbr.rel (0) target = $region120
        $region119: #{basic_block_forward.1} parent=85 // pred_region
          %462 = vsyncadd %s381, 2560
        $region120: #{basic_block_forward.1} parent=85 // pred_fallthru
          _
      $region86: #{basic_block_forward.1} parent=43 // pred_fallthru
        _
      %s463 = scalar_lea.sflag [#allocation4], %s270
      %s464 = smul.u32 4, 20
      %s465 = smul.u32 %s464, 2
      %s466 = smul.u32 %s465, 1
      %s467 = sshll.u32 %s466, 4
      %468 = dma.done %s463, %s467
      %s469 = smul.u32 %s270, 40
      %s470 = smul.addr %s469, 4
      %s471 = scalar_lea.vmem [#allocation2], %s470
      %v472 = vld [vmem:[%s471] sm:$0xf]
      %v473 = vld [vmem:[%s471 + $0x4] sm:$0xf]
      %v474 = vld [vmem:[%s471 + $0x8] sm:$0xf]
      %v475 = vld [vmem:[%s471 + $0xc] sm:$0xf]
      %v476 = vld [vmem:[%s471 + $0x10] sm:$0xf]
      %v477 = vld [vmem:[%s471 + $0x14] sm:$0xf]
      %v478 = vld [vmem:[%s471 + $0x18] sm:$0xf]
      %v479 = vld [vmem:[%s471 + $0x1c] sm:$0xf]
      %v480 = vld [vmem:[%s471 + $0x20] sm:$0xf]
      %v481 = vld [vmem:[%s471 + $0x24] sm:$0xf]
      %v482 = vld [vmem:[%s471 + $0x28] sm:$0xf]
      %v483 = vld [vmem:[%s471 + $0x2c] sm:$0xf]
      %v484 = vld [vmem:[%s471 + $0x30] sm:$0xf]
      %v485 = vld [vmem:[%s471 + $0x34] sm:$0xf]
      %v486 = vld [vmem:[%s471 + $0x38] sm:$0xf]
      %v487 = vld [vmem:[%s471 + $0x3c] sm:$0xf]
      %v488 = vld [vmem:[%s471 + $0x40] sm:$0xf]
      %v489 = vld [vmem:[%s471 + $0x44] sm:$0xf]
      %v490 = vld [vmem:[%s471 + $0x48] sm:$0xf]
      %v491 = vld [vmem:[%s471 + $0x4c] sm:$0xf]
      %v492 = vld [vmem:[%s471 + $0x50] sm:$0xf]
      %v493 = vld [vmem:[%s471 + $0x54] sm:$0xf]
      %v494 = vld [vmem:[%s471 + $0x58] sm:$0xf]
      %v495 = vld [vmem:[%s471 + $0x5c] sm:$0xf]
      %v496 = vld [vmem:[%s471 + $0x60] sm:$0xf]
      %v497 = vld [vmem:[%s471 + $0x64] sm:$0xf]
      %v498 = vld [vmem:[%s471 + $0x68] sm:$0xf]
      %v499 = vld [vmem:[%s471 + $0x6c] sm:$0xf]
      %v500 = vld [vmem:[%s471 + $0x70] sm:$0xf]
      %v501 = vld [vmem:[%s471 + $0x74] sm:$0xf]
      %v502 = vld [vmem:[%s471 + $0x78] sm:$0xf]
      %v503 = vld [vmem:[%s471 + $0x7c] sm:$0xf]
      %v504 = vld [vmem:[%s471 + $0x80] sm:$0xf]
      %v505 = vld [vmem:[%s471 + $0x84] sm:$0xf]
      %v506 = vld [vmem:[%s471 + $0x88] sm:$0xf]
      %v507 = vld [vmem:[%s471 + $0x8c] sm:$0xf]
      %v508 = vld [vmem:[%s1] sm:$0xff]
      %v509 = vld [vmem:[%s1 + $0x8] sm:$0xf]
      %v510 = vld [vmem:[%s1 + $0xc] sm:$0xff]
      %v511 = vld [vmem:[%s1 + $0x14] sm:$0xf]
      %v512 = vld [vmem:[%s1 + $0x18] sm:$0xff]
      %v513 = vld [vmem:[%s1 + $0x20] sm:$0xf]
      %v514 = vld [vmem:[%s1 + $0x24] sm:$0xff]
      %v515 = vld [vmem:[%s1 + $0x2c] sm:$0xf]
      %v516 = vld [vmem:[%s1 + $0x30] sm:$0xff]
      %v517 = vld [vmem:[%s1 + $0x38] sm:$0xf]
      %v518 = vld [vmem:[%s1 + $0x3c] sm:$0xff]
      %v519 = vld [vmem:[%s1 + $0x44] sm:$0xf]
      %v520 = vld [vmem:[%s1 + $0x48] sm:$0xff]
      %v521 = vld [vmem:[%s1 + $0x50] sm:$0xf]
      %v522 = vld [vmem:[%s1 + $0x54] sm:$0xff]
      %v523 = vld [vmem:[%s1 + $0x5c] sm:$0xf]
      %v524 = vld [vmem:[%s1 + $0x60] sm:$0xff]
      %v525 = vld [vmem:[%s1 + $0x68] sm:$0xf]
      %v526 = vld [vmem:[%s1 + $0x6c] sm:$0xff]
      %v527 = vld [vmem:[%s1 + $0x74] sm:$0xf]
      %v528 = vld [vmem:[%s1 + $0x78] sm:$0xff]
      %v529 = vld [vmem:[%s1 + $0x80] sm:$0xf]
      %v530 = vld [vmem:[%s1 + $0x84] sm:$0xff]
      %v531 = vld [vmem:[%s1 + $0x8c] sm:$0xf]
      %v532 = vld [vmem:[%s1 + $0x90] sm:$0xff]
      %v533 = vld [vmem:[%s1 + $0x98] sm:$0xf]
      %v534 = vld [vmem:[%s1 + $0x9c] sm:$0xff]
      %v535 = vld [vmem:[%s1 + $0xa4] sm:$0xf]
      %v536 = vld [vmem:[%s1 + $0xa8] sm:$0xff]
      %v537 = vld [vmem:[%s1 + $0xb0] sm:$0xf]
      %v538 = vld [vmem:[%s1 + $0xb4] sm:$0xff]
      %v539 = vld [vmem:[%s1 + $0xbc] sm:$0xf]
      %s540 = sadd.s32 2, %s469
      %s541 = smul.addr %s540, 4
      %s542 = scalar_lea.vmem [#allocation2], %s541
      %v543 = vld [vmem:[%s542] sm:$0xf]
      %v544 = vld [vmem:[%s542 + $0x4] sm:$0xf]
      %v545 = vld [vmem:[%s542 + $0x8] sm:$0xf]
      %v546 = vld [vmem:[%s542 + $0xc] sm:$0xf]
      %v547 = vld [vmem:[%s542 + $0x10] sm:$0xf]
      %v548 = vld [vmem:[%s542 + $0x14] sm:$0xf]
      %v549 = vld [vmem:[%s542 + $0x18] sm:$0xf]
      %v550 = vld [vmem:[%s542 + $0x1c] sm:$0xf]
      %v551 = vld [vmem:[%s542 + $0x20] sm:$0xf]
      %v552 = vld [vmem:[%s542 + $0x24] sm:$0xf]
      %v553 = vld [vmem:[%s542 + $0x28] sm:$0xf]
      %v554 = vld [vmem:[%s542 + $0x2c] sm:$0xf]
      %v555 = vld [vmem:[%s542 + $0x30] sm:$0xf]
      %v556 = vld [vmem:[%s542 + $0x34] sm:$0xf]
      %v557 = vld [vmem:[%s542 + $0x38] sm:$0xf]
      %v558 = vld [vmem:[%s542 + $0x3c] sm:$0xf]
      %v559 = vld [vmem:[%s542 + $0x40] sm:$0xf]
      %v560 = vld [vmem:[%s542 + $0x44] sm:$0xf]
      %v561 = vld [vmem:[%s542 + $0x48] sm:$0xf]
      %v562 = vld [vmem:[%s542 + $0x4c] sm:$0xf]
      %v563 = vld [vmem:[%s542 + $0x50] sm:$0xf]
      %v564 = vld [vmem:[%s542 + $0x54] sm:$0xf]
      %v565 = vld [vmem:[%s542 + $0x58] sm:$0xf]
      %v566 = vld [vmem:[%s542 + $0x5c] sm:$0xf]
      %v567 = vld [vmem:[%s542 + $0x60] sm:$0xf]
      %v568 = vld [vmem:[%s542 + $0x64] sm:$0xf]
      %v569 = vld [vmem:[%s542 + $0x68] sm:$0xf]
      %v570 = vld [vmem:[%s542 + $0x6c] sm:$0xf]
      %v571 = vld [vmem:[%s542 + $0x70] sm:$0xf]
      %v572 = vld [vmem:[%s542 + $0x74] sm:$0xf]
      %v573 = vld [vmem:[%s542 + $0x78] sm:$0xf]
      %v574 = vld [vmem:[%s542 + $0x7c] sm:$0xf]
      %v575 = vld [vmem:[%s542 + $0x80] sm:$0xf]
      %v576 = vld [vmem:[%s542 + $0x84] sm:$0xf]
      %v577 = vld [vmem:[%s542 + $0x88] sm:$0xf]
      %v578 = vld [vmem:[%s542 + $0x8c] sm:$0xf]
      %s579 = scalar_lea.vmem %s1, 192
      %v580 = vld [vmem:[%s579] sm:$0xff]
      %v581 = vld [vmem:[%s579 + $0x8] sm:$0xf]
      %v582 = vld [vmem:[%s579 + $0xc] sm:$0xff]
      %v583 = vld [vmem:[%s579 + $0x14] sm:$0xf]
      %v584 = vld [vmem:[%s579 + $0x18] sm:$0xff]
      %v585 = vld [vmem:[%s579 + $0x20] sm:$0xf]
      %v586 = vld [vmem:[%s579 + $0x24] sm:$0xff]
      %v587 = vld [vmem:[%s579 + $0x2c] sm:$0xf]
      %v588 = vld [vmem:[%s579 + $0x30] sm:$0xff]
      %v589 = vld [vmem:[%s579 + $0x38] sm:$0xf]
      %v590 = vld [vmem:[%s579 + $0x3c] sm:$0xff]
      %v591 = vld [vmem:[%s579 + $0x44] sm:$0xf]
      %v592 = vld [vmem:[%s579 + $0x48] sm:$0xff]
      %v593 = vld [vmem:[%s579 + $0x50] sm:$0xf]
      %v594 = vld [vmem:[%s579 + $0x54] sm:$0xff]
      %v595 = vld [vmem:[%s579 + $0x5c] sm:$0xf]
      %v596 = vld [vmem:[%s579 + $0x60] sm:$0xff]
      %v597 = vld [vmem:[%s579 + $0x68] sm:$0xf]
      %v598 = vld [vmem:[%s579 + $0x6c] sm:$0xff]
      %v599 = vld [vmem:[%s579 + $0x74] sm:$0xf]
      %v600 = vld [vmem:[%s579 + $0x78] sm:$0xff]
      %v601 = vld [vmem:[%s579 + $0x80] sm:$0xf]
      %v602 = vld [vmem:[%s579 + $0x84] sm:$0xff]
      %v603 = vld [vmem:[%s579 + $0x8c] sm:$0xf]
      %v604 = vld [vmem:[%s579 + $0x90] sm:$0xff]
      %v605 = vld [vmem:[%s579 + $0x98] sm:$0xf]
      %v606 = vld [vmem:[%s579 + $0x9c] sm:$0xff]
      %v607 = vld [vmem:[%s579 + $0xa4] sm:$0xf]
      %v608 = vld [vmem:[%s579 + $0xa8] sm:$0xff]
      %v609 = vld [vmem:[%s579 + $0xb0] sm:$0xf]
      %v610 = vld [vmem:[%s579 + $0xb4] sm:$0xff]
      %v611 = vld [vmem:[%s579 + $0xbc] sm:$0xf]
      %v648 = vunpack.c.l.b16 %v543
      %v649 = vunpack.c.l.b16 %v544
      %v650 = vunpack.c.l.b16 %v545
      %v651 = vunpack.c.l.b16 %v546
      %v652 = vunpack.c.l.b16 %v547
      %v653 = vunpack.c.l.b16 %v548
      %v654 = vunpack.c.l.b16 %v549
      %v655 = vunpack.c.l.b16 %v550
      %v656 = vunpack.c.l.b16 %v551
      %v657 = vunpack.c.l.b16 %v552
      %v658 = vunpack.c.l.b16 %v553
      %v659 = vunpack.c.l.b16 %v554
      %v660 = vunpack.c.l.b16 %v555
      %v661 = vunpack.c.l.b16 %v556
      %v662 = vunpack.c.l.b16 %v557
      %v663 = vunpack.c.l.b16 %v558
      %v664 = vunpack.c.l.b16 %v559
      %v665 = vunpack.c.l.b16 %v560
      %v666 = vunpack.c.l.b16 %v561
      %v667 = vunpack.c.l.b16 %v562
      %v668 = vunpack.c.l.b16 %v563
      %v669 = vunpack.c.l.b16 %v564
      %v670 = vunpack.c.l.b16 %v565
      %v671 = vunpack.c.l.b16 %v566
      %v672 = vunpack.c.l.b16 %v567
      %v673 = vunpack.c.l.b16 %v568
      %v674 = vunpack.c.l.b16 %v569
      %v675 = vunpack.c.l.b16 %v570
      %v676 = vunpack.c.l.b16 %v571
      %v677 = vunpack.c.l.b16 %v572
      %v678 = vunpack.c.l.b16 %v573
      %v679 = vunpack.c.l.b16 %v574
      %v680 = vunpack.c.l.b16 %v575
      %v681 = vunpack.c.l.b16 %v576
      %v682 = vunpack.c.l.b16 %v577
      %v683 = vunpack.c.l.b16 %v578
      %v684 = vpack.c.b16 %v649, %v648
      %v685 = vpack.c.b16 %v651, %v650
      %v686 = vpack.c.b16 %v653, %v652
      %v687 = vpack.c.b16 %v655, %v654
      %v688 = vpack.c.b16 %v657, %v656
      %v689 = vpack.c.b16 %v659, %v658
      %v690 = vpack.c.b16 %v661, %v660
      %v691 = vpack.c.b16 %v663, %v662
      %v692 = vpack.c.b16 %v665, %v664
      %v693 = vpack.c.b16 %v667, %v666
      %v694 = vpack.c.b16 %v669, %v668
      %v695 = vpack.c.b16 %v671, %v670
      %v696 = vpack.c.b16 %v673, %v672
      %v697 = vpack.c.b16 %v675, %v674
      %v698 = vpack.c.b16 %v677, %v676
      %v699 = vpack.c.b16 %v679, %v678
      %v700 = vpack.c.b16 %v681, %v680
      %v701 = vpack.c.b16 %v683, %v682
      %v752 = vunpack.c.l.b16 %v580
      %v753 = vunpack.c.h.b16 %v580
      %v754 = vunpack.c.l.b16 %v581
      %v755 = vunpack.c.l.b16 %v582
      %v756 = vunpack.c.h.b16 %v582
      %v757 = vunpack.c.l.b16 %v583
      %v758 = vunpack.c.l.b16 %v584
      %v759 = vunpack.c.h.b16 %v584
      %v760 = vunpack.c.l.b16 %v585
      %v761 = vunpack.c.l.b16 %v586
      %v762 = vunpack.c.h.b16 %v586
      %v763 = vunpack.c.l.b16 %v587
      %v764 = vunpack.c.l.b16 %v588
      %v765 = vunpack.c.h.b16 %v588
      %v766 = vunpack.c.l.b16 %v589
      %v767 = vunpack.c.l.b16 %v590
      %v768 = vunpack.c.h.b16 %v590
      %v769 = vunpack.c.l.b16 %v591
      %v770 = vunpack.c.l.b16 %v592
      %v771 = vunpack.c.h.b16 %v592
      %v772 = vunpack.c.l.b16 %v593
      %v773 = vunpack.c.l.b16 %v594
      %v774 = vunpack.c.h.b16 %v594
      %v775 = vunpack.c.l.b16 %v595
      %v776 = vunpack.c.l.b16 %v596
      %v777 = vunpack.c.h.b16 %v596
      %v778 = vunpack.c.l.b16 %v597
      %v779 = vunpack.c.l.b16 %v598
      %v780 = vunpack.c.h.b16 %v598
      %v781 = vunpack.c.l.b16 %v599
      %v782 = vunpack.c.l.b16 %v600
      %v783 = vunpack.c.h.b16 %v600
      %v784 = vunpack.c.l.b16 %v601
      %v785 = vunpack.c.l.b16 %v602
      %v786 = vunpack.c.h.b16 %v602
      %v787 = vunpack.c.l.b16 %v603
      %v788 = vunpack.c.l.b16 %v604
      %v789 = vunpack.c.h.b16 %v604
      %v790 = vunpack.c.l.b16 %v605
      %v791 = vunpack.c.l.b16 %v606
      %v792 = vunpack.c.h.b16 %v606
      %v793 = vunpack.c.l.b16 %v607
      %v794 = vunpack.c.l.b16 %v608
      %v795 = vunpack.c.h.b16 %v608
      %v796 = vunpack.c.l.b16 %v609
      %v797 = vunpack.c.l.b16 %v610
      %v798 = vunpack.c.h.b16 %v610
      %v799 = vunpack.c.l.b16 %v611
      %v800 = vpack.c.b16 %v755, %v752
      %v801 = vpack.c.b16 %v756, %v753
      %v802 = vpack.c.b16 %v757, %v754
      %v803 = vpack.c.b16 %v761, %v758
      %v804 = vpack.c.b16 %v762, %v759
      %v805 = vpack.c.b16 %v763, %v760
      %v806 = vpack.c.b16 %v767, %v764
      %v807 = vpack.c.b16 %v768, %v765
      %v808 = vpack.c.b16 %v769, %v766
      %v809 = vpack.c.b16 %v773, %v770
      %v810 = vpack.c.b16 %v774, %v771
      %v811 = vpack.c.b16 %v775, %v772
      %v812 = vpack.c.b16 %v779, %v776
      %v813 = vpack.c.b16 %v780, %v777
      %v814 = vpack.c.b16 %v781, %v778
      %v815 = vpack.c.b16 %v785, %v782
      %v816 = vpack.c.b16 %v786, %v783
      %v817 = vpack.c.b16 %v787, %v784
      %v818 = vpack.c.b16 %v791, %v788
      %v819 = vpack.c.b16 %v792, %v789
      %v820 = vpack.c.b16 %v793, %v790
      %v821 = vpack.c.b16 %v797, %v794
      %v822 = vpack.c.b16 %v798, %v795
      %v823 = vpack.c.b16 %v799, %v796
      %848 = vmatprep.subr.bf16.mxu0 %v822
      %849 = vmatpush1.bf16.msra.mxu0 %v821
      %850 = vmatprep.subr.bf16.mxu0 %v819
      %851 = vmatpush1.bf16.msra.mxu0 %v818
      %852 = vmatprep.subr.bf16.mxu0 %v816
      %853 = vmatpush1.bf16.msra.mxu0 %v815
      %854 = vmatprep.subr.bf16.mxu0 %v813
      %855 = vmatpush1.bf16.msra.mxu0 %v812
      %856 = vmatprep.subr.bf16.mxu0 %v810
      %857 = vmatpush1.bf16.msra.mxu0 %v809
      %858 = vmatprep.subr.bf16.mxu0 %v807
      %859 = vmatpush1.bf16.msra.mxu0 %v806
      %860 = vmatprep.subr.bf16.mxu0 %v804
      %861 = vmatpush1.bf16.msra.mxu0 %v803
      %862 = vmatprep.subr.bf16.mxu0 %v801
      %863 = vmatpush1.bf16.msra.mxu0 %v800
      %864 = vmatprep.subr.bf16.mxu0 0
      %865 = vmatpush2.bf16.msra.mxu0 0
      %866 = vmatprep.subr.bf16.mxu0 0
      %867 = vmatpush2.bf16.msra.mxu0 0
      %868 = vmatprep.subr.bf16.mxu0 0
      %869 = vmatpush2.bf16.msra.mxu0 0
      %870 = vmatprep.subr.bf16.mxu0 0
      %871 = vmatpush2.bf16.msra.mxu0 0
      %872 = vmatprep.subr.bf16.mxu0 0
      %873 = vmatpush2.bf16.msra.mxu0 0
      %874 = vmatprep.subr.bf16.mxu0 0
      %875 = vmatpush2.bf16.msra.mxu0 0
      %876 = vmatprep.subr.bf16.mxu0 0
      %877 = vmatpush2.bf16.msra.mxu0 0
      %878 = vmatprep.subr.bf16.mxu0 0
      %879 = vmatpush2.bf16.msra.mxu0 0
      %880 = vmatprep.mubr.bf16.mxu0 0
      %881 = vmatmul.mubr.bf16.gmra.mxu0 %v684
      %v882 = vpop.f32.mrf.mxu0
      %v883 = vadd.f32 0.0, %v882
      %v884 = vpop.f32.mrf.mxu0
      %v885 = vadd.f32 0.0, %v884
      %v886 = vpop.f32.mrf.mxu0
      %v887 = vadd.f32 0.0, %v886
      %v888 = vpop.f32.mrf.mxu0
      %v889 = vadd.f32 0.0, %v888
      %890 = vmatprep.mubr.bf16.mxu0 0
      %891 = vmatmul.mubr.bf16.gmra.mxu0 %v685
      %v892 = vpop.f32.mrf.mxu0
      %v893 = vadd.f32 0.0, %v892
      %v894 = vpop.f32.mrf.mxu0
      %v895 = vadd.f32 0.0, %v894
      %v896 = vpop.f32.mrf.mxu0
      %v897 = vadd.f32 0.0, %v896
      %v898 = vpop.f32.mrf.mxu0
      %v899 = vadd.f32 0.0, %v898
      %900 = vmatprep.mubr.bf16.mxu0 0
      %901 = vmatmul.mubr.bf16.gmra.mxu0 %v686
      %v902 = vpop.f32.mrf.mxu0
      %v903 = vadd.f32 0.0, %v902
      %v904 = vpop.f32.mrf.mxu0
      %v905 = vadd.f32 0.0, %v904
      %v906 = vpop.f32.mrf.mxu0
      %v907 = vadd.f32 0.0, %v906
      %v908 = vpop.f32.mrf.mxu0
      %v909 = vadd.f32 0.0, %v908
      %910 = vmatprep.mubr.bf16.mxu0 0
      %911 = vmatmul.mubr.bf16.gmra.mxu0 %v687
      %v912 = vpop.f32.mrf.mxu0
      %v913 = vadd.f32 0.0, %v912
      %v914 = vpop.f32.mrf.mxu0
      %v915 = vadd.f32 0.0, %v914
      %v916 = vpop.f32.mrf.mxu0
      %v917 = vadd.f32 0.0, %v916
      %v918 = vpop.f32.mrf.mxu0
      %v919 = vadd.f32 0.0, %v918
      %920 = vmatprep.mubr.bf16.mxu0 0
      %921 = vmatmul.mubr.bf16.gmra.mxu0 %v688
      %v922 = vpop.f32.mrf.mxu0
      %v923 = vadd.f32 0.0, %v922
      %v924 = vpop.f32.mrf.mxu0
      %v925 = vadd.f32 0.0, %v924
      %v926 = vpop.f32.mrf.mxu0
      %v927 = vadd.f32 0.0, %v926
      %v928 = vpop.f32.mrf.mxu0
      %v929 = vadd.f32 0.0, %v928
      %930 = vmatprep.mubr.bf16.mxu0 0
      %931 = vmatmul.mubr.bf16.gmra.mxu0 %v689
      %v932 = vpop.f32.mrf.mxu0
      %v933 = vadd.f32 0.0, %v932
      %v934 = vpop.f32.mrf.mxu0
      %v935 = vadd.f32 0.0, %v934
      %v936 = vpop.f32.mrf.mxu0
      %v937 = vadd.f32 0.0, %v936
      %v938 = vpop.f32.mrf.mxu0
      %v939 = vadd.f32 0.0, %v938
      %940 = vmatprep.mubr.bf16.mxu0 0
      %941 = vmatmul.mubr.bf16.gmra.mxu0 %v690
      %v942 = vpop.f32.mrf.mxu0
      %v943 = vadd.f32 0.0, %v942
      %v944 = vpop.f32.mrf.mxu0
      %v945 = vadd.f32 0.0, %v944
      %v946 = vpop.f32.mrf.mxu0
      %v947 = vadd.f32 0.0, %v946
      %v948 = vpop.f32.mrf.mxu0
      %v949 = vadd.f32 0.0, %v948
      %950 = vmatprep.mubr.bf16.mxu0 0
      %951 = vmatmul.mubr.bf16.gmra.mxu0 %v691
      %v952 = vpop.f32.mrf.mxu0
      %v953 = vadd.f32 0.0, %v952
      %v954 = vpop.f32.mrf.mxu0
      %v955 = vadd.f32 0.0, %v954
      %v956 = vpop.f32.mrf.mxu0
      %v957 = vadd.f32 0.0, %v956
      %v958 = vpop.f32.mrf.mxu0
      %v959 = vadd.f32 0.0, %v958
      %960 = vmatprep.mubr.bf16.mxu0 0
      %961 = vmatmul.mubr.bf16.gmra.mxu0 %v692
      %v962 = vpop.f32.mrf.mxu0
      %v963 = vadd.f32 0.0, %v962
      %v964 = vpop.f32.mrf.mxu0
      %v965 = vadd.f32 0.0, %v964
      %v966 = vpop.f32.mrf.mxu0
      %v967 = vadd.f32 0.0, %v966
      %v968 = vpop.f32.mrf.mxu0
      %v969 = vadd.f32 0.0, %v968
      %970 = vmatprep.mubr.bf16.mxu0 0
      %971 = vmatmul.mubr.bf16.gmra.mxu0 %v693
      %v972 = vpop.f32.mrf.mxu0
      %v973 = vadd.f32 0.0, %v972
      %v974 = vpop.f32.mrf.mxu0
      %v975 = vadd.f32 0.0, %v974
      %v976 = vpop.f32.mrf.mxu0
      %v977 = vadd.f32 0.0, %v976
      %v978 = vpop.f32.mrf.mxu0
      %v979 = vadd.f32 0.0, %v978
      %980 = vmatprep.mubr.bf16.mxu0 0
      %981 = vmatmul.mubr.bf16.gmra.mxu0 %v694
      %v982 = vpop.f32.mrf.mxu0
      %v983 = vadd.f32 0.0, %v982
      %v984 = vpop.f32.mrf.mxu0
      %v985 = vadd.f32 0.0, %v984
      %v986 = vpop.f32.mrf.mxu0
      %v987 = vadd.f32 0.0, %v986
      %v988 = vpop.f32.mrf.mxu0
      %v989 = vadd.f32 0.0, %v988
      %990 = vmatprep.mubr.bf16.mxu0 0
      %991 = vmatmul.mubr.bf16.gmra.mxu0 %v695
      %v992 = vpop.f32.mrf.mxu0
      %v993 = vadd.f32 0.0, %v992
      %v994 = vpop.f32.mrf.mxu0
      %v995 = vadd.f32 0.0, %v994
      %v996 = vpop.f32.mrf.mxu0
      %v997 = vadd.f32 0.0, %v996
      %v998 = vpop.f32.mrf.mxu0
      %v999 = vadd.f32 0.0, %v998
      %1000 = vmatprep.mubr.bf16.mxu0 0
      %1001 = vmatmul.mubr.bf16.gmra.mxu0 %v696
      %v1002 = vpop.f32.mrf.mxu0
      %v1003 = vadd.f32 0.0, %v1002
      %v1004 = vpop.f32.mrf.mxu0
      %v1005 = vadd.f32 0.0, %v1004
      %v1006 = vpop.f32.mrf.mxu0
      %v1007 = vadd.f32 0.0, %v1006
      %v1008 = vpop.f32.mrf.mxu0
      %v1009 = vadd.f32 0.0, %v1008
      %1010 = vmatprep.mubr.bf16.mxu0 0
      %1011 = vmatmul.mubr.bf16.gmra.mxu0 %v697
      %v1012 = vpop.f32.mrf.mxu0
      %v1013 = vadd.f32 0.0, %v1012
      %v1014 = vpop.f32.mrf.mxu0
      %v1015 = vadd.f32 0.0, %v1014
      %v1016 = vpop.f32.mrf.mxu0
      %v1017 = vadd.f32 0.0, %v1016
      %v1018 = vpop.f32.mrf.mxu0
      %v1019 = vadd.f32 0.0, %v1018
      %1020 = vmatprep.mubr.bf16.mxu0 0
      %1021 = vmatmul.mubr.bf16.gmra.mxu0 %v698
      %v1022 = vpop.f32.mrf.mxu0
      %v1023 = vadd.f32 0.0, %v1022
      %v1024 = vpop.f32.mrf.mxu0
      %v1025 = vadd.f32 0.0, %v1024
      %v1026 = vpop.f32.mrf.mxu0
      %v1027 = vadd.f32 0.0, %v1026
      %v1028 = vpop.f32.mrf.mxu0
      %v1029 = vadd.f32 0.0, %v1028
      %1030 = vmatprep.mubr.bf16.mxu0 0
      %1031 = vmatmul.mubr.bf16.gmra.mxu0 %v699
      %v1032 = vpop.f32.mrf.mxu0
      %v1033 = vadd.f32 0.0, %v1032
      %v1034 = vpop.f32.mrf.mxu0
      %v1035 = vadd.f32 0.0, %v1034
      %v1036 = vpop.f32.mrf.mxu0
      %v1037 = vadd.f32 0.0, %v1036
      %v1038 = vpop.f32.mrf.mxu0
      %v1039 = vadd.f32 0.0, %v1038
      %1040 = vmatprep.mubr.bf16.mxu0 0
      %1041 = vmatmul.mubr.bf16.gmra.mxu0 %v700
      %v1042 = vpop.f32.mrf.mxu0
      %v1043 = vadd.f32 0.0, %v1042
      %v1044 = vpop.f32.mrf.mxu0
      %v1045 = vadd.f32 0.0, %v1044
      %v1046 = vpop.f32.mrf.mxu0
      %v1047 = vadd.f32 0.0, %v1046
      %v1048 = vpop.f32.mrf.mxu0
      %v1049 = vadd.f32 0.0, %v1048
      %1050 = vmatprep.mubr.bf16.mxu0 0
      %1051 = vmatmul.mubr.bf16.gmra.mxu0 %v701
      %v1052 = vpop.f32.mrf.mxu0
      %v1053 = vadd.f32 0.0, %v1052
      %v1054 = vpop.f32.mrf.mxu0
      %v1055 = vadd.f32 0.0, %v1054
      %v1056 = vpop.f32.mrf.mxu0
      %v1057 = vadd.f32 0.0, %v1056
      %v1058 = vpop.f32.mrf.mxu0
      %v1059 = vadd.f32 0.0, %v1058
      %1060 = vdwg.mxu0
      %1061 = vmatprep.subr.bf16.mxu0 0
      %1062 = vmatpush1.bf16.msra.mxu0 %v823
      %1063 = vmatprep.subr.bf16.mxu0 0
      %1064 = vmatpush1.bf16.msra.mxu0 %v820
      %1065 = vmatprep.subr.bf16.mxu0 0
      %1066 = vmatpush1.bf16.msra.mxu0 %v817
      %1067 = vmatprep.subr.bf16.mxu0 0
      %1068 = vmatpush1.bf16.msra.mxu0 %v814
      %1069 = vmatprep.subr.bf16.mxu0 0
      %1070 = vmatpush1.bf16.msra.mxu0 %v811
      %1071 = vmatprep.subr.bf16.mxu0 0
      %1072 = vmatpush1.bf16.msra.mxu0 %v808
      %1073 = vmatprep.subr.bf16.mxu0 0
      %1074 = vmatpush1.bf16.msra.mxu0 %v805
      %1075 = vmatprep.subr.bf16.mxu0 0
      %1076 = vmatpush1.bf16.msra.mxu0 %v802
      %1077 = vmatprep.subr.bf16.mxu0 0
      %1078 = vmatpush2.bf16.msra.mxu0 0
      %1079 = vmatprep.subr.bf16.mxu0 0
      %1080 = vmatpush2.bf16.msra.mxu0 0
      %1081 = vmatprep.subr.bf16.mxu0 0
      %1082 = vmatpush2.bf16.msra.mxu0 0
      %1083 = vmatprep.subr.bf16.mxu0 0
      %1084 = vmatpush2.bf16.msra.mxu0 0
      %1085 = vmatprep.subr.bf16.mxu0 0
      %1086 = vmatpush2.bf16.msra.mxu0 0
      %1087 = vmatprep.subr.bf16.mxu0 0
      %1088 = vmatpush2.bf16.msra.mxu0 0
      %1089 = vmatprep.subr.bf16.mxu0 0
      %1090 = vmatpush2.bf16.msra.mxu0 0
      %1091 = vmatprep.subr.bf16.mxu0 0
      %1092 = vmatpush2.bf16.msra.mxu0 0
      %1093 = vmatprep.mubr.bf16.mxu0 0
      %1094 = vmatmul.mubr.bf16.gmra.mxu0 %v684
      %v1095 = vpop.f32.mrf.mxu0
      %v1096 = vadd.f32 0.0, %v1095
      %v1097 = vpop.f32.mrf.mxu0
      %v1098 = vpop.f32.mrf.mxu0
      %v1099 = vadd.f32 0.0, %v1098
      %v1100 = vpop.f32.mrf.mxu0
      %1101 = vmatprep.mubr.bf16.mxu0 0
      %1102 = vmatmul.mubr.bf16.gmra.mxu0 %v685
      %v1103 = vpop.f32.mrf.mxu0
      %v1104 = vadd.f32 0.0, %v1103
      %v1105 = vpop.f32.mrf.mxu0
      %v1106 = vpop.f32.mrf.mxu0
      %v1107 = vadd.f32 0.0, %v1106
      %v1108 = vpop.f32.mrf.mxu0
      %1109 = vmatprep.mubr.bf16.mxu0 0
      %1110 = vmatmul.mubr.bf16.gmra.mxu0 %v686
      %v1111 = vpop.f32.mrf.mxu0
      %v1112 = vadd.f32 0.0, %v1111
      %v1113 = vpop.f32.mrf.mxu0
      %v1114 = vpop.f32.mrf.mxu0
      %v1115 = vadd.f32 0.0, %v1114
      %v1116 = vpop.f32.mrf.mxu0
      %1117 = vmatprep.mubr.bf16.mxu0 0
      %1118 = vmatmul.mubr.bf16.gmra.mxu0 %v687
      %v1119 = vpop.f32.mrf.mxu0
      %v1120 = vadd.f32 0.0, %v1119
      %v1121 = vpop.f32.mrf.mxu0
      %v1122 = vpop.f32.mrf.mxu0
      %v1123 = vadd.f32 0.0, %v1122
      %v1124 = vpop.f32.mrf.mxu0
      %1125 = vmatprep.mubr.bf16.mxu0 0
      %1126 = vmatmul.mubr.bf16.gmra.mxu0 %v688
      %v1127 = vpop.f32.mrf.mxu0
      %v1128 = vadd.f32 0.0, %v1127
      %v1129 = vpop.f32.mrf.mxu0
      %v1130 = vpop.f32.mrf.mxu0
      %v1131 = vadd.f32 0.0, %v1130
      %v1132 = vpop.f32.mrf.mxu0
      %1133 = vmatprep.mubr.bf16.mxu0 0
      %1134 = vmatmul.mubr.bf16.gmra.mxu0 %v689
      %v1135 = vpop.f32.mrf.mxu0
      %v1136 = vadd.f32 0.0, %v1135
      %v1137 = vpop.f32.mrf.mxu0
      %v1138 = vpop.f32.mrf.mxu0
      %v1139 = vadd.f32 0.0, %v1138
      %v1140 = vpop.f32.mrf.mxu0
      %1141 = vmatprep.mubr.bf16.mxu0 0
      %1142 = vmatmul.mubr.bf16.gmra.mxu0 %v690
      %v1143 = vpop.f32.mrf.mxu0
      %v1144 = vadd.f32 0.0, %v1143
      %v1145 = vpop.f32.mrf.mxu0
      %v1146 = vpop.f32.mrf.mxu0
      %v1147 = vadd.f32 0.0, %v1146
      %v1148 = vpop.f32.mrf.mxu0
      %1149 = vmatprep.mubr.bf16.mxu0 0
      %1150 = vmatmul.mubr.bf16.gmra.mxu0 %v691
      %v1151 = vpop.f32.mrf.mxu0
      %v1152 = vadd.f32 0.0, %v1151
      %v1153 = vpop.f32.mrf.mxu0
      %v1154 = vpop.f32.mrf.mxu0
      %v1155 = vadd.f32 0.0, %v1154
      %v1156 = vpop.f32.mrf.mxu0
      %1157 = vmatprep.mubr.bf16.mxu0 0
      %1158 = vmatmul.mubr.bf16.gmra.mxu0 %v692
      %v1159 = vpop.f32.mrf.mxu0
      %v1160 = vadd.f32 0.0, %v1159
      %v1161 = vpop.f32.mrf.mxu0
      %v1162 = vpop.f32.mrf.mxu0
      %v1163 = vadd.f32 0.0, %v1162
      %v1164 = vpop.f32.mrf.mxu0
      %1165 = vmatprep.mubr.bf16.mxu0 0
      %1166 = vmatmul.mubr.bf16.gmra.mxu0 %v693
      %v1167 = vpop.f32.mrf.mxu0
      %v1168 = vadd.f32 0.0, %v1167
      %v1169 = vpop.f32.mrf.mxu0
      %v1170 = vpop.f32.mrf.mxu0
      %v1171 = vadd.f32 0.0, %v1170
      %v1172 = vpop.f32.mrf.mxu0
      %1173 = vmatprep.mubr.bf16.mxu0 0
      %1174 = vmatmul.mubr.bf16.gmra.mxu0 %v694
      %v1175 = vpop.f32.mrf.mxu0
      %v1176 = vadd.f32 0.0, %v1175
      %v1177 = vpop.f32.mrf.mxu0
      %v1178 = vpop.f32.mrf.mxu0
      %v1179 = vadd.f32 0.0, %v1178
      %v1180 = vpop.f32.mrf.mxu0
      %1181 = vmatprep.mubr.bf16.mxu0 0
      %1182 = vmatmul.mubr.bf16.gmra.mxu0 %v695
      %v1183 = vpop.f32.mrf.mxu0
      %v1184 = vadd.f32 0.0, %v1183
      %v1185 = vpop.f32.mrf.mxu0
      %v1186 = vpop.f32.mrf.mxu0
      %v1187 = vadd.f32 0.0, %v1186
      %v1188 = vpop.f32.mrf.mxu0
      %1189 = vmatprep.mubr.bf16.mxu0 0
      %1190 = vmatmul.mubr.bf16.gmra.mxu0 %v696
      %v1191 = vpop.f32.mrf.mxu0
      %v1192 = vadd.f32 0.0, %v1191
      %v1193 = vpop.f32.mrf.mxu0
      %v1194 = vpop.f32.mrf.mxu0
      %v1195 = vadd.f32 0.0, %v1194
      %v1196 = vpop.f32.mrf.mxu0
      %1197 = vmatprep.mubr.bf16.mxu0 0
      %1198 = vmatmul.mubr.bf16.gmra.mxu0 %v697
      %v1199 = vpop.f32.mrf.mxu0
      %v1200 = vadd.f32 0.0, %v1199
      %v1201 = vpop.f32.mrf.mxu0
      %v1202 = vpop.f32.mrf.mxu0
      %v1203 = vadd.f32 0.0, %v1202
      %v1204 = vpop.f32.mrf.mxu0
      %1205 = vmatprep.mubr.bf16.mxu0 0
      %1206 = vmatmul.mubr.bf16.gmra.mxu0 %v698
      %v1207 = vpop.f32.mrf.mxu0
      %v1208 = vadd.f32 0.0, %v1207
      %v1209 = vpop.f32.mrf.mxu0
      %v1210 = vpop.f32.mrf.mxu0
      %v1211 = vadd.f32 0.0, %v1210
      %v1212 = vpop.f32.mrf.mxu0
      %1213 = vmatprep.mubr.bf16.mxu0 0
      %1214 = vmatmul.mubr.bf16.gmra.mxu0 %v699
      %v1215 = vpop.f32.mrf.mxu0
      %v1216 = vadd.f32 0.0, %v1215
      %v1217 = vpop.f32.mrf.mxu0
      %v1218 = vpop.f32.mrf.mxu0
      %v1219 = vadd.f32 0.0, %v1218
      %v1220 = vpop.f32.mrf.mxu0
      %1221 = vmatprep.mubr.bf16.mxu0 0
      %1222 = vmatmul.mubr.bf16.gmra.mxu0 %v700
      %v1223 = vpop.f32.mrf.mxu0
      %v1224 = vadd.f32 0.0, %v1223
      %v1225 = vpop.f32.mrf.mxu0
      %v1226 = vpop.f32.mrf.mxu0
      %v1227 = vadd.f32 0.0, %v1226
      %v1228 = vpop.f32.mrf.mxu0
      %1229 = vmatprep.mubr.bf16.mxu0 0
      %1230 = vmatmul.mubr.bf16.gmra.mxu0 %v701
      %v1231 = vpop.f32.mrf.mxu0
      %v1232 = vadd.f32 0.0, %v1231
      %v1233 = vpop.f32.mrf.mxu0
      %v1234 = vpop.f32.mrf.mxu0
      %v1235 = vadd.f32 0.0, %v1234
      %v1236 = vpop.f32.mrf.mxu0
      %1237 = vdwg.mxu0
      %v1274 = vunpack.c.l.b16 %v472
      %v1275 = vunpack.c.l.b16 %v473
      %v1276 = vunpack.c.l.b16 %v474
      %v1277 = vunpack.c.l.b16 %v475
      %v1278 = vunpack.c.l.b16 %v476
      %v1279 = vunpack.c.l.b16 %v477
      %v1280 = vunpack.c.l.b16 %v478
      %v1281 = vunpack.c.l.b16 %v479
      %v1282 = vunpack.c.l.b16 %v480
      %v1283 = vunpack.c.l.b16 %v481
      %v1284 = vunpack.c.l.b16 %v482
      %v1285 = vunpack.c.l.b16 %v483
      %v1286 = vunpack.c.l.b16 %v484
      %v1287 = vunpack.c.l.b16 %v485
      %v1288 = vunpack.c.l.b16 %v486
      %v1289 = vunpack.c.l.b16 %v487
      %v1290 = vunpack.c.l.b16 %v488
      %v1291 = vunpack.c.l.b16 %v489
      %v1292 = vunpack.c.l.b16 %v490
      %v1293 = vunpack.c.l.b16 %v491
      %v1294 = vunpack.c.l.b16 %v492
      %v1295 = vunpack.c.l.b16 %v493
      %v1296 = vunpack.c.l.b16 %v494
      %v1297 = vunpack.c.l.b16 %v495
      %v1298 = vunpack.c.l.b16 %v496
      %v1299 = vunpack.c.l.b16 %v497
      %v1300 = vunpack.c.l.b16 %v498
      %v1301 = vunpack.c.l.b16 %v499
      %v1302 = vunpack.c.l.b16 %v500
      %v1303 = vunpack.c.l.b16 %v501
      %v1304 = vunpack.c.l.b16 %v502
      %v1305 = vunpack.c.l.b16 %v503
      %v1306 = vunpack.c.l.b16 %v504
      %v1307 = vunpack.c.l.b16 %v505
      %v1308 = vunpack.c.l.b16 %v506
      %v1309 = vunpack.c.l.b16 %v507
      %v1310 = vpack.c.b16 %v1275, %v1274
      %v1311 = vpack.c.b16 %v1277, %v1276
      %v1312 = vpack.c.b16 %v1279, %v1278
      %v1313 = vpack.c.b16 %v1281, %v1280
      %v1314 = vpack.c.b16 %v1283, %v1282
      %v1315 = vpack.c.b16 %v1285, %v1284
      %v1316 = vpack.c.b16 %v1287, %v1286
      %v1317 = vpack.c.b16 %v1289, %v1288
      %v1318 = vpack.c.b16 %v1291, %v1290
      %v1319 = vpack.c.b16 %v1293, %v1292
      %v1320 = vpack.c.b16 %v1295, %v1294
      %v1321 = vpack.c.b16 %v1297, %v1296
      %v1322 = vpack.c.b16 %v1299, %v1298
      %v1323 = vpack.c.b16 %v1301, %v1300
      %v1324 = vpack.c.b16 %v1303, %v1302
      %v1325 = vpack.c.b16 %v1305, %v1304
      %v1326 = vpack.c.b16 %v1307, %v1306
      %v1327 = vpack.c.b16 %v1309, %v1308
      %v1378 = vunpack.c.l.b16 %v508
      %v1379 = vunpack.c.h.b16 %v508
      %v1380 = vunpack.c.l.b16 %v509
      %v1381 = vunpack.c.l.b16 %v510
      %v1382 = vunpack.c.h.b16 %v510
      %v1383 = vunpack.c.l.b16 %v511
      %v1384 = vunpack.c.l.b16 %v512
      %v1385 = vunpack.c.h.b16 %v512
      %v1386 = vunpack.c.l.b16 %v513
      %v1387 = vunpack.c.l.b16 %v514
      %v1388 = vunpack.c.h.b16 %v514
      %v1389 = vunpack.c.l.b16 %v515
      %v1390 = vunpack.c.l.b16 %v516
      %v1391 = vunpack.c.h.b16 %v516
      %v1392 = vunpack.c.l.b16 %v517
      %v1393 = vunpack.c.l.b16 %v518
      %v1394 = vunpack.c.h.b16 %v518
      %v1395 = vunpack.c.l.b16 %v519
      %v1396 = vunpack.c.l.b16 %v520
      %v1397 = vunpack.c.h.b16 %v520
      %v1398 = vunpack.c.l.b16 %v521
      %v1399 = vunpack.c.l.b16 %v522
      %v1400 = vunpack.c.h.b16 %v522
      %v1401 = vunpack.c.l.b16 %v523
      %v1402 = vunpack.c.l.b16 %v524
      %v1403 = vunpack.c.h.b16 %v524
      %v1404 = vunpack.c.l.b16 %v525
      %v1405 = vunpack.c.l.b16 %v526
      %v1406 = vunpack.c.h.b16 %v526
      %v1407 = vunpack.c.l.b16 %v527
      %v1408 = vunpack.c.l.b16 %v528
      %v1409 = vunpack.c.h.b16 %v528
      %v1410 = vunpack.c.l.b16 %v529
      %v1411 = vunpack.c.l.b16 %v530
      %v1412 = vunpack.c.h.b16 %v530
      %v1413 = vunpack.c.l.b16 %v531
      %v1414 = vunpack.c.l.b16 %v532
      %v1415 = vunpack.c.h.b16 %v532
      %v1416 = vunpack.c.l.b16 %v533
      %v1417 = vunpack.c.l.b16 %v534
      %v1418 = vunpack.c.h.b16 %v534
      %v1419 = vunpack.c.l.b16 %v535
      %v1420 = vunpack.c.l.b16 %v536
      %v1421 = vunpack.c.h.b16 %v536
      %v1422 = vunpack.c.l.b16 %v537
      %v1423 = vunpack.c.l.b16 %v538
      %v1424 = vunpack.c.h.b16 %v538
      %v1425 = vunpack.c.l.b16 %v539
      %v1426 = vpack.c.b16 %v1381, %v1378
      %v1427 = vpack.c.b16 %v1382, %v1379
      %v1428 = vpack.c.b16 %v1383, %v1380
      %v1429 = vpack.c.b16 %v1387, %v1384
      %v1430 = vpack.c.b16 %v1388, %v1385
      %v1431 = vpack.c.b16 %v1389, %v1386
      %v1432 = vpack.c.b16 %v1393, %v1390
      %v1433 = vpack.c.b16 %v1394, %v1391
      %v1434 = vpack.c.b16 %v1395, %v1392
      %v1435 = vpack.c.b16 %v1399, %v1396
      %v1436 = vpack.c.b16 %v1400, %v1397
      %v1437 = vpack.c.b16 %v1401, %v1398
      %v1438 = vpack.c.b16 %v1405, %v1402
      %v1439 = vpack.c.b16 %v1406, %v1403
      %v1440 = vpack.c.b16 %v1407, %v1404
      %v1441 = vpack.c.b16 %v1411, %v1408
      %v1442 = vpack.c.b16 %v1412, %v1409
      %v1443 = vpack.c.b16 %v1413, %v1410
      %v1444 = vpack.c.b16 %v1417, %v1414
      %v1445 = vpack.c.b16 %v1418, %v1415
      %v1446 = vpack.c.b16 %v1419, %v1416
      %v1447 = vpack.c.b16 %v1423, %v1420
      %v1448 = vpack.c.b16 %v1424, %v1421
      %v1449 = vpack.c.b16 %v1425, %v1422
      %1474 = vmatprep.subr.bf16.mxu0 %v1448
      %1475 = vmatpush1.bf16.msra.mxu0 %v1447
      %1476 = vmatprep.subr.bf16.mxu0 %v1445
      %1477 = vmatpush1.bf16.msra.mxu0 %v1444
      %1478 = vmatprep.subr.bf16.mxu0 %v1442
      %1479 = vmatpush1.bf16.msra.mxu0 %v1441
      %1480 = vmatprep.subr.bf16.mxu0 %v1439
      %1481 = vmatpush1.bf16.msra.mxu0 %v1438
      %1482 = vmatprep.subr.bf16.mxu0 %v1436
      %1483 = vmatpush1.bf16.msra.mxu0 %v1435
      %1484 = vmatprep.subr.bf16.mxu0 %v1433
      %1485 = vmatpush1.bf16.msra.mxu0 %v1432
      %1486 = vmatprep.subr.bf16.mxu0 %v1430
      %1487 = vmatpush1.bf16.msra.mxu0 %v1429
      %1488 = vmatprep.subr.bf16.mxu0 %v1427
      %1489 = vmatpush1.bf16.msra.mxu0 %v1426
      %1490 = vmatprep.subr.bf16.mxu0 0
      %1491 = vmatpush2.bf16.msra.mxu0 0
      %1492 = vmatprep.subr.bf16.mxu0 0
      %1493 = vmatpush2.bf16.msra.mxu0 0
      %1494 = vmatprep.subr.bf16.mxu0 0
      %1495 = vmatpush2.bf16.msra.mxu0 0
      %1496 = vmatprep.subr.bf16.mxu0 0
      %1497 = vmatpush2.bf16.msra.mxu0 0
      %1498 = vmatprep.subr.bf16.mxu0 0
      %1499 = vmatpush2.bf16.msra.mxu0 0
      %1500 = vmatprep.subr.bf16.mxu0 0
      %1501 = vmatpush2.bf16.msra.mxu0 0
      %1502 = vmatprep.subr.bf16.mxu0 0
      %1503 = vmatpush2.bf16.msra.mxu0 0
      %1504 = vmatprep.subr.bf16.mxu0 0
      %1505 = vmatpush2.bf16.msra.mxu0 0
      %1506 = vmatprep.mubr.bf16.mxu0 0
      %1507 = vmatmul.mubr.bf16.gmra.mxu0 %v1310
      %v1508 = vpop.f32.mrf.mxu0
      %v1509 = vadd.f32 %v883, %v1508
      %v1510 = vpop.f32.mrf.mxu0
      %v1511 = vadd.f32 %v885, %v1510
      %v1512 = vpop.f32.mrf.mxu0
      %v1513 = vadd.f32 %v887, %v1512
      %v1514 = vpop.f32.mrf.mxu0
      %v1515 = vadd.f32 %v889, %v1514
      %1516 = vmatprep.mubr.bf16.mxu0 0
      %1517 = vmatmul.mubr.bf16.gmra.mxu0 %v1311
      %v1518 = vpop.f32.mrf.mxu0
      %v1519 = vadd.f32 %v893, %v1518
      %v1520 = vpop.f32.mrf.mxu0
      %v1521 = vadd.f32 %v895, %v1520
      %v1522 = vpop.f32.mrf.mxu0
      %v1523 = vadd.f32 %v897, %v1522
      %v1524 = vpop.f32.mrf.mxu0
      %v1525 = vadd.f32 %v899, %v1524
      %1526 = vmatprep.mubr.bf16.mxu0 0
      %1527 = vmatmul.mubr.bf16.gmra.mxu0 %v1312
      %v1528 = vpop.f32.mrf.mxu0
      %v1529 = vadd.f32 %v903, %v1528
      %v1530 = vpop.f32.mrf.mxu0
      %v1531 = vadd.f32 %v905, %v1530
      %v1532 = vpop.f32.mrf.mxu0
      %v1533 = vadd.f32 %v907, %v1532
      %v1534 = vpop.f32.mrf.mxu0
      %v1535 = vadd.f32 %v909, %v1534
      %1536 = vmatprep.mubr.bf16.mxu0 0
      %1537 = vmatmul.mubr.bf16.gmra.mxu0 %v1313
      %v1538 = vpop.f32.mrf.mxu0
      %v1539 = vadd.f32 %v913, %v1538
      %v1540 = vpop.f32.mrf.mxu0
      %v1541 = vadd.f32 %v915, %v1540
      %v1542 = vpop.f32.mrf.mxu0
      %v1543 = vadd.f32 %v917, %v1542
      %v1544 = vpop.f32.mrf.mxu0
      %v1545 = vadd.f32 %v919, %v1544
      %1546 = vmatprep.mubr.bf16.mxu0 0
      %1547 = vmatmul.mubr.bf16.gmra.mxu0 %v1314
      %v1548 = vpop.f32.mrf.mxu0
      %v1549 = vadd.f32 %v923, %v1548
      %v1550 = vpop.f32.mrf.mxu0
      %v1551 = vadd.f32 %v925, %v1550
      %v1552 = vpop.f32.mrf.mxu0
      %v1553 = vadd.f32 %v927, %v1552
      %v1554 = vpop.f32.mrf.mxu0
      %v1555 = vadd.f32 %v929, %v1554
      %1556 = vmatprep.mubr.bf16.mxu0 0
      %1557 = vmatmul.mubr.bf16.gmra.mxu0 %v1315
      %v1558 = vpop.f32.mrf.mxu0
      %v1559 = vadd.f32 %v933, %v1558
      %v1560 = vpop.f32.mrf.mxu0
      %v1561 = vadd.f32 %v935, %v1560
      %v1562 = vpop.f32.mrf.mxu0
      %v1563 = vadd.f32 %v937, %v1562
      %v1564 = vpop.f32.mrf.mxu0
      %v1565 = vadd.f32 %v939, %v1564
      %1566 = vmatprep.mubr.bf16.mxu0 0
      %1567 = vmatmul.mubr.bf16.gmra.mxu0 %v1316
      %v1568 = vpop.f32.mrf.mxu0
      %v1569 = vadd.f32 %v943, %v1568
      %v1570 = vpop.f32.mrf.mxu0
      %v1571 = vadd.f32 %v945, %v1570
      %v1572 = vpop.f32.mrf.mxu0
      %v1573 = vadd.f32 %v947, %v1572
      %v1574 = vpop.f32.mrf.mxu0
      %v1575 = vadd.f32 %v949, %v1574
      %1576 = vmatprep.mubr.bf16.mxu0 0
      %1577 = vmatmul.mubr.bf16.gmra.mxu0 %v1317
      %v1578 = vpop.f32.mrf.mxu0
      %v1579 = vadd.f32 %v953, %v1578
      %v1580 = vpop.f32.mrf.mxu0
      %v1581 = vadd.f32 %v955, %v1580
      %v1582 = vpop.f32.mrf.mxu0
      %v1583 = vadd.f32 %v957, %v1582
      %v1584 = vpop.f32.mrf.mxu0
      %v1585 = vadd.f32 %v959, %v1584
      %1586 = vmatprep.mubr.bf16.mxu0 0
      %1587 = vmatmul.mubr.bf16.gmra.mxu0 %v1318
      %v1588 = vpop.f32.mrf.mxu0
      %v1589 = vadd.f32 %v963, %v1588
      %v1590 = vpop.f32.mrf.mxu0
      %v1591 = vadd.f32 %v965, %v1590
      %v1592 = vpop.f32.mrf.mxu0
      %v1593 = vadd.f32 %v967, %v1592
      %v1594 = vpop.f32.mrf.mxu0
      %v1595 = vadd.f32 %v969, %v1594
      %1596 = vmatprep.mubr.bf16.mxu0 0
      %1597 = vmatmul.mubr.bf16.gmra.mxu0 %v1319
      %v1598 = vpop.f32.mrf.mxu0
      %v1599 = vadd.f32 %v973, %v1598
      %v1600 = vpop.f32.mrf.mxu0
      %v1601 = vadd.f32 %v975, %v1600
      %v1602 = vpop.f32.mrf.mxu0
      %v1603 = vadd.f32 %v977, %v1602
      %v1604 = vpop.f32.mrf.mxu0
      %v1605 = vadd.f32 %v979, %v1604
      %1606 = vmatprep.mubr.bf16.mxu0 0
      %1607 = vmatmul.mubr.bf16.gmra.mxu0 %v1320
      %v1608 = vpop.f32.mrf.mxu0
      %v1609 = vadd.f32 %v983, %v1608
      %v1610 = vpop.f32.mrf.mxu0
      %v1611 = vadd.f32 %v985, %v1610
      %v1612 = vpop.f32.mrf.mxu0
      %v1613 = vadd.f32 %v987, %v1612
      %v1614 = vpop.f32.mrf.mxu0
      %v1615 = vadd.f32 %v989, %v1614
      %1616 = vmatprep.mubr.bf16.mxu0 0
      %1617 = vmatmul.mubr.bf16.gmra.mxu0 %v1321
      %v1618 = vpop.f32.mrf.mxu0
      %v1619 = vadd.f32 %v993, %v1618
      %v1620 = vpop.f32.mrf.mxu0
      %v1621 = vadd.f32 %v995, %v1620
      %v1622 = vpop.f32.mrf.mxu0
      %v1623 = vadd.f32 %v997, %v1622
      %v1624 = vpop.f32.mrf.mxu0
      %v1625 = vadd.f32 %v999, %v1624
      %1626 = vmatprep.mubr.bf16.mxu0 0
      %1627 = vmatmul.mubr.bf16.gmra.mxu0 %v1322
      %v1628 = vpop.f32.mrf.mxu0
      %v1629 = vadd.f32 %v1003, %v1628
      %v1630 = vpop.f32.mrf.mxu0
      %v1631 = vadd.f32 %v1005, %v1630
      %v1632 = vpop.f32.mrf.mxu0
      %v1633 = vadd.f32 %v1007, %v1632
      %v1634 = vpop.f32.mrf.mxu0
      %v1635 = vadd.f32 %v1009, %v1634
      %1636 = vmatprep.mubr.bf16.mxu0 0
      %1637 = vmatmul.mubr.bf16.gmra.mxu0 %v1323
      %v1638 = vpop.f32.mrf.mxu0
      %v1639 = vadd.f32 %v1013, %v1638
      %v1640 = vpop.f32.mrf.mxu0
      %v1641 = vadd.f32 %v1015, %v1640
      %v1642 = vpop.f32.mrf.mxu0
      %v1643 = vadd.f32 %v1017, %v1642
      %v1644 = vpop.f32.mrf.mxu0
      %v1645 = vadd.f32 %v1019, %v1644
      %1646 = vmatprep.mubr.bf16.mxu0 0
      %1647 = vmatmul.mubr.bf16.gmra.mxu0 %v1324
      %v1648 = vpop.f32.mrf.mxu0
      %v1649 = vadd.f32 %v1023, %v1648
      %v1650 = vpop.f32.mrf.mxu0
      %v1651 = vadd.f32 %v1025, %v1650
      %v1652 = vpop.f32.mrf.mxu0
      %v1653 = vadd.f32 %v1027, %v1652
      %v1654 = vpop.f32.mrf.mxu0
      %v1655 = vadd.f32 %v1029, %v1654
      %1656 = vmatprep.mubr.bf16.mxu0 0
      %1657 = vmatmul.mubr.bf16.gmra.mxu0 %v1325
      %v1658 = vpop.f32.mrf.mxu0
      %v1659 = vadd.f32 %v1033, %v1658
      %v1660 = vpop.f32.mrf.mxu0
      %v1661 = vadd.f32 %v1035, %v1660
      %v1662 = vpop.f32.mrf.mxu0
      %v1663 = vadd.f32 %v1037, %v1662
      %v1664 = vpop.f32.mrf.mxu0
      %v1665 = vadd.f32 %v1039, %v1664
      %1666 = vmatprep.mubr.bf16.mxu0 0
      %1667 = vmatmul.mubr.bf16.gmra.mxu0 %v1326
      %v1668 = vpop.f32.mrf.mxu0
      %v1669 = vadd.f32 %v1043, %v1668
      %v1670 = vpop.f32.mrf.mxu0
      %v1671 = vadd.f32 %v1045, %v1670
      %v1672 = vpop.f32.mrf.mxu0
      %v1673 = vadd.f32 %v1047, %v1672
      %v1674 = vpop.f32.mrf.mxu0
      %v1675 = vadd.f32 %v1049, %v1674
      %1676 = vmatprep.mubr.bf16.mxu0 0
      %1677 = vmatmul.mubr.bf16.gmra.mxu0 %v1327
      %v1678 = vpop.f32.mrf.mxu0
      %v1679 = vadd.f32 %v1053, %v1678
      %v1680 = vpop.f32.mrf.mxu0
      %v1681 = vadd.f32 %v1055, %v1680
      %v1682 = vpop.f32.mrf.mxu0
      %v1683 = vadd.f32 %v1057, %v1682
      %v1684 = vpop.f32.mrf.mxu0
      %v1685 = vadd.f32 %v1059, %v1684
      %1686 = vdwg.mxu0
      %1687 = vmatprep.subr.bf16.mxu0 0
      %1688 = vmatpush1.bf16.msra.mxu0 %v1449
      %1689 = vmatprep.subr.bf16.mxu0 0
      %1690 = vmatpush1.bf16.msra.mxu0 %v1446
      %1691 = vmatprep.subr.bf16.mxu0 0
      %1692 = vmatpush1.bf16.msra.mxu0 %v1443
      %1693 = vmatprep.subr.bf16.mxu0 0
      %1694 = vmatpush1.bf16.msra.mxu0 %v1440
      %1695 = vmatprep.subr.bf16.mxu0 0
      %1696 = vmatpush1.bf16.msra.mxu0 %v1437
      %1697 = vmatprep.subr.bf16.mxu0 0
      %1698 = vmatpush1.bf16.msra.mxu0 %v1434
      %1699 = vmatprep.subr.bf16.mxu0 0
      %1700 = vmatpush1.bf16.msra.mxu0 %v1431
      %1701 = vmatprep.subr.bf16.mxu0 0
      %1702 = vmatpush1.bf16.msra.mxu0 %v1428
      %1703 = vmatprep.subr.bf16.mxu0 0
      %1704 = vmatpush2.bf16.msra.mxu0 0
      %1705 = vmatprep.subr.bf16.mxu0 0
      %1706 = vmatpush2.bf16.msra.mxu0 0
      %1707 = vmatprep.subr.bf16.mxu0 0
      %1708 = vmatpush2.bf16.msra.mxu0 0
      %1709 = vmatprep.subr.bf16.mxu0 0
      %1710 = vmatpush2.bf16.msra.mxu0 0
      %1711 = vmatprep.subr.bf16.mxu0 0
      %1712 = vmatpush2.bf16.msra.mxu0 0
      %1713 = vmatprep.subr.bf16.mxu0 0
      %1714 = vmatpush2.bf16.msra.mxu0 0
      %1715 = vmatprep.subr.bf16.mxu0 0
      %1716 = vmatpush2.bf16.msra.mxu0 0
      %1717 = vmatprep.subr.bf16.mxu0 0
      %1718 = vmatpush2.bf16.msra.mxu0 0
      %1719 = vmatprep.mubr.bf16.mxu0 0
      %1720 = vmatmul.mubr.bf16.gmra.mxu0 %v1310
      %v1721 = vpop.f32.mrf.mxu0
      %v1722 = vadd.f32 %v1096, %v1721
      %v1723 = vpop.f32.mrf.mxu0
      %v1724 = vpop.f32.mrf.mxu0
      %v1725 = vadd.f32 %v1099, %v1724
      %v1726 = vpop.f32.mrf.mxu0
      %1727 = vmatprep.mubr.bf16.mxu0 0
      %1728 = vmatmul.mubr.bf16.gmra.mxu0 %v1311
      %v1729 = vpop.f32.mrf.mxu0
      %v1730 = vadd.f32 %v1104, %v1729
      %v1731 = vpop.f32.mrf.mxu0
      %v1732 = vpop.f32.mrf.mxu0
      %v1733 = vadd.f32 %v1107, %v1732
      %v1734 = vpop.f32.mrf.mxu0
      %1735 = vmatprep.mubr.bf16.mxu0 0
      %1736 = vmatmul.mubr.bf16.gmra.mxu0 %v1312
      %v1737 = vpop.f32.mrf.mxu0
      %v1738 = vadd.f32 %v1112, %v1737
      %v1739 = vpop.f32.mrf.mxu0
      %v1740 = vpop.f32.mrf.mxu0
      %v1741 = vadd.f32 %v1115, %v1740
      %v1742 = vpop.f32.mrf.mxu0
      %1743 = vmatprep.mubr.bf16.mxu0 0
      %1744 = vmatmul.mubr.bf16.gmra.mxu0 %v1313
      %v1745 = vpop.f32.mrf.mxu0
      %v1746 = vadd.f32 %v1120, %v1745
      %v1747 = vpop.f32.mrf.mxu0
      %v1748 = vpop.f32.mrf.mxu0
      %v1749 = vadd.f32 %v1123, %v1748
      %v1750 = vpop.f32.mrf.mxu0
      %1751 = vmatprep.mubr.bf16.mxu0 0
      %1752 = vmatmul.mubr.bf16.gmra.mxu0 %v1314
      %v1753 = vpop.f32.mrf.mxu0
      %v1754 = vadd.f32 %v1128, %v1753
      %v1755 = vpop.f32.mrf.mxu0
      %v1756 = vpop.f32.mrf.mxu0
      %v1757 = vadd.f32 %v1131, %v1756
      %v1758 = vpop.f32.mrf.mxu0
      %1759 = vmatprep.mubr.bf16.mxu0 0
      %1760 = vmatmul.mubr.bf16.gmra.mxu0 %v1315
      %v1761 = vpop.f32.mrf.mxu0
      %v1762 = vadd.f32 %v1136, %v1761
      %v1763 = vpop.f32.mrf.mxu0
      %v1764 = vpop.f32.mrf.mxu0
      %v1765 = vadd.f32 %v1139, %v1764
      %v1766 = vpop.f32.mrf.mxu0
      %1767 = vmatprep.mubr.bf16.mxu0 0
      %1768 = vmatmul.mubr.bf16.gmra.mxu0 %v1316
      %v1769 = vpop.f32.mrf.mxu0
      %v1770 = vadd.f32 %v1144, %v1769
      %v1771 = vpop.f32.mrf.mxu0
      %v1772 = vpop.f32.mrf.mxu0
      %v1773 = vadd.f32 %v1147, %v1772
      %v1774 = vpop.f32.mrf.mxu0
      %1775 = vmatprep.mubr.bf16.mxu0 0
      %1776 = vmatmul.mubr.bf16.gmra.mxu0 %v1317
      %v1777 = vpop.f32.mrf.mxu0
      %v1778 = vadd.f32 %v1152, %v1777
      %v1779 = vpop.f32.mrf.mxu0
      %v1780 = vpop.f32.mrf.mxu0
      %v1781 = vadd.f32 %v1155, %v1780
      %v1782 = vpop.f32.mrf.mxu0
      %1783 = vmatprep.mubr.bf16.mxu0 0
      %1784 = vmatmul.mubr.bf16.gmra.mxu0 %v1318
      %v1785 = vpop.f32.mrf.mxu0
      %v1786 = vadd.f32 %v1160, %v1785
      %v1787 = vpop.f32.mrf.mxu0
      %v1788 = vpop.f32.mrf.mxu0
      %v1789 = vadd.f32 %v1163, %v1788
      %v1790 = vpop.f32.mrf.mxu0
      %1791 = vmatprep.mubr.bf16.mxu0 0
      %1792 = vmatmul.mubr.bf16.gmra.mxu0 %v1319
      %v1793 = vpop.f32.mrf.mxu0
      %v1794 = vadd.f32 %v1168, %v1793
      %v1795 = vpop.f32.mrf.mxu0
      %v1796 = vpop.f32.mrf.mxu0
      %v1797 = vadd.f32 %v1171, %v1796
      %v1798 = vpop.f32.mrf.mxu0
      %1799 = vmatprep.mubr.bf16.mxu0 0
      %1800 = vmatmul.mubr.bf16.gmra.mxu0 %v1320
      %v1801 = vpop.f32.mrf.mxu0
      %v1802 = vadd.f32 %v1176, %v1801
      %v1803 = vpop.f32.mrf.mxu0
      %v1804 = vpop.f32.mrf.mxu0
      %v1805 = vadd.f32 %v1179, %v1804
      %v1806 = vpop.f32.mrf.mxu0
      %1807 = vmatprep.mubr.bf16.mxu0 0
      %1808 = vmatmul.mubr.bf16.gmra.mxu0 %v1321
      %v1809 = vpop.f32.mrf.mxu0
      %v1810 = vadd.f32 %v1184, %v1809
      %v1811 = vpop.f32.mrf.mxu0
      %v1812 = vpop.f32.mrf.mxu0
      %v1813 = vadd.f32 %v1187, %v1812
      %v1814 = vpop.f32.mrf.mxu0
      %1815 = vmatprep.mubr.bf16.mxu0 0
      %1816 = vmatmul.mubr.bf16.gmra.mxu0 %v1322
      %v1817 = vpop.f32.mrf.mxu0
      %v1818 = vadd.f32 %v1192, %v1817
      %v1819 = vpop.f32.mrf.mxu0
      %v1820 = vpop.f32.mrf.mxu0
      %v1821 = vadd.f32 %v1195, %v1820
      %v1822 = vpop.f32.mrf.mxu0
      %1823 = vmatprep.mubr.bf16.mxu0 0
      %1824 = vmatmul.mubr.bf16.gmra.mxu0 %v1323
      %v1825 = vpop.f32.mrf.mxu0
      %v1826 = vadd.f32 %v1200, %v1825
      %v1827 = vpop.f32.mrf.mxu0
      %v1828 = vpop.f32.mrf.mxu0
      %v1829 = vadd.f32 %v1203, %v1828
      %v1830 = vpop.f32.mrf.mxu0
      %1831 = vmatprep.mubr.bf16.mxu0 0
      %1832 = vmatmul.mubr.bf16.gmra.mxu0 %v1324
      %v1833 = vpop.f32.mrf.mxu0
      %v1834 = vadd.f32 %v1208, %v1833
      %v1835 = vpop.f32.mrf.mxu0
      %v1836 = vpop.f32.mrf.mxu0
      %v1837 = vadd.f32 %v1211, %v1836
      %v1838 = vpop.f32.mrf.mxu0
      %1839 = vmatprep.mubr.bf16.mxu0 0
      %1840 = vmatmul.mubr.bf16.gmra.mxu0 %v1325
      %v1841 = vpop.f32.mrf.mxu0
      %v1842 = vadd.f32 %v1216, %v1841
      %v1843 = vpop.f32.mrf.mxu0
      %v1844 = vpop.f32.mrf.mxu0
      %v1845 = vadd.f32 %v1219, %v1844
      %v1846 = vpop.f32.mrf.mxu0
      %1847 = vmatprep.mubr.bf16.mxu0 0
      %1848 = vmatmul.mubr.bf16.gmra.mxu0 %v1326
      %v1849 = vpop.f32.mrf.mxu0
      %v1850 = vadd.f32 %v1224, %v1849
      %v1851 = vpop.f32.mrf.mxu0
      %v1852 = vpop.f32.mrf.mxu0
      %v1853 = vadd.f32 %v1227, %v1852
      %v1854 = vpop.f32.mrf.mxu0
      %1855 = vmatprep.mubr.bf16.mxu0 0
      %1856 = vmatmul.mubr.bf16.gmra.mxu0 %v1327
      %v1857 = vpop.f32.mrf.mxu0
      %v1858 = vadd.f32 %v1232, %v1857
      %v1859 = vpop.f32.mrf.mxu0
      %v1860 = vpop.f32.mrf.mxu0
      %v1861 = vadd.f32 %v1235, %v1860
      %v1862 = vpop.f32.mrf.mxu0
      %1863 = vdwg.mxu0
      %s1864 = sadd.s32 4, %s469
      %s1865 = smul.addr %s1864, 4
      %s1866 = scalar_lea.vmem [#allocation2], %s1865
      %v1867 = vld [vmem:[%s1866] sm:$0xf]
      %v1868 = vld [vmem:[%s1866 + $0x4] sm:$0xf]
      %v1869 = vld [vmem:[%s1866 + $0x8] sm:$0xf]
      %v1870 = vld [vmem:[%s1866 + $0xc] sm:$0xf]
      %v1871 = vld [vmem:[%s1866 + $0x10] sm:$0xf]
      %v1872 = vld [vmem:[%s1866 + $0x14] sm:$0xf]
      %v1873 = vld [vmem:[%s1866 + $0x18] sm:$0xf]
      %v1874 = vld [vmem:[%s1866 + $0x1c] sm:$0xf]
      %v1875 = vld [vmem:[%s1866 + $0x20] sm:$0xf]
      %v1876 = vld [vmem:[%s1866 + $0x24] sm:$0xf]
      %v1877 = vld [vmem:[%s1866 + $0x28] sm:$0xf]
      %v1878 = vld [vmem:[%s1866 + $0x2c] sm:$0xf]
      %v1879 = vld [vmem:[%s1866 + $0x30] sm:$0xf]
      %v1880 = vld [vmem:[%s1866 + $0x34] sm:$0xf]
      %v1881 = vld [vmem:[%s1866 + $0x38] sm:$0xf]
      %v1882 = vld [vmem:[%s1866 + $0x3c] sm:$0xf]
      %v1883 = vld [vmem:[%s1866 + $0x40] sm:$0xf]
      %v1884 = vld [vmem:[%s1866 + $0x44] sm:$0xf]
      %v1885 = vld [vmem:[%s1866 + $0x48] sm:$0xf]
      %v1886 = vld [vmem:[%s1866 + $0x4c] sm:$0xf]
      %v1887 = vld [vmem:[%s1866 + $0x50] sm:$0xf]
      %v1888 = vld [vmem:[%s1866 + $0x54] sm:$0xf]
      %v1889 = vld [vmem:[%s1866 + $0x58] sm:$0xf]
      %v1890 = vld [vmem:[%s1866 + $0x5c] sm:$0xf]
      %v1891 = vld [vmem:[%s1866 + $0x60] sm:$0xf]
      %v1892 = vld [vmem:[%s1866 + $0x64] sm:$0xf]
      %v1893 = vld [vmem:[%s1866 + $0x68] sm:$0xf]
      %v1894 = vld [vmem:[%s1866 + $0x6c] sm:$0xf]
      %v1895 = vld [vmem:[%s1866 + $0x70] sm:$0xf]
      %v1896 = vld [vmem:[%s1866 + $0x74] sm:$0xf]
      %v1897 = vld [vmem:[%s1866 + $0x78] sm:$0xf]
      %v1898 = vld [vmem:[%s1866 + $0x7c] sm:$0xf]
      %v1899 = vld [vmem:[%s1866 + $0x80] sm:$0xf]
      %v1900 = vld [vmem:[%s1866 + $0x84] sm:$0xf]
      %v1901 = vld [vmem:[%s1866 + $0x88] sm:$0xf]
      %v1902 = vld [vmem:[%s1866 + $0x8c] sm:$0xf]
      %s1903 = scalar_lea.vmem %s1, 384
      %v1904 = vld [vmem:[%s1903] sm:$0xff]
      %v1905 = vld [vmem:[%s1903 + $0x8] sm:$0xf]
      %v1906 = vld [vmem:[%s1903 + $0xc] sm:$0xff]
      %v1907 = vld [vmem:[%s1903 + $0x14] sm:$0xf]
      %v1908 = vld [vmem:[%s1903 + $0x18] sm:$0xff]
      %v1909 = vld [vmem:[%s1903 + $0x20] sm:$0xf]
      %v1910 = vld [vmem:[%s1903 + $0x24] sm:$0xff]
      %v1911 = vld [vmem:[%s1903 + $0x2c] sm:$0xf]
      %v1912 = vld [vmem:[%s1903 + $0x30] sm:$0xff]
      %v1913 = vld [vmem:[%s1903 + $0x38] sm:$0xf]
      %v1914 = vld [vmem:[%s1903 + $0x3c] sm:$0xff]
      %v1915 = vld [vmem:[%s1903 + $0x44] sm:$0xf]
      %v1916 = vld [vmem:[%s1903 + $0x48] sm:$0xff]
      %v1917 = vld [vmem:[%s1903 + $0x50] sm:$0xf]
      %v1918 = vld [vmem:[%s1903 + $0x54] sm:$0xff]
      %v1919 = vld [vmem:[%s1903 + $0x5c] sm:$0xf]
      %v1920 = vld [vmem:[%s1903 + $0x60] sm:$0xff]
      %v1921 = vld [vmem:[%s1903 + $0x68] sm:$0xf]
      %v1922 = vld [vmem:[%s1903 + $0x6c] sm:$0xff]
      %v1923 = vld [vmem:[%s1903 + $0x74] sm:$0xf]
      %v1924 = vld [vmem:[%s1903 + $0x78] sm:$0xff]
      %v1925 = vld [vmem:[%s1903 + $0x80] sm:$0xf]
      %v1926 = vld [vmem:[%s1903 + $0x84] sm:$0xff]
      %v1927 = vld [vmem:[%s1903 + $0x8c] sm:$0xf]
      %v1928 = vld [vmem:[%s1903 + $0x90] sm:$0xff]
      %v1929 = vld [vmem:[%s1903 + $0x98] sm:$0xf]
      %v1930 = vld [vmem:[%s1903 + $0x9c] sm:$0xff]
      %v1931 = vld [vmem:[%s1903 + $0xa4] sm:$0xf]
      %v1932 = vld [vmem:[%s1903 + $0xa8] sm:$0xff]
      %v1933 = vld [vmem:[%s1903 + $0xb0] sm:$0xf]
      %v1934 = vld [vmem:[%s1903 + $0xb4] sm:$0xff]
      %v1935 = vld [vmem:[%s1903 + $0xbc] sm:$0xf]
      %v1972 = vunpack.c.l.b16 %v1867
      %v1973 = vunpack.c.l.b16 %v1868
      %v1974 = vunpack.c.l.b16 %v1869
      %v1975 = vunpack.c.l.b16 %v1870
      %v1976 = vunpack.c.l.b16 %v1871
      %v1977 = vunpack.c.l.b16 %v1872
      %v1978 = vunpack.c.l.b16 %v1873
      %v1979 = vunpack.c.l.b16 %v1874
      %v1980 = vunpack.c.l.b16 %v1875
      %v1981 = vunpack.c.l.b16 %v1876
      %v1982 = vunpack.c.l.b16 %v1877
      %v1983 = vunpack.c.l.b16 %v1878
      %v1984 = vunpack.c.l.b16 %v1879
      %v1985 = vunpack.c.l.b16 %v1880
      %v1986 = vunpack.c.l.b16 %v1881
      %v1987 = vunpack.c.l.b16 %v1882
      %v1988 = vunpack.c.l.b16 %v1883
      %v1989 = vunpack.c.l.b16 %v1884
      %v1990 = vunpack.c.l.b16 %v1885
      %v1991 = vunpack.c.l.b16 %v1886
      %v1992 = vunpack.c.l.b16 %v1887
      %v1993 = vunpack.c.l.b16 %v1888
      %v1994 = vunpack.c.l.b16 %v1889
      %v1995 = vunpack.c.l.b16 %v1890
      %v1996 = vunpack.c.l.b16 %v1891
      %v1997 = vunpack.c.l.b16 %v1892
      %v1998 = vunpack.c.l.b16 %v1893
      %v1999 = vunpack.c.l.b16 %v1894
      %v2000 = vunpack.c.l.b16 %v1895
      %v2001 = vunpack.c.l.b16 %v1896
      %v2002 = vunpack.c.l.b16 %v1897
      %v2003 = vunpack.c.l.b16 %v1898
      %v2004 = vunpack.c.l.b16 %v1899
      %v2005 = vunpack.c.l.b16 %v1900
      %v2006 = vunpack.c.l.b16 %v1901
      %v2007 = vunpack.c.l.b16 %v1902
      %v2008 = vpack.c.b16 %v1973, %v1972
      %v2009 = vpack.c.b16 %v1975, %v1974
      %v2010 = vpack.c.b16 %v1977, %v1976
      %v2011 = vpack.c.b16 %v1979, %v1978
      %v2012 = vpack.c.b16 %v1981, %v1980
      %v2013 = vpack.c.b16 %v1983, %v1982
      %v2014 = vpack.c.b16 %v1985, %v1984
      %v2015 = vpack.c.b16 %v1987, %v1986
      %v2016 = vpack.c.b16 %v1989, %v1988
      %v2017 = vpack.c.b16 %v1991, %v1990
      %v2018 = vpack.c.b16 %v1993, %v1992
      %v2019 = vpack.c.b16 %v1995, %v1994
      %v2020 = vpack.c.b16 %v1997, %v1996
      %v2021 = vpack.c.b16 %v1999, %v1998
      %v2022 = vpack.c.b16 %v2001, %v2000
      %v2023 = vpack.c.b16 %v2003, %v2002
      %v2024 = vpack.c.b16 %v2005, %v2004
      %v2025 = vpack.c.b16 %v2007, %v2006
      %v2076 = vunpack.c.l.b16 %v1904
      %v2077 = vunpack.c.h.b16 %v1904
      %v2078 = vunpack.c.l.b16 %v1905
      %v2079 = vunpack.c.l.b16 %v1906
      %v2080 = vunpack.c.h.b16 %v1906
      %v2081 = vunpack.c.l.b16 %v1907
      %v2082 = vunpack.c.l.b16 %v1908
      %v2083 = vunpack.c.h.b16 %v1908
      %v2084 = vunpack.c.l.b16 %v1909
      %v2085 = vunpack.c.l.b16 %v1910
      %v2086 = vunpack.c.h.b16 %v1910
      %v2087 = vunpack.c.l.b16 %v1911
      %v2088 = vunpack.c.l.b16 %v1912
      %v2089 = vunpack.c.h.b16 %v1912
      %v2090 = vunpack.c.l.b16 %v1913
      %v2091 = vunpack.c.l.b16 %v1914
      %v2092 = vunpack.c.h.b16 %v1914
      %v2093 = vunpack.c.l.b16 %v1915
      %v2094 = vunpack.c.l.b16 %v1916
      %v2095 = vunpack.c.h.b16 %v1916
      %v2096 = vunpack.c.l.b16 %v1917
      %v2097 = vunpack.c.l.b16 %v1918
      %v2098 = vunpack.c.h.b16 %v1918
      %v2099 = vunpack.c.l.b16 %v1919
      %v2100 = vunpack.c.l.b16 %v1920
      %v2101 = vunpack.c.h.b16 %v1920
      %v2102 = vunpack.c.l.b16 %v1921
      %v2103 = vunpack.c.l.b16 %v1922
      %v2104 = vunpack.c.h.b16 %v1922
      %v2105 = vunpack.c.l.b16 %v1923
      %v2106 = vunpack.c.l.b16 %v1924
      %v2107 = vunpack.c.h.b16 %v1924
      %v2108 = vunpack.c.l.b16 %v1925
      %v2109 = vunpack.c.l.b16 %v1926
      %v2110 = vunpack.c.h.b16 %v1926
      %v2111 = vunpack.c.l.b16 %v1927
      %v2112 = vunpack.c.l.b16 %v1928
      %v2113 = vunpack.c.h.b16 %v1928
      %v2114 = vunpack.c.l.b16 %v1929
      %v2115 = vunpack.c.l.b16 %v1930
      %v2116 = vunpack.c.h.b16 %v1930
      %v2117 = vunpack.c.l.b16 %v1931
      %v2118 = vunpack.c.l.b16 %v1932
      %v2119 = vunpack.c.h.b16 %v1932
      %v2120 = vunpack.c.l.b16 %v1933
      %v2121 = vunpack.c.l.b16 %v1934
      %v2122 = vunpack.c.h.b16 %v1934
      %v2123 = vunpack.c.l.b16 %v1935
      %v2124 = vpack.c.b16 %v2079, %v2076
      %v2125 = vpack.c.b16 %v2080, %v2077
      %v2126 = vpack.c.b16 %v2081, %v2078
      %v2127 = vpack.c.b16 %v2085, %v2082
      %v2128 = vpack.c.b16 %v2086, %v2083
      %v2129 = vpack.c.b16 %v2087, %v2084
      %v2130 = vpack.c.b16 %v2091, %v2088
      %v2131 = vpack.c.b16 %v2092, %v2089
      %v2132 = vpack.c.b16 %v2093, %v2090
      %v2133 = vpack.c.b16 %v2097, %v2094
      %v2134 = vpack.c.b16 %v2098, %v2095
      %v2135 = vpack.c.b16 %v2099, %v2096
      %v2136 = vpack.c.b16 %v2103, %v2100
      %v2137 = vpack.c.b16 %v2104, %v2101
      %v2138 = vpack.c.b16 %v2105, %v2102
      %v2139 = vpack.c.b16 %v2109, %v2106
      %v2140 = vpack.c.b16 %v2110, %v2107
      %v2141 = vpack.c.b16 %v2111, %v2108
      %v2142 = vpack.c.b16 %v2115, %v2112
      %v2143 = vpack.c.b16 %v2116, %v2113
      %v2144 = vpack.c.b16 %v2117, %v2114
      %v2145 = vpack.c.b16 %v2121, %v2118
      %v2146 = vpack.c.b16 %v2122, %v2119
      %v2147 = vpack.c.b16 %v2123, %v2120
      %2172 = vmatprep.subr.bf16.mxu0 %v2146
      %2173 = vmatpush1.bf16.msra.mxu0 %v2145
      %2174 = vmatprep.subr.bf16.mxu0 %v2143
      %2175 = vmatpush1.bf16.msra.mxu0 %v2142
      %2176 = vmatprep.subr.bf16.mxu0 %v2140
      %2177 = vmatpush1.bf16.msra.mxu0 %v2139
      %2178 = vmatprep.subr.bf16.mxu0 %v2137
      %2179 = vmatpush1.bf16.msra.mxu0 %v2136
      %2180 = vmatprep.subr.bf16.mxu0 %v2134
      %2181 = vmatpush1.bf16.msra.mxu0 %v2133
      %2182 = vmatprep.subr.bf16.mxu0 %v2131
      %2183 = vmatpush1.bf16.msra.mxu0 %v2130
      %2184 = vmatprep.subr.bf16.mxu0 %v2128
      %2185 = vmatpush1.bf16.msra.mxu0 %v2127
      %2186 = vmatprep.subr.bf16.mxu0 %v2125
      %2187 = vmatpush1.bf16.msra.mxu0 %v2124
      %2188 = vmatprep.subr.bf16.mxu0 0
      %2189 = vmatpush2.bf16.msra.mxu0 0
      %2190 = vmatprep.subr.bf16.mxu0 0
      %2191 = vmatpush2.bf16.msra.mxu0 0
      %2192 = vmatprep.subr.bf16.mxu0 0
      %2193 = vmatpush2.bf16.msra.mxu0 0
      %2194 = vmatprep.subr.bf16.mxu0 0
      %2195 = vmatpush2.bf16.msra.mxu0 0
      %2196 = vmatprep.subr.bf16.mxu0 0
      %2197 = vmatpush2.bf16.msra.mxu0 0
      %2198 = vmatprep.subr.bf16.mxu0 0
      %2199 = vmatpush2.bf16.msra.mxu0 0
      %2200 = vmatprep.subr.bf16.mxu0 0
      %2201 = vmatpush2.bf16.msra.mxu0 0
      %2202 = vmatprep.subr.bf16.mxu0 0
      %2203 = vmatpush2.bf16.msra.mxu0 0
      %2204 = vmatprep.mubr.bf16.mxu0 0
      %2205 = vmatmul.mubr.bf16.gmra.mxu0 %v2008
      %v2206 = vpop.f32.mrf.mxu0
      %v2207 = vadd.f32 0.0, %v2206
      %v2208 = vpop.f32.mrf.mxu0
      %v2209 = vadd.f32 0.0, %v2208
      %v2210 = vpop.f32.mrf.mxu0
      %v2211 = vadd.f32 0.0, %v2210
      %v2212 = vpop.f32.mrf.mxu0
      %v2213 = vadd.f32 0.0, %v2212
      %2214 = vmatprep.mubr.bf16.mxu0 0
      %2215 = vmatmul.mubr.bf16.gmra.mxu0 %v2009
      %v2216 = vpop.f32.mrf.mxu0
      %v2217 = vadd.f32 0.0, %v2216
      %v2218 = vpop.f32.mrf.mxu0
      %v2219 = vadd.f32 0.0, %v2218
      %v2220 = vpop.f32.mrf.mxu0
      %v2221 = vadd.f32 0.0, %v2220
      %v2222 = vpop.f32.mrf.mxu0
      %v2223 = vadd.f32 0.0, %v2222
      %2224 = vmatprep.mubr.bf16.mxu0 0
      %2225 = vmatmul.mubr.bf16.gmra.mxu0 %v2010
      %v2226 = vpop.f32.mrf.mxu0
      %v2227 = vadd.f32 0.0, %v2226
      %v2228 = vpop.f32.mrf.mxu0
      %v2229 = vadd.f32 0.0, %v2228
      %v2230 = vpop.f32.mrf.mxu0
      %v2231 = vadd.f32 0.0, %v2230
      %v2232 = vpop.f32.mrf.mxu0
      %v2233 = vadd.f32 0.0, %v2232
      %2234 = vmatprep.mubr.bf16.mxu0 0
      %2235 = vmatmul.mubr.bf16.gmra.mxu0 %v2011
      %v2236 = vpop.f32.mrf.mxu0
      %v2237 = vadd.f32 0.0, %v2236
      %v2238 = vpop.f32.mrf.mxu0
      %v2239 = vadd.f32 0.0, %v2238
      %v2240 = vpop.f32.mrf.mxu0
      %v2241 = vadd.f32 0.0, %v2240
      %v2242 = vpop.f32.mrf.mxu0
      %v2243 = vadd.f32 0.0, %v2242
      %2244 = vmatprep.mubr.bf16.mxu0 0
      %2245 = vmatmul.mubr.bf16.gmra.mxu0 %v2012
      %v2246 = vpop.f32.mrf.mxu0
      %v2247 = vadd.f32 0.0, %v2246
      %v2248 = vpop.f32.mrf.mxu0
      %v2249 = vadd.f32 0.0, %v2248
      %v2250 = vpop.f32.mrf.mxu0
      %v2251 = vadd.f32 0.0, %v2250
      %v2252 = vpop.f32.mrf.mxu0
      %v2253 = vadd.f32 0.0, %v2252
      %2254 = vmatprep.mubr.bf16.mxu0 0
      %2255 = vmatmul.mubr.bf16.gmra.mxu0 %v2013
      %v2256 = vpop.f32.mrf.mxu0
      %v2257 = vadd.f32 0.0, %v2256
      %v2258 = vpop.f32.mrf.mxu0
      %v2259 = vadd.f32 0.0, %v2258
      %v2260 = vpop.f32.mrf.mxu0
      %v2261 = vadd.f32 0.0, %v2260
      %v2262 = vpop.f32.mrf.mxu0
      %v2263 = vadd.f32 0.0, %v2262
      %2264 = vmatprep.mubr.bf16.mxu0 0
      %2265 = vmatmul.mubr.bf16.gmra.mxu0 %v2014
      %v2266 = vpop.f32.mrf.mxu0
      %v2267 = vadd.f32 0.0, %v2266
      %v2268 = vpop.f32.mrf.mxu0
      %v2269 = vadd.f32 0.0, %v2268
      %v2270 = vpop.f32.mrf.mxu0
      %v2271 = vadd.f32 0.0, %v2270
      %v2272 = vpop.f32.mrf.mxu0
      %v2273 = vadd.f32 0.0, %v2272
      %2274 = vmatprep.mubr.bf16.mxu0 0
      %2275 = vmatmul.mubr.bf16.gmra.mxu0 %v2015
      %v2276 = vpop.f32.mrf.mxu0
      %v2277 = vadd.f32 0.0, %v2276
      %v2278 = vpop.f32.mrf.mxu0
      %v2279 = vadd.f32 0.0, %v2278
      %v2280 = vpop.f32.mrf.mxu0
      %v2281 = vadd.f32 0.0, %v2280
      %v2282 = vpop.f32.mrf.mxu0
      %v2283 = vadd.f32 0.0, %v2282
      %2284 = vmatprep.mubr.bf16.mxu0 0
      %2285 = vmatmul.mubr.bf16.gmra.mxu0 %v2016
      %v2286 = vpop.f32.mrf.mxu0
      %v2287 = vadd.f32 0.0, %v2286
      %v2288 = vpop.f32.mrf.mxu0
      %v2289 = vadd.f32 0.0, %v2288
      %v2290 = vpop.f32.mrf.mxu0
      %v2291 = vadd.f32 0.0, %v2290
      %v2292 = vpop.f32.mrf.mxu0
      %v2293 = vadd.f32 0.0, %v2292
      %2294 = vmatprep.mubr.bf16.mxu0 0
      %2295 = vmatmul.mubr.bf16.gmra.mxu0 %v2017
      %v2296 = vpop.f32.mrf.mxu0
      %v2297 = vadd.f32 0.0, %v2296
      %v2298 = vpop.f32.mrf.mxu0
      %v2299 = vadd.f32 0.0, %v2298
      %v2300 = vpop.f32.mrf.mxu0
      %v2301 = vadd.f32 0.0, %v2300
      %v2302 = vpop.f32.mrf.mxu0
      %v2303 = vadd.f32 0.0, %v2302
      %2304 = vmatprep.mubr.bf16.mxu0 0
      %2305 = vmatmul.mubr.bf16.gmra.mxu0 %v2018
      %v2306 = vpop.f32.mrf.mxu0
      %v2307 = vadd.f32 0.0, %v2306
      %v2308 = vpop.f32.mrf.mxu0
      %v2309 = vadd.f32 0.0, %v2308
      %v2310 = vpop.f32.mrf.mxu0
      %v2311 = vadd.f32 0.0, %v2310
      %v2312 = vpop.f32.mrf.mxu0
      %v2313 = vadd.f32 0.0, %v2312
      %2314 = vmatprep.mubr.bf16.mxu0 0
      %2315 = vmatmul.mubr.bf16.gmra.mxu0 %v2019
      %v2316 = vpop.f32.mrf.mxu0
      %v2317 = vadd.f32 0.0, %v2316
      %v2318 = vpop.f32.mrf.mxu0
      %v2319 = vadd.f32 0.0, %v2318
      %v2320 = vpop.f32.mrf.mxu0
      %v2321 = vadd.f32 0.0, %v2320
      %v2322 = vpop.f32.mrf.mxu0
      %v2323 = vadd.f32 0.0, %v2322
      %2324 = vmatprep.mubr.bf16.mxu0 0
      %2325 = vmatmul.mubr.bf16.gmra.mxu0 %v2020
      %v2326 = vpop.f32.mrf.mxu0
      %v2327 = vadd.f32 0.0, %v2326
      %v2328 = vpop.f32.mrf.mxu0
      %v2329 = vadd.f32 0.0, %v2328
      %v2330 = vpop.f32.mrf.mxu0
      %v2331 = vadd.f32 0.0, %v2330
      %v2332 = vpop.f32.mrf.mxu0
      %v2333 = vadd.f32 0.0, %v2332
      %2334 = vmatprep.mubr.bf16.mxu0 0
      %2335 = vmatmul.mubr.bf16.gmra.mxu0 %v2021
      %v2336 = vpop.f32.mrf.mxu0
      %v2337 = vadd.f32 0.0, %v2336
      %v2338 = vpop.f32.mrf.mxu0
      %v2339 = vadd.f32 0.0, %v2338
      %v2340 = vpop.f32.mrf.mxu0
      %v2341 = vadd.f32 0.0, %v2340
      %v2342 = vpop.f32.mrf.mxu0
      %v2343 = vadd.f32 0.0, %v2342
      %2344 = vmatprep.mubr.bf16.mxu0 0
      %2345 = vmatmul.mubr.bf16.gmra.mxu0 %v2022
      %v2346 = vpop.f32.mrf.mxu0
      %v2347 = vadd.f32 0.0, %v2346
      %v2348 = vpop.f32.mrf.mxu0
      %v2349 = vadd.f32 0.0, %v2348
      %v2350 = vpop.f32.mrf.mxu0
      %v2351 = vadd.f32 0.0, %v2350
      %v2352 = vpop.f32.mrf.mxu0
      %v2353 = vadd.f32 0.0, %v2352
      %2354 = vmatprep.mubr.bf16.mxu0 0
      %2355 = vmatmul.mubr.bf16.gmra.mxu0 %v2023
      %v2356 = vpop.f32.mrf.mxu0
      %v2357 = vadd.f32 0.0, %v2356
      %v2358 = vpop.f32.mrf.mxu0
      %v2359 = vadd.f32 0.0, %v2358
      %v2360 = vpop.f32.mrf.mxu0
      %v2361 = vadd.f32 0.0, %v2360
      %v2362 = vpop.f32.mrf.mxu0
      %v2363 = vadd.f32 0.0, %v2362
      %2364 = vmatprep.mubr.bf16.mxu0 0
      %2365 = vmatmul.mubr.bf16.gmra.mxu0 %v2024
      %v2366 = vpop.f32.mrf.mxu0
      %v2367 = vadd.f32 0.0, %v2366
      %v2368 = vpop.f32.mrf.mxu0
      %v2369 = vadd.f32 0.0, %v2368
      %v2370 = vpop.f32.mrf.mxu0
      %v2371 = vadd.f32 0.0, %v2370
      %v2372 = vpop.f32.mrf.mxu0
      %v2373 = vadd.f32 0.0, %v2372
      %2374 = vmatprep.mubr.bf16.mxu0 0
      %2375 = vmatmul.mubr.bf16.gmra.mxu0 %v2025
      %v2376 = vpop.f32.mrf.mxu0
      %v2377 = vadd.f32 0.0, %v2376
      %v2378 = vpop.f32.mrf.mxu0
      %v2379 = vadd.f32 0.0, %v2378
      %v2380 = vpop.f32.mrf.mxu0
      %v2381 = vadd.f32 0.0, %v2380
      %v2382 = vpop.f32.mrf.mxu0
      %v2383 = vadd.f32 0.0, %v2382
      %2384 = vdwg.mxu0
      %2385 = vmatprep.subr.bf16.mxu0 0
      %2386 = vmatpush1.bf16.msra.mxu0 %v2147
      %2387 = vmatprep.subr.bf16.mxu0 0
      %2388 = vmatpush1.bf16.msra.mxu0 %v2144
      %2389 = vmatprep.subr.bf16.mxu0 0
      %2390 = vmatpush1.bf16.msra.mxu0 %v2141
      %2391 = vmatprep.subr.bf16.mxu0 0
      %2392 = vmatpush1.bf16.msra.mxu0 %v2138
      %2393 = vmatprep.subr.bf16.mxu0 0
      %2394 = vmatpush1.bf16.msra.mxu0 %v2135
      %2395 = vmatprep.subr.bf16.mxu0 0
      %2396 = vmatpush1.bf16.msra.mxu0 %v2132
      %2397 = vmatprep.subr.bf16.mxu0 0
      %2398 = vmatpush1.bf16.msra.mxu0 %v2129
      %2399 = vmatprep.subr.bf16.mxu0 0
      %2400 = vmatpush1.bf16.msra.mxu0 %v2126
      %2401 = vmatprep.subr.bf16.mxu0 0
      %2402 = vmatpush2.bf16.msra.mxu0 0
      %2403 = vmatprep.subr.bf16.mxu0 0
      %2404 = vmatpush2.bf16.msra.mxu0 0
      %2405 = vmatprep.subr.bf16.mxu0 0
      %2406 = vmatpush2.bf16.msra.mxu0 0
      %2407 = vmatprep.subr.bf16.mxu0 0
      %2408 = vmatpush2.bf16.msra.mxu0 0
      %2409 = vmatprep.subr.bf16.mxu0 0
      %2410 = vmatpush2.bf16.msra.mxu0 0
      %2411 = vmatprep.subr.bf16.mxu0 0
      %2412 = vmatpush2.bf16.msra.mxu0 0
      %2413 = vmatprep.subr.bf16.mxu0 0
      %2414 = vmatpush2.bf16.msra.mxu0 0
      %2415 = vmatprep.subr.bf16.mxu0 0
      %2416 = vmatpush2.bf16.msra.mxu0 0
      %2417 = vmatprep.mubr.bf16.mxu0 0
      %2418 = vmatmul.mubr.bf16.gmra.mxu0 %v2008
      %v2419 = vpop.f32.mrf.mxu0
      %v2420 = vadd.f32 0.0, %v2419
      %v2421 = vpop.f32.mrf.mxu0
      %v2422 = vpop.f32.mrf.mxu0
      %v2423 = vadd.f32 0.0, %v2422
      %v2424 = vpop.f32.mrf.mxu0
      %2425 = vmatprep.mubr.bf16.mxu0 0
      %2426 = vmatmul.mubr.bf16.gmra.mxu0 %v2009
      %v2427 = vpop.f32.mrf.mxu0
      %v2428 = vadd.f32 0.0, %v2427
      %v2429 = vpop.f32.mrf.mxu0
      %v2430 = vpop.f32.mrf.mxu0
      %v2431 = vadd.f32 0.0, %v2430
      %v2432 = vpop.f32.mrf.mxu0
      %2433 = vmatprep.mubr.bf16.mxu0 0
      %2434 = vmatmul.mubr.bf16.gmra.mxu0 %v2010
      %v2435 = vpop.f32.mrf.mxu0
      %v2436 = vadd.f32 0.0, %v2435
      %v2437 = vpop.f32.mrf.mxu0
      %v2438 = vpop.f32.mrf.mxu0
      %v2439 = vadd.f32 0.0, %v2438
      %v2440 = vpop.f32.mrf.mxu0
      %2441 = vmatprep.mubr.bf16.mxu0 0
      %2442 = vmatmul.mubr.bf16.gmra.mxu0 %v2011
      %v2443 = vpop.f32.mrf.mxu0
      %v2444 = vadd.f32 0.0, %v2443
      %v2445 = vpop.f32.mrf.mxu0
      %v2446 = vpop.f32.mrf.mxu0
      %v2447 = vadd.f32 0.0, %v2446
      %v2448 = vpop.f32.mrf.mxu0
      %2449 = vmatprep.mubr.bf16.mxu0 0
      %2450 = vmatmul.mubr.bf16.gmra.mxu0 %v2012
      %v2451 = vpop.f32.mrf.mxu0
      %v2452 = vadd.f32 0.0, %v2451
      %v2453 = vpop.f32.mrf.mxu0
      %v2454 = vpop.f32.mrf.mxu0
      %v2455 = vadd.f32 0.0, %v2454
      %v2456 = vpop.f32.mrf.mxu0
      %2457 = vmatprep.mubr.bf16.mxu0 0
      %2458 = vmatmul.mubr.bf16.gmra.mxu0 %v2013
      %v2459 = vpop.f32.mrf.mxu0
      %v2460 = vadd.f32 0.0, %v2459
      %v2461 = vpop.f32.mrf.mxu0
      %v2462 = vpop.f32.mrf.mxu0
      %v2463 = vadd.f32 0.0, %v2462
      %v2464 = vpop.f32.mrf.mxu0
      %2465 = vmatprep.mubr.bf16.mxu0 0
      %2466 = vmatmul.mubr.bf16.gmra.mxu0 %v2014
      %v2467 = vpop.f32.mrf.mxu0
      %v2468 = vadd.f32 0.0, %v2467
      %v2469 = vpop.f32.mrf.mxu0
      %v2470 = vpop.f32.mrf.mxu0
      %v2471 = vadd.f32 0.0, %v2470
      %v2472 = vpop.f32.mrf.mxu0
      %2473 = vmatprep.mubr.bf16.mxu0 0
      %2474 = vmatmul.mubr.bf16.gmra.mxu0 %v2015
      %v2475 = vpop.f32.mrf.mxu0
      %v2476 = vadd.f32 0.0, %v2475
      %v2477 = vpop.f32.mrf.mxu0
      %v2478 = vpop.f32.mrf.mxu0
      %v2479 = vadd.f32 0.0, %v2478
      %v2480 = vpop.f32.mrf.mxu0
      %2481 = vmatprep.mubr.bf16.mxu0 0
      %2482 = vmatmul.mubr.bf16.gmra.mxu0 %v2016
      %v2483 = vpop.f32.mrf.mxu0
      %v2484 = vadd.f32 0.0, %v2483
      %v2485 = vpop.f32.mrf.mxu0
      %v2486 = vpop.f32.mrf.mxu0
      %v2487 = vadd.f32 0.0, %v2486
      %v2488 = vpop.f32.mrf.mxu0
      %2489 = vmatprep.mubr.bf16.mxu0 0
      %2490 = vmatmul.mubr.bf16.gmra.mxu0 %v2017
      %v2491 = vpop.f32.mrf.mxu0
      %v2492 = vadd.f32 0.0, %v2491
      %v2493 = vpop.f32.mrf.mxu0
      %v2494 = vpop.f32.mrf.mxu0
      %v2495 = vadd.f32 0.0, %v2494
      %v2496 = vpop.f32.mrf.mxu0
      %2497 = vmatprep.mubr.bf16.mxu0 0
      %2498 = vmatmul.mubr.bf16.gmra.mxu0 %v2018
      %v2499 = vpop.f32.mrf.mxu0
      %v2500 = vadd.f32 0.0, %v2499
      %v2501 = vpop.f32.mrf.mxu0
      %v2502 = vpop.f32.mrf.mxu0
      %v2503 = vadd.f32 0.0, %v2502
      %v2504 = vpop.f32.mrf.mxu0
      %2505 = vmatprep.mubr.bf16.mxu0 0
      %2506 = vmatmul.mubr.bf16.gmra.mxu0 %v2019
      %v2507 = vpop.f32.mrf.mxu0
      %v2508 = vadd.f32 0.0, %v2507
      %v2509 = vpop.f32.mrf.mxu0
      %v2510 = vpop.f32.mrf.mxu0
      %v2511 = vadd.f32 0.0, %v2510
      %v2512 = vpop.f32.mrf.mxu0
      %2513 = vmatprep.mubr.bf16.mxu0 0
      %2514 = vmatmul.mubr.bf16.gmra.mxu0 %v2020
      %v2515 = vpop.f32.mrf.mxu0
      %v2516 = vadd.f32 0.0, %v2515
      %v2517 = vpop.f32.mrf.mxu0
      %v2518 = vpop.f32.mrf.mxu0
      %v2519 = vadd.f32 0.0, %v2518
      %v2520 = vpop.f32.mrf.mxu0
      %2521 = vmatprep.mubr.bf16.mxu0 0
      %2522 = vmatmul.mubr.bf16.gmra.mxu0 %v2021
      %v2523 = vpop.f32.mrf.mxu0
      %v2524 = vadd.f32 0.0, %v2523
      %v2525 = vpop.f32.mrf.mxu0
      %v2526 = vpop.f32.mrf.mxu0
      %v2527 = vadd.f32 0.0, %v2526
      %v2528 = vpop.f32.mrf.mxu0
      %2529 = vmatprep.mubr.bf16.mxu0 0
      %2530 = vmatmul.mubr.bf16.gmra.mxu0 %v2022
      %v2531 = vpop.f32.mrf.mxu0
      %v2532 = vadd.f32 0.0, %v2531
      %v2533 = vpop.f32.mrf.mxu0
      %v2534 = vpop.f32.mrf.mxu0
      %v2535 = vadd.f32 0.0, %v2534
      %v2536 = vpop.f32.mrf.mxu0
      %2537 = vmatprep.mubr.bf16.mxu0 0
      %2538 = vmatmul.mubr.bf16.gmra.mxu0 %v2023
      %v2539 = vpop.f32.mrf.mxu0
      %v2540 = vadd.f32 0.0, %v2539
      %v2541 = vpop.f32.mrf.mxu0
      %v2542 = vpop.f32.mrf.mxu0
      %v2543 = vadd.f32 0.0, %v2542
      %v2544 = vpop.f32.mrf.mxu0
      %2545 = vmatprep.mubr.bf16.mxu0 0
      %2546 = vmatmul.mubr.bf16.gmra.mxu0 %v2024
      %v2547 = vpop.f32.mrf.mxu0
      %v2548 = vadd.f32 0.0, %v2547
      %v2549 = vpop.f32.mrf.mxu0
      %v2550 = vpop.f32.mrf.mxu0
      %v2551 = vadd.f32 0.0, %v2550
      %v2552 = vpop.f32.mrf.mxu0
      %2553 = vmatprep.mubr.bf16.mxu0 0
      %2554 = vmatmul.mubr.bf16.gmra.mxu0 %v2025
      %v2555 = vpop.f32.mrf.mxu0
      %v2556 = vadd.f32 0.0, %v2555
      %v2557 = vpop.f32.mrf.mxu0
      %v2558 = vpop.f32.mrf.mxu0
      %v2559 = vadd.f32 0.0, %v2558
      %v2560 = vpop.f32.mrf.mxu0
      %2561 = vdwg.mxu0
      %v2562 = vadd.f32 %v1509, %v2207
      %v2563 = vadd.f32 %v1511, %v2209
      %v2564 = vadd.f32 %v1722, %v2420
      %v2565 = vadd.f32 %v1513, %v2211
      %v2566 = vadd.f32 %v1515, %v2213
      %v2567 = vadd.f32 %v1725, %v2423
      %v2568 = vadd.f32 %v1519, %v2217
      %v2569 = vadd.f32 %v1521, %v2219
      %v2570 = vadd.f32 %v1730, %v2428
      %v2571 = vadd.f32 %v1523, %v2221
      %v2572 = vadd.f32 %v1525, %v2223
      %v2573 = vadd.f32 %v1733, %v2431
      %v2574 = vadd.f32 %v1529, %v2227
      %v2575 = vadd.f32 %v1531, %v2229
      %v2576 = vadd.f32 %v1738, %v2436
      %v2577 = vadd.f32 %v1533, %v2231
      %v2578 = vadd.f32 %v1535, %v2233
      %v2579 = vadd.f32 %v1741, %v2439
      %v2580 = vadd.f32 %v1539, %v2237
      %v2581 = vadd.f32 %v1541, %v2239
      %v2582 = vadd.f32 %v1746, %v2444
      %v2583 = vadd.f32 %v1543, %v2241
      %v2584 = vadd.f32 %v1545, %v2243
      %v2585 = vadd.f32 %v1749, %v2447
      %v2586 = vadd.f32 %v1549, %v2247
      %v2587 = vadd.f32 %v1551, %v2249
      %v2588 = vadd.f32 %v1754, %v2452
      %v2589 = vadd.f32 %v1553, %v2251
      %v2590 = vadd.f32 %v1555, %v2253
      %v2591 = vadd.f32 %v1757, %v2455
      %v2592 = vadd.f32 %v1559, %v2257
      %v2593 = vadd.f32 %v1561, %v2259
      %v2594 = vadd.f32 %v1762, %v2460
      %v2595 = vadd.f32 %v1563, %v2261
      %v2596 = vadd.f32 %v1565, %v2263
      %v2597 = vadd.f32 %v1765, %v2463
      %v2598 = vadd.f32 %v1569, %v2267
      %v2599 = vadd.f32 %v1571, %v2269
      %v2600 = vadd.f32 %v1770, %v2468
      %v2601 = vadd.f32 %v1573, %v2271
      %v2602 = vadd.f32 %v1575, %v2273
      %v2603 = vadd.f32 %v1773, %v2471
      %v2604 = vadd.f32 %v1579, %v2277
      %v2605 = vadd.f32 %v1581, %v2279
      %v2606 = vadd.f32 %v1778, %v2476
      %v2607 = vadd.f32 %v1583, %v2281
      %v2608 = vadd.f32 %v1585, %v2283
      %v2609 = vadd.f32 %v1781, %v2479
      %v2610 = vadd.f32 %v1589, %v2287
      %v2611 = vadd.f32 %v1591, %v2289
      %v2612 = vadd.f32 %v1786, %v2484
      %v2613 = vadd.f32 %v1593, %v2291
      %v2614 = vadd.f32 %v1595, %v2293
      %v2615 = vadd.f32 %v1789, %v2487
      %v2616 = vadd.f32 %v1599, %v2297
      %v2617 = vadd.f32 %v1601, %v2299
      %v2618 = vadd.f32 %v1794, %v2492
      %v2619 = vadd.f32 %v1603, %v2301
      %v2620 = vadd.f32 %v1605, %v2303
      %v2621 = vadd.f32 %v1797, %v2495
      %v2622 = vadd.f32 %v1609, %v2307
      %v2623 = vadd.f32 %v1611, %v2309
      %v2624 = vadd.f32 %v1802, %v2500
      %v2625 = vadd.f32 %v1613, %v2311
      %v2626 = vadd.f32 %v1615, %v2313
      %v2627 = vadd.f32 %v1805, %v2503
      %v2628 = vadd.f32 %v1619, %v2317
      %v2629 = vadd.f32 %v1621, %v2319
      %v2630 = vadd.f32 %v1810, %v2508
      %v2631 = vadd.f32 %v1623, %v2321
      %v2632 = vadd.f32 %v1625, %v2323
      %v2633 = vadd.f32 %v1813, %v2511
      %v2634 = vadd.f32 %v1629, %v2327
      %v2635 = vadd.f32 %v1631, %v2329
      %v2636 = vadd.f32 %v1818, %v2516
      %v2637 = vadd.f32 %v1633, %v2331
      %v2638 = vadd.f32 %v1635, %v2333
      %v2639 = vadd.f32 %v1821, %v2519
      %v2640 = vadd.f32 %v1639, %v2337
      %v2641 = vadd.f32 %v1641, %v2339
      %v2642 = vadd.f32 %v1826, %v2524
      %v2643 = vadd.f32 %v1643, %v2341
      %v2644 = vadd.f32 %v1645, %v2343
      %v2645 = vadd.f32 %v1829, %v2527
      %v2646 = vadd.f32 %v1649, %v2347
      %v2647 = vadd.f32 %v1651, %v2349
      %v2648 = vadd.f32 %v1834, %v2532
      %v2649 = vadd.f32 %v1653, %v2351
      %v2650 = vadd.f32 %v1655, %v2353
      %v2651 = vadd.f32 %v1837, %v2535
      %v2652 = vadd.f32 %v1659, %v2357
      %v2653 = vadd.f32 %v1661, %v2359
      %v2654 = vadd.f32 %v1842, %v2540
      %v2655 = vadd.f32 %v1663, %v2361
      %v2656 = vadd.f32 %v1665, %v2363
      %v2657 = vadd.f32 %v1845, %v2543
      %v2658 = vadd.f32 %v1669, %v2367
      %v2659 = vadd.f32 %v1671, %v2369
      %v2660 = vadd.f32 %v1850, %v2548
      %v2661 = vadd.f32 %v1673, %v2371
      %v2662 = vadd.f32 %v1675, %v2373
      %v2663 = vadd.f32 %v1853, %v2551
      %v2664 = vadd.f32 %v1679, %v2377
      %v2665 = vadd.f32 %v1681, %v2379
      %v2666 = vadd.f32 %v1858, %v2556
      %v2667 = vadd.f32 %v1683, %v2381
      %v2668 = vadd.f32 %v1685, %v2383
      %v2669 = vadd.f32 %v1861, %v2559
      %vm2706 = vcmask 1040384
      %v2707 = vrot.slane %v2562, 7
      %v2708 = vrot.slane %v2565, 7
      %v2709 = vsel %vm2706, %v2707, %v2708
      %v2710 = vrot.slane %v2568, 7
      %v2711 = vrot.slane %v2571, 7
      %v2712 = vsel %vm2706, %v2710, %v2711
      %v2713 = vrot.slane %v2574, 7
      %v2714 = vrot.slane %v2577, 7
      %v2715 = vsel %vm2706, %v2713, %v2714
      %v2716 = vrot.slane %v2580, 7
      %v2717 = vrot.slane %v2583, 7
      %v2718 = vsel %vm2706, %v2716, %v2717
      %v2719 = vrot.slane %v2586, 7
      %v2720 = vrot.slane %v2589, 7
      %v2721 = vsel %vm2706, %v2719, %v2720
      %v2722 = vrot.slane %v2592, 7
      %v2723 = vrot.slane %v2595, 7
      %v2724 = vsel %vm2706, %v2722, %v2723
      %v2725 = vrot.slane %v2598, 7
      %v2726 = vrot.slane %v2601, 7
      %v2727 = vsel %vm2706, %v2725, %v2726
      %v2728 = vrot.slane %v2604, 7
      %v2729 = vrot.slane %v2607, 7
      %v2730 = vsel %vm2706, %v2728, %v2729
      %v2731 = vrot.slane %v2610, 7
      %v2732 = vrot.slane %v2613, 7
      %v2733 = vsel %vm2706, %v2731, %v2732
      %v2734 = vrot.slane %v2616, 7
      %v2735 = vrot.slane %v2619, 7
      %v2736 = vsel %vm2706, %v2734, %v2735
      %v2737 = vrot.slane %v2622, 7
      %v2738 = vrot.slane %v2625, 7
      %v2739 = vsel %vm2706, %v2737, %v2738
      %v2740 = vrot.slane %v2628, 7
      %v2741 = vrot.slane %v2631, 7
      %v2742 = vsel %vm2706, %v2740, %v2741
      %v2743 = vrot.slane %v2634, 7
      %v2744 = vrot.slane %v2637, 7
      %v2745 = vsel %vm2706, %v2743, %v2744
      %v2746 = vrot.slane %v2640, 7
      %v2747 = vrot.slane %v2643, 7
      %v2748 = vsel %vm2706, %v2746, %v2747
      %v2749 = vrot.slane %v2646, 7
      %v2750 = vrot.slane %v2649, 7
      %v2751 = vsel %vm2706, %v2749, %v2750
      %v2752 = vrot.slane %v2652, 7
      %v2753 = vrot.slane %v2655, 7
      %v2754 = vsel %vm2706, %v2752, %v2753
      %v2755 = vrot.slane %v2658, 7
      %v2756 = vrot.slane %v2661, 7
      %v2757 = vsel %vm2706, %v2755, %v2756
      %v2758 = vrot.slane %v2664, 7
      %v2759 = vrot.slane %v2667, 7
      %v2760 = vsel %vm2706, %v2758, %v2759
      %v2797 = vsel %vm2706, 0.0, %v2707
      %v2798 = vsel %vm2706, 0.0, %v2710
      %v2799 = vsel %vm2706, 0.0, %v2713
      %v2800 = vsel %vm2706, 0.0, %v2716
      %v2801 = vsel %vm2706, 0.0, %v2719
      %v2802 = vsel %vm2706, 0.0, %v2722
      %v2803 = vsel %vm2706, 0.0, %v2725
      %v2804 = vsel %vm2706, 0.0, %v2728
      %v2805 = vsel %vm2706, 0.0, %v2731
      %v2806 = vsel %vm2706, 0.0, %v2734
      %v2807 = vsel %vm2706, 0.0, %v2737
      %v2808 = vsel %vm2706, 0.0, %v2740
      %v2809 = vsel %vm2706, 0.0, %v2743
      %v2810 = vsel %vm2706, 0.0, %v2746
      %v2811 = vsel %vm2706, 0.0, %v2749
      %v2812 = vsel %vm2706, 0.0, %v2752
      %v2813 = vsel %vm2706, 0.0, %v2755
      %v2814 = vsel %vm2706, 0.0, %v2758
      %v2815 = vadd.f32 %v2563, %v2797
      %v2816 = vadd.f32 %v2566, %v2709
      %v2817 = vadd.f32 %v2569, %v2798
      %v2818 = vadd.f32 %v2572, %v2712
      %v2819 = vadd.f32 %v2575, %v2799
      %v2820 = vadd.f32 %v2578, %v2715
      %v2821 = vadd.f32 %v2581, %v2800
      %v2822 = vadd.f32 %v2584, %v2718
      %v2823 = vadd.f32 %v2587, %v2801
      %v2824 = vadd.f32 %v2590, %v2721
      %v2825 = vadd.f32 %v2593, %v2802
      %v2826 = vadd.f32 %v2596, %v2724
      %v2827 = vadd.f32 %v2599, %v2803
      %v2828 = vadd.f32 %v2602, %v2727
      %v2829 = vadd.f32 %v2605, %v2804
      %v2830 = vadd.f32 %v2608, %v2730
      %v2831 = vadd.f32 %v2611, %v2805
      %v2832 = vadd.f32 %v2614, %v2733
      %v2833 = vadd.f32 %v2617, %v2806
      %v2834 = vadd.f32 %v2620, %v2736
      %v2835 = vadd.f32 %v2623, %v2807
      %v2836 = vadd.f32 %v2626, %v2739
      %v2837 = vadd.f32 %v2629, %v2808
      %v2838 = vadd.f32 %v2632, %v2742
      %v2839 = vadd.f32 %v2635, %v2809
      %v2840 = vadd.f32 %v2638, %v2745
      %v2841 = vadd.f32 %v2641, %v2810
      %v2842 = vadd.f32 %v2644, %v2748
      %v2843 = vadd.f32 %v2647, %v2811
      %v2844 = vadd.f32 %v2650, %v2751
      %v2845 = vadd.f32 %v2653, %v2812
      %v2846 = vadd.f32 %v2656, %v2754
      %v2847 = vadd.f32 %v2659, %v2813
      %v2848 = vadd.f32 %v2662, %v2757
      %v2849 = vadd.f32 %v2665, %v2814
      %v2850 = vadd.f32 %v2668, %v2760
      %vm2887 = vcmask 1046528
      %v2888 = vrot.slane %v2564, 1
      %v2889 = vrot.slane %v2567, 1
      %v2890 = vsel %vm2887, %v2888, %v2889
      %v2891 = vrot.slane %v2570, 1
      %v2892 = vrot.slane %v2573, 1
      %v2893 = vsel %vm2887, %v2891, %v2892
      %v2894 = vrot.slane %v2576, 1
      %v2895 = vrot.slane %v2579, 1
      %v2896 = vsel %vm2887, %v2894, %v2895
      %v2897 = vrot.slane %v2582, 1
      %v2898 = vrot.slane %v2585, 1
      %v2899 = vsel %vm2887, %v2897, %v2898
      %v2900 = vrot.slane %v2588, 1
      %v2901 = vrot.slane %v2591, 1
      %v2902 = vsel %vm2887, %v2900, %v2901
      %v2903 = vrot.slane %v2594, 1
      %v2904 = vrot.slane %v2597, 1
      %v2905 = vsel %vm2887, %v2903, %v2904
      %v2906 = vrot.slane %v2600, 1
      %v2907 = vrot.slane %v2603, 1
      %v2908 = vsel %vm2887, %v2906, %v2907
      %v2909 = vrot.slane %v2606, 1
      %v2910 = vrot.slane %v2609, 1
      %v2911 = vsel %vm2887, %v2909, %v2910
      %v2912 = vrot.slane %v2612, 1
      %v2913 = vrot.slane %v2615, 1
      %v2914 = vsel %vm2887, %v2912, %v2913
      %v2915 = vrot.slane %v2618, 1
      %v2916 = vrot.slane %v2621, 1
      %v2917 = vsel %vm2887, %v2915, %v2916
      %v2918 = vrot.slane %v2624, 1
      %v2919 = vrot.slane %v2627, 1
      %v2920 = vsel %vm2887, %v2918, %v2919
      %v2921 = vrot.slane %v2630, 1
      %v2922 = vrot.slane %v2633, 1
      %v2923 = vsel %vm2887, %v2921, %v2922
      %v2924 = vrot.slane %v2636, 1
      %v2925 = vrot.slane %v2639, 1
      %v2926 = vsel %vm2887, %v2924, %v2925
      %v2927 = vrot.slane %v2642, 1
      %v2928 = vrot.slane %v2645, 1
      %v2929 = vsel %vm2887, %v2927, %v2928
      %v2930 = vrot.slane %v2648, 1
      %v2931 = vrot.slane %v2651, 1
      %v2932 = vsel %vm2887, %v2930, %v2931
      %v2933 = vrot.slane %v2654, 1
      %v2934 = vrot.slane %v2657, 1
      %v2935 = vsel %vm2887, %v2933, %v2934
      %v2936 = vrot.slane %v2660, 1
      %v2937 = vrot.slane %v2663, 1
      %v2938 = vsel %vm2887, %v2936, %v2937
      %v2939 = vrot.slane %v2666, 1
      %v2940 = vrot.slane %v2669, 1
      %v2941 = vsel %vm2887, %v2939, %v2940
      %v2978 = vsel %vm2887, %v2889, 0.0
      %v2979 = vsel %vm2887, %v2892, 0.0
      %v2980 = vsel %vm2887, %v2895, 0.0
      %v2981 = vsel %vm2887, %v2898, 0.0
      %v2982 = vsel %vm2887, %v2901, 0.0
      %v2983 = vsel %vm2887, %v2904, 0.0
      %v2984 = vsel %vm2887, %v2907, 0.0
      %v2985 = vsel %vm2887, %v2910, 0.0
      %v2986 = vsel %vm2887, %v2913, 0.0
      %v2987 = vsel %vm2887, %v2916, 0.0
      %v2988 = vsel %vm2887, %v2919, 0.0
      %v2989 = vsel %vm2887, %v2922, 0.0
      %v2990 = vsel %vm2887, %v2925, 0.0
      %v2991 = vsel %vm2887, %v2928, 0.0
      %v2992 = vsel %vm2887, %v2931, 0.0
      %v2993 = vsel %vm2887, %v2934, 0.0
      %v2994 = vsel %vm2887, %v2937, 0.0
      %v2995 = vsel %vm2887, %v2940, 0.0
      %v2996 = vadd.f32 %v2815, %v2890
      %v2997 = vadd.f32 %v2816, %v2978
      %v2998 = vadd.f32 %v2817, %v2893
      %v2999 = vadd.f32 %v2818, %v2979
      %v3000 = vadd.f32 %v2819, %v2896
      %v3001 = vadd.f32 %v2820, %v2980
      %v3002 = vadd.f32 %v2821, %v2899
      %v3003 = vadd.f32 %v2822, %v2981
      %v3004 = vadd.f32 %v2823, %v2902
      %v3005 = vadd.f32 %v2824, %v2982
      %v3006 = vadd.f32 %v2825, %v2905
      %v3007 = vadd.f32 %v2826, %v2983
      %v3008 = vadd.f32 %v2827, %v2908
      %v3009 = vadd.f32 %v2828, %v2984
      %v3010 = vadd.f32 %v2829, %v2911
      %v3011 = vadd.f32 %v2830, %v2985
      %v3012 = vadd.f32 %v2831, %v2914
      %v3013 = vadd.f32 %v2832, %v2986
      %v3014 = vadd.f32 %v2833, %v2917
      %v3015 = vadd.f32 %v2834, %v2987
      %v3016 = vadd.f32 %v2835, %v2920
      %v3017 = vadd.f32 %v2836, %v2988
      %v3018 = vadd.f32 %v2837, %v2923
      %v3019 = vadd.f32 %v2838, %v2989
      %v3020 = vadd.f32 %v2839, %v2926
      %v3021 = vadd.f32 %v2840, %v2990
      %v3022 = vadd.f32 %v2841, %v2929
      %v3023 = vadd.f32 %v2842, %v2991
      %v3024 = vadd.f32 %v2843, %v2932
      %v3025 = vadd.f32 %v2844, %v2992
      %v3026 = vadd.f32 %v2845, %v2935
      %v3027 = vadd.f32 %v2846, %v2993
      %v3028 = vadd.f32 %v2847, %v2938
      %v3029 = vadd.f32 %v2848, %v2994
      %v3030 = vadd.f32 %v2849, %v2941
      %v3031 = vadd.f32 %v2850, %v2995
      %v3032 = vld [vmem:[%s2] sm:$0x1]
      %v3034 = vlaneseq
      %v3035 = vshrl.u32 %v3034, 7
      %v3036 = vsub.s32 0, %v3035
      %v3037 = vrot.slane %v3032, %v3036
      %v3039 = vmul.f32 %v2996, %v3037
      %v3040 = vmul.f32 %v2997, %v3037
      %v3041 = vmul.f32 %v2998, %v3037
      %v3042 = vmul.f32 %v2999, %v3037
      %v3043 = vmul.f32 %v3000, %v3037
      %v3044 = vmul.f32 %v3001, %v3037
      %v3045 = vmul.f32 %v3002, %v3037
      %v3046 = vmul.f32 %v3003, %v3037
      %v3047 = vmul.f32 %v3004, %v3037
      %v3048 = vmul.f32 %v3005, %v3037
      %v3049 = vmul.f32 %v3006, %v3037
      %v3050 = vmul.f32 %v3007, %v3037
      %v3051 = vmul.f32 %v3008, %v3037
      %v3052 = vmul.f32 %v3009, %v3037
      %v3053 = vmul.f32 %v3010, %v3037
      %v3054 = vmul.f32 %v3011, %v3037
      %v3055 = vmul.f32 %v3012, %v3037
      %v3056 = vmul.f32 %v3013, %v3037
      %v3057 = vmul.f32 %v3014, %v3037
      %v3058 = vmul.f32 %v3015, %v3037
      %v3059 = vmul.f32 %v3016, %v3037
      %v3060 = vmul.f32 %v3017, %v3037
      %v3061 = vmul.f32 %v3018, %v3037
      %v3062 = vmul.f32 %v3019, %v3037
      %v3063 = vmul.f32 %v3020, %v3037
      %v3064 = vmul.f32 %v3021, %v3037
      %v3065 = vmul.f32 %v3022, %v3037
      %v3066 = vmul.f32 %v3023, %v3037
      %v3067 = vmul.f32 %v3024, %v3037
      %v3068 = vmul.f32 %v3025, %v3037
      %v3069 = vmul.f32 %v3026, %v3037
      %v3070 = vmul.f32 %v3027, %v3037
      %v3071 = vmul.f32 %v3028, %v3037
      %v3072 = vmul.f32 %v3029, %v3037
      %v3073 = vmul.f32 %v3030, %v3037
      %v3074 = vmul.f32 %v3031, %v3037
      %v3075 = vld [vmem:[%s3] sm:$0x1]
      %v3077 = vlaneseq
      %v3078 = vshrl.u32 %v3077, 7
      %v3079 = vsub.s32 0, %v3078
      %v3080 = vrot.slane %v3075, %v3079
      %v3082 = vadd.f32 %v3039, %v3080
      %v3083 = vadd.f32 %v3040, %v3080
      %v3084 = vadd.f32 %v3041, %v3080
      %v3085 = vadd.f32 %v3042, %v3080
      %v3086 = vadd.f32 %v3043, %v3080
      %v3087 = vadd.f32 %v3044, %v3080
      %v3088 = vadd.f32 %v3045, %v3080
      %v3089 = vadd.f32 %v3046, %v3080
      %v3090 = vadd.f32 %v3047, %v3080
      %v3091 = vadd.f32 %v3048, %v3080
      %v3092 = vadd.f32 %v3049, %v3080
      %v3093 = vadd.f32 %v3050, %v3080
      %v3094 = vadd.f32 %v3051, %v3080
      %v3095 = vadd.f32 %v3052, %v3080
      %v3096 = vadd.f32 %v3053, %v3080
      %v3097 = vadd.f32 %v3054, %v3080
      %v3098 = vadd.f32 %v3055, %v3080
      %v3099 = vadd.f32 %v3056, %v3080
      %v3100 = vadd.f32 %v3057, %v3080
      %v3101 = vadd.f32 %v3058, %v3080
      %v3102 = vadd.f32 %v3059, %v3080
      %v3103 = vadd.f32 %v3060, %v3080
      %v3104 = vadd.f32 %v3061, %v3080
      %v3105 = vadd.f32 %v3062, %v3080
      %v3106 = vadd.f32 %v3063, %v3080
      %v3107 = vadd.f32 %v3064, %v3080
      %v3108 = vadd.f32 %v3065, %v3080
      %v3109 = vadd.f32 %v3066, %v3080
      %v3110 = vadd.f32 %v3067, %v3080
      %v3111 = vadd.f32 %v3068, %v3080
      %v3112 = vadd.f32 %v3069, %v3080
      %v3113 = vadd.f32 %v3070, %v3080
      %v3114 = vadd.f32 %v3071, %v3080
      %v3115 = vadd.f32 %v3072, %v3080
      %v3116 = vadd.f32 %v3073, %v3080
      %v3117 = vadd.f32 %v3074, %v3080
      %v3118 = vmax.f32 %v3082, 0.0
      %v3119 = vmax.f32 %v3083, 0.0
      %v3120 = vmax.f32 %v3084, 0.0
      %v3121 = vmax.f32 %v3085, 0.0
      %v3122 = vmax.f32 %v3086, 0.0
      %v3123 = vmax.f32 %v3087, 0.0
      %v3124 = vmax.f32 %v3088, 0.0
      %v3125 = vmax.f32 %v3089, 0.0
      %v3126 = vmax.f32 %v3090, 0.0
      %v3127 = vmax.f32 %v3091, 0.0
      %v3128 = vmax.f32 %v3092, 0.0
      %v3129 = vmax.f32 %v3093, 0.0
      %v3130 = vmax.f32 %v3094, 0.0
      %v3131 = vmax.f32 %v3095, 0.0
      %v3132 = vmax.f32 %v3096, 0.0
      %v3133 = vmax.f32 %v3097, 0.0
      %v3134 = vmax.f32 %v3098, 0.0
      %v3135 = vmax.f32 %v3099, 0.0
      %v3136 = vmax.f32 %v3100, 0.0
      %v3137 = vmax.f32 %v3101, 0.0
      %v3138 = vmax.f32 %v3102, 0.0
      %v3139 = vmax.f32 %v3103, 0.0
      %v3140 = vmax.f32 %v3104, 0.0
      %v3141 = vmax.f32 %v3105, 0.0
      %v3142 = vmax.f32 %v3106, 0.0
      %v3143 = vmax.f32 %v3107, 0.0
      %v3144 = vmax.f32 %v3108, 0.0
      %v3145 = vmax.f32 %v3109, 0.0
      %v3146 = vmax.f32 %v3110, 0.0
      %v3147 = vmax.f32 %v3111, 0.0
      %v3148 = vmax.f32 %v3112, 0.0
      %v3149 = vmax.f32 %v3113, 0.0
      %v3150 = vmax.f32 %v3114, 0.0
      %v3151 = vmax.f32 %v3115, 0.0
      %v3152 = vmax.f32 %v3116, 0.0
      %v3153 = vmax.f32 %v3117, 0.0
      %v3154 = vpack.c.bf16 %v3119, %v3118
      %v3155 = vpack.c.bf16 %v3121, %v3120
      %v3156 = vpack.c.bf16 %v3123, %v3122
      %v3157 = vpack.c.bf16 %v3125, %v3124
      %v3158 = vpack.c.bf16 %v3127, %v3126
      %v3159 = vpack.c.bf16 %v3129, %v3128
      %v3160 = vpack.c.bf16 %v3131, %v3130
      %v3161 = vpack.c.bf16 %v3133, %v3132
      %v3162 = vpack.c.bf16 %v3135, %v3134
      %v3163 = vpack.c.bf16 %v3137, %v3136
      %v3164 = vpack.c.bf16 %v3139, %v3138
      %v3165 = vpack.c.bf16 %v3141, %v3140
      %v3166 = vpack.c.bf16 %v3143, %v3142
      %v3167 = vpack.c.bf16 %v3145, %v3144
      %v3168 = vpack.c.bf16 %v3147, %v3146
      %v3169 = vpack.c.bf16 %v3149, %v3148
      %v3170 = vpack.c.bf16 %v3151, %v3150
      %v3171 = vpack.c.bf16 %v3153, %v3152
      %v3190 = vunpack.c.l.b16 %v3154
      %v3191 = vunpack.c.h.b16 %v3154
      %v3192 = vunpack.c.l.b16 %v3155
      %v3193 = vunpack.c.h.b16 %v3155
      %v3194 = vunpack.c.l.b16 %v3156
      %v3195 = vunpack.c.h.b16 %v3156
      %v3196 = vunpack.c.l.b16 %v3157
      %v3197 = vunpack.c.h.b16 %v3157
      %v3198 = vunpack.c.l.b16 %v3158
      %v3199 = vunpack.c.h.b16 %v3158
      %v3200 = vunpack.c.l.b16 %v3159
      %v3201 = vunpack.c.h.b16 %v3159
      %v3202 = vunpack.c.l.b16 %v3160
      %v3203 = vunpack.c.h.b16 %v3160
      %v3204 = vunpack.c.l.b16 %v3161
      %v3205 = vunpack.c.h.b16 %v3161
      %v3206 = vunpack.c.l.b16 %v3162
      %v3207 = vunpack.c.h.b16 %v3162
      %v3208 = vunpack.c.l.b16 %v3163
      %v3209 = vunpack.c.h.b16 %v3163
      %v3210 = vunpack.c.l.b16 %v3164
      %v3211 = vunpack.c.h.b16 %v3164
      %v3212 = vunpack.c.l.b16 %v3165
      %v3213 = vunpack.c.h.b16 %v3165
      %v3214 = vunpack.c.l.b16 %v3166
      %v3215 = vunpack.c.h.b16 %v3166
      %v3216 = vunpack.c.l.b16 %v3167
      %v3217 = vunpack.c.h.b16 %v3167
      %v3218 = vunpack.c.l.b16 %v3168
      %v3219 = vunpack.c.h.b16 %v3168
      %v3220 = vunpack.c.l.b16 %v3169
      %v3221 = vunpack.c.h.b16 %v3169
      %v3222 = vunpack.c.l.b16 %v3170
      %v3223 = vunpack.c.h.b16 %v3170
      %v3224 = vunpack.c.l.b16 %v3171
      %v3225 = vunpack.c.h.b16 %v3171
      %v3226 = vpack.c.b16 %v3190, %v3190
      %v3227 = vpack.c.b16 %v3191, %v3191
      %v3228 = vpack.c.b16 %v3192, %v3192
      %v3229 = vpack.c.b16 %v3193, %v3193
      %v3230 = vpack.c.b16 %v3194, %v3194
      %v3231 = vpack.c.b16 %v3195, %v3195
      %v3232 = vpack.c.b16 %v3196, %v3196
      %v3233 = vpack.c.b16 %v3197, %v3197
      %v3234 = vpack.c.b16 %v3198, %v3198
      %v3235 = vpack.c.b16 %v3199, %v3199
      %v3236 = vpack.c.b16 %v3200, %v3200
      %v3237 = vpack.c.b16 %v3201, %v3201
      %v3238 = vpack.c.b16 %v3202, %v3202
      %v3239 = vpack.c.b16 %v3203, %v3203
      %v3240 = vpack.c.b16 %v3204, %v3204
      %v3241 = vpack.c.b16 %v3205, %v3205
      %v3242 = vpack.c.b16 %v3206, %v3206
      %v3243 = vpack.c.b16 %v3207, %v3207
      %v3244 = vpack.c.b16 %v3208, %v3208
      %v3245 = vpack.c.b16 %v3209, %v3209
      %v3246 = vpack.c.b16 %v3210, %v3210
      %v3247 = vpack.c.b16 %v3211, %v3211
      %v3248 = vpack.c.b16 %v3212, %v3212
      %v3249 = vpack.c.b16 %v3213, %v3213
      %v3250 = vpack.c.b16 %v3214, %v3214
      %v3251 = vpack.c.b16 %v3215, %v3215
      %v3252 = vpack.c.b16 %v3216, %v3216
      %v3253 = vpack.c.b16 %v3217, %v3217
      %v3254 = vpack.c.b16 %v3218, %v3218
      %v3255 = vpack.c.b16 %v3219, %v3219
      %v3256 = vpack.c.b16 %v3220, %v3220
      %v3257 = vpack.c.b16 %v3221, %v3221
      %v3258 = vpack.c.b16 %v3222, %v3222
      %v3259 = vpack.c.b16 %v3223, %v3223
      %v3260 = vpack.c.b16 %v3224, %v3224
      %v3261 = vpack.c.b16 %v3225, %v3225
      %3298 = vst [vmem:[#allocation3] sm:$0xf] %v3226
      %3299 = vst [vmem:[#allocation3 + $0x4] sm:$0xf] %v3227
      %3300 = vst [vmem:[#allocation3 + $0x8] sm:$0xf] %v3228
      %3301 = vst [vmem:[#allocation3 + $0xc] sm:$0xf] %v3229
      %3302 = vst [vmem:[#allocation3 + $0x10] sm:$0xf] %v3230
      %3303 = vst [vmem:[#allocation3 + $0x14] sm:$0xf] %v3231
      %3304 = vst [vmem:[#allocation3 + $0x18] sm:$0xf] %v3232
      %3305 = vst [vmem:[#allocation3 + $0x1c] sm:$0xf] %v3233
      %3306 = vst [vmem:[#allocation3 + $0x20] sm:$0xf] %v3234
      %3307 = vst [vmem:[#allocation3 + $0x24] sm:$0xf] %v3235
      %3308 = vst [vmem:[#allocation3 + $0x28] sm:$0xf] %v3236
      %3309 = vst [vmem:[#allocation3 + $0x2c] sm:$0xf] %v3237
      %3310 = vst [vmem:[#allocation3 + $0x30] sm:$0xf] %v3238
      %3311 = vst [vmem:[#allocation3 + $0x34] sm:$0xf] %v3239
      %3312 = vst [vmem:[#allocation3 + $0x38] sm:$0xf] %v3240
      %3313 = vst [vmem:[#allocation3 + $0x3c] sm:$0xf] %v3241
      %3314 = vst [vmem:[#allocation3 + $0x40] sm:$0xf] %v3242
      %3315 = vst [vmem:[#allocation3 + $0x44] sm:$0xf] %v3243
      %3316 = vst [vmem:[#allocation3 + $0x48] sm:$0xf] %v3244
      %3317 = vst [vmem:[#allocation3 + $0x4c] sm:$0xf] %v3245
      %3318 = vst [vmem:[#allocation3 + $0x50] sm:$0xf] %v3246
      %3319 = vst [vmem:[#allocation3 + $0x54] sm:$0xf] %v3247
      %3320 = vst [vmem:[#allocation3 + $0x58] sm:$0xf] %v3248
      %3321 = vst [vmem:[#allocation3 + $0x5c] sm:$0xf] %v3249
      %3322 = vst [vmem:[#allocation3 + $0x60] sm:$0xf] %v3250
      %3323 = vst [vmem:[#allocation3 + $0x64] sm:$0xf] %v3251
      %3324 = vst [vmem:[#allocation3 + $0x68] sm:$0xf] %v3252
      %3325 = vst [vmem:[#allocation3 + $0x6c] sm:$0xf] %v3253
      %3326 = vst [vmem:[#allocation3 + $0x70] sm:$0xf] %v3254
      %3327 = vst [vmem:[#allocation3 + $0x74] sm:$0xf] %v3255
      %3328 = vst [vmem:[#allocation3 + $0x78] sm:$0xf] %v3256
      %3329 = vst [vmem:[#allocation3 + $0x7c] sm:$0xf] %v3257
      %3330 = vst [vmem:[#allocation3 + $0x80] sm:$0xf] %v3258
      %3331 = vst [vmem:[#allocation3 + $0x84] sm:$0xf] %v3259
      %3332 = vst [vmem:[#allocation3 + $0x88] sm:$0xf] %v3260
      %3333 = vst [vmem:[#allocation3 + $0x8c] sm:$0xf] %v3261
      // Predicated region
      $region121: #{basic_block_forward.1} parent=43 // pred_check
        %p3334 = pneg %p271
      $region122: #{basic_block_forward.1} parent=43 // pred_check_branch
        %3336 = sbr.rel (%p3334) target = $region124
      $region123: #{basic_block_forward.1} parent=43 // pred_region
        %3337 = vst [vmem:[#allocation3] sm:$0xf] 0
        %3338 = vst [vmem:[#allocation3 + $0x4] sm:$0xf] 0
        %s3339 = scalar_lea.vmem [#allocation3], 136
        %3340 = vst [vmem:[%s3339] sm:$0xf] 0
        %3341 = vst [vmem:[%s3339 + $0x4] sm:$0xf] 0
      $region124: #{basic_block_forward.1} parent=43 // pred_fallthru
        _
      %v3342 = vld [vmem:[#allocation3] sm:$0xf]
      %v3343 = vld [vmem:[#allocation3 + $0x4] sm:$0xf]
      %v3344 = vld [vmem:[#allocation3 + $0x8] sm:$0xf]
      %v3345 = vld [vmem:[#allocation3 + $0xc] sm:$0xf]
      %v3346 = vld [vmem:[#allocation3 + $0x10] sm:$0xf]
      %v3347 = vld [vmem:[#allocation3 + $0x14] sm:$0xf]
      %v3348 = vld [vmem:[#allocation3 + $0x18] sm:$0xf]
      %v3349 = vld [vmem:[#allocation3 + $0x1c] sm:$0xf]
      %v3350 = vld [vmem:[#allocation3 + $0x20] sm:$0xf]
      %v3351 = vld [vmem:[#allocation3 + $0x24] sm:$0xf]
      %v3352 = vld [vmem:[#allocation3 + $0x28] sm:$0xf]
      %v3353 = vld [vmem:[#allocation3 + $0x2c] sm:$0xf]
      %v3354 = vld [vmem:[#allocation3 + $0x30] sm:$0xf]
      %v3355 = vld [vmem:[#allocation3 + $0x34] sm:$0xf]
      %v3356 = vld [vmem:[#allocation3 + $0x38] sm:$0xf]
      %v3357 = vld [vmem:[#allocation3 + $0x3c] sm:$0xf]
      %v3358 = vld [vmem:[#allocation3 + $0x40] sm:$0xf]
      %v3359 = vld [vmem:[#allocation3 + $0x44] sm:$0xf]
      %v3360 = vld [vmem:[#allocation3 + $0x48] sm:$0xf]
      %v3361 = vld [vmem:[#allocation3 + $0x4c] sm:$0xf]
      %v3362 = vld [vmem:[#allocation3 + $0x50] sm:$0xf]
      %v3363 = vld [vmem:[#allocation3 + $0x54] sm:$0xf]
      %v3364 = vld [vmem:[#allocation3 + $0x58] sm:$0xf]
      %v3365 = vld [vmem:[#allocation3 + $0x5c] sm:$0xf]
      %v3366 = vld [vmem:[#allocation3 + $0x60] sm:$0xf]
      %v3367 = vld [vmem:[#allocation3 + $0x64] sm:$0xf]
      %v3368 = vld [vmem:[#allocation3 + $0x68] sm:$0xf]
      %v3369 = vld [vmem:[#allocation3 + $0x6c] sm:$0xf]
      %v3370 = vld [vmem:[#allocation3 + $0x70] sm:$0xf]
      %v3371 = vld [vmem:[#allocation3 + $0x74] sm:$0xf]
      %v3372 = vld [vmem:[#allocation3 + $0x78] sm:$0xf]
      %v3373 = vld [vmem:[#allocation3 + $0x7c] sm:$0xf]
      %v3374 = vld [vmem:[%s4] sm:$0xff]
      %v3375 = vld [vmem:[%s4 + $0x8] sm:$0xf]
      %v3376 = vld [vmem:[%s4 + $0xc] sm:$0xff]
      %v3377 = vld [vmem:[%s4 + $0x14] sm:$0xf]
      %v3378 = vld [vmem:[%s4 + $0x18] sm:$0xff]
      %v3379 = vld [vmem:[%s4 + $0x20] sm:$0xf]
      %v3380 = vld [vmem:[%s4 + $0x24] sm:$0xff]
      %v3381 = vld [vmem:[%s4 + $0x2c] sm:$0xf]
      %v3382 = vld [vmem:[%s4 + $0x30] sm:$0xff]
      %v3383 = vld [vmem:[%s4 + $0x38] sm:$0xf]
      %v3384 = vld [vmem:[%s4 + $0x3c] sm:$0xff]
      %v3385 = vld [vmem:[%s4 + $0x44] sm:$0xf]
      %v3386 = vld [vmem:[%s4 + $0x48] sm:$0xff]
      %v3387 = vld [vmem:[%s4 + $0x50] sm:$0xf]
      %v3388 = vld [vmem:[%s4 + $0x54] sm:$0xff]
      %v3389 = vld [vmem:[%s4 + $0x5c] sm:$0xf]
      %v3390 = vld [vmem:[%s4 + $0x60] sm:$0xff]
      %v3391 = vld [vmem:[%s4 + $0x68] sm:$0xf]
      %v3392 = vld [vmem:[%s4 + $0x6c] sm:$0xff]
      %v3393 = vld [vmem:[%s4 + $0x74] sm:$0xf]
      %v3394 = vld [vmem:[%s4 + $0x78] sm:$0xff]
      %v3395 = vld [vmem:[%s4 + $0x80] sm:$0xf]
      %v3396 = vld [vmem:[%s4 + $0x84] sm:$0xff]
      %v3397 = vld [vmem:[%s4 + $0x8c] sm:$0xf]
      %v3398 = vld [vmem:[%s4 + $0x90] sm:$0xff]
      %v3399 = vld [vmem:[%s4 + $0x98] sm:$0xf]
      %v3400 = vld [vmem:[%s4 + $0x9c] sm:$0xff]
      %v3401 = vld [vmem:[%s4 + $0xa4] sm:$0xf]
      %v3402 = vld [vmem:[%s4 + $0xa8] sm:$0xff]
      %v3403 = vld [vmem:[%s4 + $0xb0] sm:$0xf]
      %v3404 = vld [vmem:[%s4 + $0xb4] sm:$0xff]
      %v3405 = vld [vmem:[%s4 + $0xbc] sm:$0xf]
      %s3406 = scalar_lea.vmem [#allocation3], 8
      %v3407 = vld [vmem:[%s3406] sm:$0xf]
      %v3408 = vld [vmem:[%s3406 + $0x4] sm:$0xf]
      %v3409 = vld [vmem:[%s3406 + $0x8] sm:$0xf]
      %v3410 = vld [vmem:[%s3406 + $0xc] sm:$0xf]
      %v3411 = vld [vmem:[%s3406 + $0x10] sm:$0xf]
      %v3412 = vld [vmem:[%s3406 + $0x14] sm:$0xf]
      %v3413 = vld [vmem:[%s3406 + $0x18] sm:$0xf]
      %v3414 = vld [vmem:[%s3406 + $0x1c] sm:$0xf]
      %v3415 = vld [vmem:[%s3406 + $0x20] sm:$0xf]
      %v3416 = vld [vmem:[%s3406 + $0x24] sm:$0xf]
      %v3417 = vld [vmem:[%s3406 + $0x28] sm:$0xf]
      %v3418 = vld [vmem:[%s3406 + $0x2c] sm:$0xf]
      %v3419 = vld [vmem:[%s3406 + $0x30] sm:$0xf]
      %v3420 = vld [vmem:[%s3406 + $0x34] sm:$0xf]
      %v3421 = vld [vmem:[%s3406 + $0x38] sm:$0xf]
      %v3422 = vld [vmem:[%s3406 + $0x3c] sm:$0xf]
      %v3423 = vld [vmem:[%s3406 + $0x40] sm:$0xf]
      %v3424 = vld [vmem:[%s3406 + $0x44] sm:$0xf]
      %v3425 = vld [vmem:[%s3406 + $0x48] sm:$0xf]
      %v3426 = vld [vmem:[%s3406 + $0x4c] sm:$0xf]
      %v3427 = vld [vmem:[%s3406 + $0x50] sm:$0xf]
      %v3428 = vld [vmem:[%s3406 + $0x54] sm:$0xf]
      %v3429 = vld [vmem:[%s3406 + $0x58] sm:$0xf]
      %v3430 = vld [vmem:[%s3406 + $0x5c] sm:$0xf]
      %v3431 = vld [vmem:[%s3406 + $0x60] sm:$0xf]
      %v3432 = vld [vmem:[%s3406 + $0x64] sm:$0xf]
      %v3433 = vld [vmem:[%s3406 + $0x68] sm:$0xf]
      %v3434 = vld [vmem:[%s3406 + $0x6c] sm:$0xf]
      %v3435 = vld [vmem:[%s3406 + $0x70] sm:$0xf]
      %v3436 = vld [vmem:[%s3406 + $0x74] sm:$0xf]
      %v3437 = vld [vmem:[%s3406 + $0x78] sm:$0xf]
      %v3438 = vld [vmem:[%s3406 + $0x7c] sm:$0xf]
      %s3439 = scalar_lea.vmem %s4, 192
      %v3440 = vld [vmem:[%s3439] sm:$0xff]
      %v3441 = vld [vmem:[%s3439 + $0x8] sm:$0xf]
      %v3442 = vld [vmem:[%s3439 + $0xc] sm:$0xff]
      %v3443 = vld [vmem:[%s3439 + $0x14] sm:$0xf]
      %v3444 = vld [vmem:[%s3439 + $0x18] sm:$0xff]
      %v3445 = vld [vmem:[%s3439 + $0x20] sm:$0xf]
      %v3446 = vld [vmem:[%s3439 + $0x24] sm:$0xff]
      %v3447 = vld [vmem:[%s3439 + $0x2c] sm:$0xf]
      %v3448 = vld [vmem:[%s3439 + $0x30] sm:$0xff]
      %v3449 = vld [vmem:[%s3439 + $0x38] sm:$0xf]
      %v3450 = vld [vmem:[%s3439 + $0x3c] sm:$0xff]
      %v3451 = vld [vmem:[%s3439 + $0x44] sm:$0xf]
      %v3452 = vld [vmem:[%s3439 + $0x48] sm:$0xff]
      %v3453 = vld [vmem:[%s3439 + $0x50] sm:$0xf]
      %v3454 = vld [vmem:[%s3439 + $0x54] sm:$0xff]
      %v3455 = vld [vmem:[%s3439 + $0x5c] sm:$0xf]
      %v3456 = vld [vmem:[%s3439 + $0x60] sm:$0xff]
      %v3457 = vld [vmem:[%s3439 + $0x68] sm:$0xf]
      %v3458 = vld [vmem:[%s3439 + $0x6c] sm:$0xff]
      %v3459 = vld [vmem:[%s3439 + $0x74] sm:$0xf]
      %v3460 = vld [vmem:[%s3439 + $0x78] sm:$0xff]
      %v3461 = vld [vmem:[%s3439 + $0x80] sm:$0xf]
      %v3462 = vld [vmem:[%s3439 + $0x84] sm:$0xff]
      %v3463 = vld [vmem:[%s3439 + $0x8c] sm:$0xf]
      %v3464 = vld [vmem:[%s3439 + $0x90] sm:$0xff]
      %v3465 = vld [vmem:[%s3439 + $0x98] sm:$0xf]
      %v3466 = vld [vmem:[%s3439 + $0x9c] sm:$0xff]
      %v3467 = vld [vmem:[%s3439 + $0xa4] sm:$0xf]
      %v3468 = vld [vmem:[%s3439 + $0xa8] sm:$0xff]
      %v3469 = vld [vmem:[%s3439 + $0xb0] sm:$0xf]
      %v3470 = vld [vmem:[%s3439 + $0xb4] sm:$0xff]
      %v3471 = vld [vmem:[%s3439 + $0xbc] sm:$0xf]
      %v3504 = vunpack.c.l.b16 %v3407
      %v3505 = vunpack.c.l.b16 %v3408
      %v3506 = vunpack.c.l.b16 %v3409
      %v3507 = vunpack.c.l.b16 %v3410
      %v3508 = vunpack.c.l.b16 %v3411
      %v3509 = vunpack.c.l.b16 %v3412
      %v3510 = vunpack.c.l.b16 %v3413
      %v3511 = vunpack.c.l.b16 %v3414
      %v3512 = vunpack.c.l.b16 %v3415
      %v3513 = vunpack.c.l.b16 %v3416
      %v3514 = vunpack.c.l.b16 %v3417
      %v3515 = vunpack.c.l.b16 %v3418
      %v3516 = vunpack.c.l.b16 %v3419
      %v3517 = vunpack.c.l.b16 %v3420
      %v3518 = vunpack.c.l.b16 %v3421
      %v3519 = vunpack.c.l.b16 %v3422
      %v3520 = vunpack.c.l.b16 %v3423
      %v3521 = vunpack.c.l.b16 %v3424
      %v3522 = vunpack.c.l.b16 %v3425
      %v3523 = vunpack.c.l.b16 %v3426
      %v3524 = vunpack.c.l.b16 %v3427
      %v3525 = vunpack.c.l.b16 %v3428
      %v3526 = vunpack.c.l.b16 %v3429
      %v3527 = vunpack.c.l.b16 %v3430
      %v3528 = vunpack.c.l.b16 %v3431
      %v3529 = vunpack.c.l.b16 %v3432
      %v3530 = vunpack.c.l.b16 %v3433
      %v3531 = vunpack.c.l.b16 %v3434
      %v3532 = vunpack.c.l.b16 %v3435
      %v3533 = vunpack.c.l.b16 %v3436
      %v3534 = vunpack.c.l.b16 %v3437
      %v3535 = vunpack.c.l.b16 %v3438
      %v3536 = vpack.c.b16 %v3505, %v3504
      %v3537 = vpack.c.b16 %v3507, %v3506
      %v3538 = vpack.c.b16 %v3509, %v3508
      %v3539 = vpack.c.b16 %v3511, %v3510
      %v3540 = vpack.c.b16 %v3513, %v3512
      %v3541 = vpack.c.b16 %v3515, %v3514
      %v3542 = vpack.c.b16 %v3517, %v3516
      %v3543 = vpack.c.b16 %v3519, %v3518
      %v3544 = vpack.c.b16 %v3521, %v3520
      %v3545 = vpack.c.b16 %v3523, %v3522
      %v3546 = vpack.c.b16 %v3525, %v3524
      %v3547 = vpack.c.b16 %v3527, %v3526
      %v3548 = vpack.c.b16 %v3529, %v3528
      %v3549 = vpack.c.b16 %v3531, %v3530
      %v3550 = vpack.c.b16 %v3533, %v3532
      %v3551 = vpack.c.b16 %v3535, %v3534
      %v3600 = vunpack.c.l.b16 %v3440
      %v3601 = vunpack.c.h.b16 %v3440
      %v3602 = vunpack.c.l.b16 %v3441
      %v3603 = vunpack.c.l.b16 %v3442
      %v3604 = vunpack.c.h.b16 %v3442
      %v3605 = vunpack.c.l.b16 %v3443
      %v3606 = vunpack.c.l.b16 %v3444
      %v3607 = vunpack.c.h.b16 %v3444
      %v3608 = vunpack.c.l.b16 %v3445
      %v3609 = vunpack.c.l.b16 %v3446
      %v3610 = vunpack.c.h.b16 %v3446
      %v3611 = vunpack.c.l.b16 %v3447
      %v3612 = vunpack.c.l.b16 %v3448
      %v3613 = vunpack.c.h.b16 %v3448
      %v3614 = vunpack.c.l.b16 %v3449
      %v3615 = vunpack.c.l.b16 %v3450
      %v3616 = vunpack.c.h.b16 %v3450
      %v3617 = vunpack.c.l.b16 %v3451
      %v3618 = vunpack.c.l.b16 %v3452
      %v3619 = vunpack.c.h.b16 %v3452
      %v3620 = vunpack.c.l.b16 %v3453
      %v3621 = vunpack.c.l.b16 %v3454
      %v3622 = vunpack.c.h.b16 %v3454
      %v3623 = vunpack.c.l.b16 %v3455
      %v3624 = vunpack.c.l.b16 %v3456
      %v3625 = vunpack.c.h.b16 %v3456
      %v3626 = vunpack.c.l.b16 %v3457
      %v3627 = vunpack.c.l.b16 %v3458
      %v3628 = vunpack.c.h.b16 %v3458
      %v3629 = vunpack.c.l.b16 %v3459
      %v3630 = vunpack.c.l.b16 %v3460
      %v3631 = vunpack.c.h.b16 %v3460
      %v3632 = vunpack.c.l.b16 %v3461
      %v3633 = vunpack.c.l.b16 %v3462
      %v3634 = vunpack.c.h.b16 %v3462
      %v3635 = vunpack.c.l.b16 %v3463
      %v3636 = vunpack.c.l.b16 %v3464
      %v3637 = vunpack.c.h.b16 %v3464
      %v3638 = vunpack.c.l.b16 %v3465
      %v3639 = vunpack.c.l.b16 %v3466
      %v3640 = vunpack.c.h.b16 %v3466
      %v3641 = vunpack.c.l.b16 %v3467
      %v3642 = vunpack.c.l.b16 %v3468
      %v3643 = vunpack.c.h.b16 %v3468
      %v3644 = vunpack.c.l.b16 %v3469
      %v3645 = vunpack.c.l.b16 %v3470
      %v3646 = vunpack.c.h.b16 %v3470
      %v3647 = vunpack.c.l.b16 %v3471
      %v3648 = vpack.c.b16 %v3603, %v3600
      %v3649 = vpack.c.b16 %v3604, %v3601
      %v3650 = vpack.c.b16 %v3605, %v3602
      %v3651 = vpack.c.b16 %v3609, %v3606
      %v3652 = vpack.c.b16 %v3610, %v3607
      %v3653 = vpack.c.b16 %v3611, %v3608
      %v3654 = vpack.c.b16 %v3615, %v3612
      %v3655 = vpack.c.b16 %v3616, %v3613
      %v3656 = vpack.c.b16 %v3617, %v3614
      %v3657 = vpack.c.b16 %v3621, %v3618
      %v3658 = vpack.c.b16 %v3622, %v3619
      %v3659 = vpack.c.b16 %v3623, %v3620
      %v3660 = vpack.c.b16 %v3627, %v3624
      %v3661 = vpack.c.b16 %v3628, %v3625
      %v3662 = vpack.c.b16 %v3629, %v3626
      %v3663 = vpack.c.b16 %v3633, %v3630
      %v3664 = vpack.c.b16 %v3634, %v3631
      %v3665 = vpack.c.b16 %v3635, %v3632
      %v3666 = vpack.c.b16 %v3639, %v3636
      %v3667 = vpack.c.b16 %v3640, %v3637
      %v3668 = vpack.c.b16 %v3641, %v3638
      %v3669 = vpack.c.b16 %v3645, %v3642
      %v3670 = vpack.c.b16 %v3646, %v3643
      %v3671 = vpack.c.b16 %v3647, %v3644
      %3696 = vmatprep.subr.bf16.mxu0 %v3670
      %3697 = vmatpush1.bf16.msra.mxu0 %v3669
      %3698 = vmatprep.subr.bf16.mxu0 %v3667
      %3699 = vmatpush1.bf16.msra.mxu0 %v3666
      %3700 = vmatprep.subr.bf16.mxu0 %v3664
      %3701 = vmatpush1.bf16.msra.mxu0 %v3663
      %3702 = vmatprep.subr.bf16.mxu0 %v3661
      %3703 = vmatpush1.bf16.msra.mxu0 %v3660
      %3704 = vmatprep.subr.bf16.mxu0 %v3658
      %3705 = vmatpush1.bf16.msra.mxu0 %v3657
      %3706 = vmatprep.subr.bf16.mxu0 %v3655
      %3707 = vmatpush1.bf16.msra.mxu0 %v3654
      %3708 = vmatprep.subr.bf16.mxu0 %v3652
      %3709 = vmatpush1.bf16.msra.mxu0 %v3651
      %3710 = vmatprep.subr.bf16.mxu0 %v3649
      %3711 = vmatpush1.bf16.msra.mxu0 %v3648
      %3712 = vmatprep.subr.bf16.mxu0 0
      %3713 = vmatpush2.bf16.msra.mxu0 0
      %3714 = vmatprep.subr.bf16.mxu0 0
      %3715 = vmatpush2.bf16.msra.mxu0 0
      %3716 = vmatprep.subr.bf16.mxu0 0
      %3717 = vmatpush2.bf16.msra.mxu0 0
      %3718 = vmatprep.subr.bf16.mxu0 0
      %3719 = vmatpush2.bf16.msra.mxu0 0
      %3720 = vmatprep.subr.bf16.mxu0 0
      %3721 = vmatpush2.bf16.msra.mxu0 0
      %3722 = vmatprep.subr.bf16.mxu0 0
      %3723 = vmatpush2.bf16.msra.mxu0 0
      %3724 = vmatprep.subr.bf16.mxu0 0
      %3725 = vmatpush2.bf16.msra.mxu0 0
      %3726 = vmatprep.subr.bf16.mxu0 0
      %3727 = vmatpush2.bf16.msra.mxu0 0
      %3728 = vmatprep.mubr.bf16.mxu0 0
      %3729 = vmatmul.mubr.bf16.gmra.mxu0 %v3536
      %v3730 = vpop.f32.mrf.mxu0
      %v3731 = vadd.f32 0.0, %v3730
      %v3732 = vpop.f32.mrf.mxu0
      %v3733 = vadd.f32 0.0, %v3732
      %v3734 = vpop.f32.mrf.mxu0
      %v3735 = vadd.f32 0.0, %v3734
      %v3736 = vpop.f32.mrf.mxu0
      %v3737 = vadd.f32 0.0, %v3736
      %3738 = vmatprep.mubr.bf16.mxu0 0
      %3739 = vmatmul.mubr.bf16.gmra.mxu0 %v3537
      %v3740 = vpop.f32.mrf.mxu0
      %v3741 = vadd.f32 0.0, %v3740
      %v3742 = vpop.f32.mrf.mxu0
      %v3743 = vadd.f32 0.0, %v3742
      %v3744 = vpop.f32.mrf.mxu0
      %v3745 = vadd.f32 0.0, %v3744
      %v3746 = vpop.f32.mrf.mxu0
      %v3747 = vadd.f32 0.0, %v3746
      %3748 = vmatprep.mubr.bf16.mxu0 0
      %3749 = vmatmul.mubr.bf16.gmra.mxu0 %v3538
      %v3750 = vpop.f32.mrf.mxu0
      %v3751 = vadd.f32 0.0, %v3750
      %v3752 = vpop.f32.mrf.mxu0
      %v3753 = vadd.f32 0.0, %v3752
      %v3754 = vpop.f32.mrf.mxu0
      %v3755 = vadd.f32 0.0, %v3754
      %v3756 = vpop.f32.mrf.mxu0
      %v3757 = vadd.f32 0.0, %v3756
      %3758 = vmatprep.mubr.bf16.mxu0 0
      %3759 = vmatmul.mubr.bf16.gmra.mxu0 %v3539
      %v3760 = vpop.f32.mrf.mxu0
      %v3761 = vadd.f32 0.0, %v3760
      %v3762 = vpop.f32.mrf.mxu0
      %v3763 = vadd.f32 0.0, %v3762
      %v3764 = vpop.f32.mrf.mxu0
      %v3765 = vadd.f32 0.0, %v3764
      %v3766 = vpop.f32.mrf.mxu0
      %v3767 = vadd.f32 0.0, %v3766
      %3768 = vmatprep.mubr.bf16.mxu0 0
      %3769 = vmatmul.mubr.bf16.gmra.mxu0 %v3540
      %v3770 = vpop.f32.mrf.mxu0
      %v3771 = vadd.f32 0.0, %v3770
      %v3772 = vpop.f32.mrf.mxu0
      %v3773 = vadd.f32 0.0, %v3772
      %v3774 = vpop.f32.mrf.mxu0
      %v3775 = vadd.f32 0.0, %v3774
      %v3776 = vpop.f32.mrf.mxu0
      %v3777 = vadd.f32 0.0, %v3776
      %3778 = vmatprep.mubr.bf16.mxu0 0
      %3779 = vmatmul.mubr.bf16.gmra.mxu0 %v3541
      %v3780 = vpop.f32.mrf.mxu0
      %v3781 = vadd.f32 0.0, %v3780
      %v3782 = vpop.f32.mrf.mxu0
      %v3783 = vadd.f32 0.0, %v3782
      %v3784 = vpop.f32.mrf.mxu0
      %v3785 = vadd.f32 0.0, %v3784
      %v3786 = vpop.f32.mrf.mxu0
      %v3787 = vadd.f32 0.0, %v3786
      %3788 = vmatprep.mubr.bf16.mxu0 0
      %3789 = vmatmul.mubr.bf16.gmra.mxu0 %v3542
      %v3790 = vpop.f32.mrf.mxu0
      %v3791 = vadd.f32 0.0, %v3790
      %v3792 = vpop.f32.mrf.mxu0
      %v3793 = vadd.f32 0.0, %v3792
      %v3794 = vpop.f32.mrf.mxu0
      %v3795 = vadd.f32 0.0, %v3794
      %v3796 = vpop.f32.mrf.mxu0
      %v3797 = vadd.f32 0.0, %v3796
      %3798 = vmatprep.mubr.bf16.mxu0 0
      %3799 = vmatmul.mubr.bf16.gmra.mxu0 %v3543
      %v3800 = vpop.f32.mrf.mxu0
      %v3801 = vadd.f32 0.0, %v3800
      %v3802 = vpop.f32.mrf.mxu0
      %v3803 = vadd.f32 0.0, %v3802
      %v3804 = vpop.f32.mrf.mxu0
      %v3805 = vadd.f32 0.0, %v3804
      %v3806 = vpop.f32.mrf.mxu0
      %v3807 = vadd.f32 0.0, %v3806
      %3808 = vmatprep.mubr.bf16.mxu0 0
      %3809 = vmatmul.mubr.bf16.gmra.mxu0 %v3544
      %v3810 = vpop.f32.mrf.mxu0
      %v3811 = vadd.f32 0.0, %v3810
      %v3812 = vpop.f32.mrf.mxu0
      %v3813 = vadd.f32 0.0, %v3812
      %v3814 = vpop.f32.mrf.mxu0
      %v3815 = vadd.f32 0.0, %v3814
      %v3816 = vpop.f32.mrf.mxu0
      %v3817 = vadd.f32 0.0, %v3816
      %3818 = vmatprep.mubr.bf16.mxu0 0
      %3819 = vmatmul.mubr.bf16.gmra.mxu0 %v3545
      %v3820 = vpop.f32.mrf.mxu0
      %v3821 = vadd.f32 0.0, %v3820
      %v3822 = vpop.f32.mrf.mxu0
      %v3823 = vadd.f32 0.0, %v3822
      %v3824 = vpop.f32.mrf.mxu0
      %v3825 = vadd.f32 0.0, %v3824
      %v3826 = vpop.f32.mrf.mxu0
      %v3827 = vadd.f32 0.0, %v3826
      %3828 = vmatprep.mubr.bf16.mxu0 0
      %3829 = vmatmul.mubr.bf16.gmra.mxu0 %v3546
      %v3830 = vpop.f32.mrf.mxu0
      %v3831 = vadd.f32 0.0, %v3830
      %v3832 = vpop.f32.mrf.mxu0
      %v3833 = vadd.f32 0.0, %v3832
      %v3834 = vpop.f32.mrf.mxu0
      %v3835 = vadd.f32 0.0, %v3834
      %v3836 = vpop.f32.mrf.mxu0
      %v3837 = vadd.f32 0.0, %v3836
      %3838 = vmatprep.mubr.bf16.mxu0 0
      %3839 = vmatmul.mubr.bf16.gmra.mxu0 %v3547
      %v3840 = vpop.f32.mrf.mxu0
      %v3841 = vadd.f32 0.0, %v3840
      %v3842 = vpop.f32.mrf.mxu0
      %v3843 = vadd.f32 0.0, %v3842
      %v3844 = vpop.f32.mrf.mxu0
      %v3845 = vadd.f32 0.0, %v3844
      %v3846 = vpop.f32.mrf.mxu0
      %v3847 = vadd.f32 0.0, %v3846
      %3848 = vmatprep.mubr.bf16.mxu0 0
      %3849 = vmatmul.mubr.bf16.gmra.mxu0 %v3548
      %v3850 = vpop.f32.mrf.mxu0
      %v3851 = vadd.f32 0.0, %v3850
      %v3852 = vpop.f32.mrf.mxu0
      %v3853 = vadd.f32 0.0, %v3852
      %v3854 = vpop.f32.mrf.mxu0
      %v3855 = vadd.f32 0.0, %v3854
      %v3856 = vpop.f32.mrf.mxu0
      %v3857 = vadd.f32 0.0, %v3856
      %3858 = vmatprep.mubr.bf16.mxu0 0
      %3859 = vmatmul.mubr.bf16.gmra.mxu0 %v3549
      %v3860 = vpop.f32.mrf.mxu0
      %v3861 = vadd.f32 0.0, %v3860
      %v3862 = vpop.f32.mrf.mxu0
      %v3863 = vadd.f32 0.0, %v3862
      %v3864 = vpop.f32.mrf.mxu0
      %v3865 = vadd.f32 0.0, %v3864
      %v3866 = vpop.f32.mrf.mxu0
      %v3867 = vadd.f32 0.0, %v3866
      %3868 = vmatprep.mubr.bf16.mxu0 0
      %3869 = vmatmul.mubr.bf16.gmra.mxu0 %v3550
      %v3870 = vpop.f32.mrf.mxu0
      %v3871 = vadd.f32 0.0, %v3870
      %v3872 = vpop.f32.mrf.mxu0
      %v3873 = vadd.f32 0.0, %v3872
      %v3874 = vpop.f32.mrf.mxu0
      %v3875 = vadd.f32 0.0, %v3874
      %v3876 = vpop.f32.mrf.mxu0
      %v3877 = vadd.f32 0.0, %v3876
      %3878 = vmatprep.mubr.bf16.mxu0 0
      %3879 = vmatmul.mubr.bf16.gmra.mxu0 %v3551
      %v3880 = vpop.f32.mrf.mxu0
      %v3881 = vadd.f32 0.0, %v3880
      %v3882 = vpop.f32.mrf.mxu0
      %v3883 = vadd.f32 0.0, %v3882
      %v3884 = vpop.f32.mrf.mxu0
      %v3885 = vadd.f32 0.0, %v3884
      %v3886 = vpop.f32.mrf.mxu0
      %v3887 = vadd.f32 0.0, %v3886
      %3888 = vdwg.mxu0
      %3889 = vmatprep.subr.bf16.mxu0 0
      %3890 = vmatpush1.bf16.msra.mxu0 %v3671
      %3891 = vmatprep.subr.bf16.mxu0 0
      %3892 = vmatpush1.bf16.msra.mxu0 %v3668
      %3893 = vmatprep.subr.bf16.mxu0 0
      %3894 = vmatpush1.bf16.msra.mxu0 %v3665
      %3895 = vmatprep.subr.bf16.mxu0 0
      %3896 = vmatpush1.bf16.msra.mxu0 %v3662
      %3897 = vmatprep.subr.bf16.mxu0 0
      %3898 = vmatpush1.bf16.msra.mxu0 %v3659
      %3899 = vmatprep.subr.bf16.mxu0 0
      %3900 = vmatpush1.bf16.msra.mxu0 %v3656
      %3901 = vmatprep.subr.bf16.mxu0 0
      %3902 = vmatpush1.bf16.msra.mxu0 %v3653
      %3903 = vmatprep.subr.bf16.mxu0 0
      %3904 = vmatpush1.bf16.msra.mxu0 %v3650
      %3905 = vmatprep.subr.bf16.mxu0 0
      %3906 = vmatpush2.bf16.msra.mxu0 0
      %3907 = vmatprep.subr.bf16.mxu0 0
      %3908 = vmatpush2.bf16.msra.mxu0 0
      %3909 = vmatprep.subr.bf16.mxu0 0
      %3910 = vmatpush2.bf16.msra.mxu0 0
      %3911 = vmatprep.subr.bf16.mxu0 0
      %3912 = vmatpush2.bf16.msra.mxu0 0
      %3913 = vmatprep.subr.bf16.mxu0 0
      %3914 = vmatpush2.bf16.msra.mxu0 0
      %3915 = vmatprep.subr.bf16.mxu0 0
      %3916 = vmatpush2.bf16.msra.mxu0 0
      %3917 = vmatprep.subr.bf16.mxu0 0
      %3918 = vmatpush2.bf16.msra.mxu0 0
      %3919 = vmatprep.subr.bf16.mxu0 0
      %3920 = vmatpush2.bf16.msra.mxu0 0
      %3921 = vmatprep.mubr.bf16.mxu0 0
      %3922 = vmatmul.mubr.bf16.gmra.mxu0 %v3536
      %v3923 = vpop.f32.mrf.mxu0
      %v3924 = vadd.f32 0.0, %v3923
      %v3925 = vpop.f32.mrf.mxu0
      %v3926 = vpop.f32.mrf.mxu0
      %v3927 = vadd.f32 0.0, %v3926
      %v3928 = vpop.f32.mrf.mxu0
      %3929 = vmatprep.mubr.bf16.mxu0 0
      %3930 = vmatmul.mubr.bf16.gmra.mxu0 %v3537
      %v3931 = vpop.f32.mrf.mxu0
      %v3932 = vadd.f32 0.0, %v3931
      %v3933 = vpop.f32.mrf.mxu0
      %v3934 = vpop.f32.mrf.mxu0
      %v3935 = vadd.f32 0.0, %v3934
      %v3936 = vpop.f32.mrf.mxu0
      %3937 = vmatprep.mubr.bf16.mxu0 0
      %3938 = vmatmul.mubr.bf16.gmra.mxu0 %v3538
      %v3939 = vpop.f32.mrf.mxu0
      %v3940 = vadd.f32 0.0, %v3939
      %v3941 = vpop.f32.mrf.mxu0
      %v3942 = vpop.f32.mrf.mxu0
      %v3943 = vadd.f32 0.0, %v3942
      %v3944 = vpop.f32.mrf.mxu0
      %3945 = vmatprep.mubr.bf16.mxu0 0
      %3946 = vmatmul.mubr.bf16.gmra.mxu0 %v3539
      %v3947 = vpop.f32.mrf.mxu0
      %v3948 = vadd.f32 0.0, %v3947
      %v3949 = vpop.f32.mrf.mxu0
      %v3950 = vpop.f32.mrf.mxu0
      %v3951 = vadd.f32 0.0, %v3950
      %v3952 = vpop.f32.mrf.mxu0
      %3953 = vmatprep.mubr.bf16.mxu0 0
      %3954 = vmatmul.mubr.bf16.gmra.mxu0 %v3540
      %v3955 = vpop.f32.mrf.mxu0
      %v3956 = vadd.f32 0.0, %v3955
      %v3957 = vpop.f32.mrf.mxu0
      %v3958 = vpop.f32.mrf.mxu0
      %v3959 = vadd.f32 0.0, %v3958
      %v3960 = vpop.f32.mrf.mxu0
      %3961 = vmatprep.mubr.bf16.mxu0 0
      %3962 = vmatmul.mubr.bf16.gmra.mxu0 %v3541
      %v3963 = vpop.f32.mrf.mxu0
      %v3964 = vadd.f32 0.0, %v3963
      %v3965 = vpop.f32.mrf.mxu0
      %v3966 = vpop.f32.mrf.mxu0
      %v3967 = vadd.f32 0.0, %v3966
      %v3968 = vpop.f32.mrf.mxu0
      %3969 = vmatprep.mubr.bf16.mxu0 0
      %3970 = vmatmul.mubr.bf16.gmra.mxu0 %v3542
      %v3971 = vpop.f32.mrf.mxu0
      %v3972 = vadd.f32 0.0, %v3971
      %v3973 = vpop.f32.mrf.mxu0
      %v3974 = vpop.f32.mrf.mxu0
      %v3975 = vadd.f32 0.0, %v3974
      %v3976 = vpop.f32.mrf.mxu0
      %3977 = vmatprep.mubr.bf16.mxu0 0
      %3978 = vmatmul.mubr.bf16.gmra.mxu0 %v3543
      %v3979 = vpop.f32.mrf.mxu0
      %v3980 = vadd.f32 0.0, %v3979
      %v3981 = vpop.f32.mrf.mxu0
      %v3982 = vpop.f32.mrf.mxu0
      %v3983 = vadd.f32 0.0, %v3982
      %v3984 = vpop.f32.mrf.mxu0
      %3985 = vmatprep.mubr.bf16.mxu0 0
      %3986 = vmatmul.mubr.bf16.gmra.mxu0 %v3544
      %v3987 = vpop.f32.mrf.mxu0
      %v3988 = vadd.f32 0.0, %v3987
      %v3989 = vpop.f32.mrf.mxu0
      %v3990 = vpop.f32.mrf.mxu0
      %v3991 = vadd.f32 0.0, %v3990
      %v3992 = vpop.f32.mrf.mxu0
      %3993 = vmatprep.mubr.bf16.mxu0 0
      %3994 = vmatmul.mubr.bf16.gmra.mxu0 %v3545
      %v3995 = vpop.f32.mrf.mxu0
      %v3996 = vadd.f32 0.0, %v3995
      %v3997 = vpop.f32.mrf.mxu0
      %v3998 = vpop.f32.mrf.mxu0
      %v3999 = vadd.f32 0.0, %v3998
      %v4000 = vpop.f32.mrf.mxu0
      %4001 = vmatprep.mubr.bf16.mxu0 0
      %4002 = vmatmul.mubr.bf16.gmra.mxu0 %v3546
      %v4003 = vpop.f32.mrf.mxu0
      %v4004 = vadd.f32 0.0, %v4003
      %v4005 = vpop.f32.mrf.mxu0
      %v4006 = vpop.f32.mrf.mxu0
      %v4007 = vadd.f32 0.0, %v4006
      %v4008 = vpop.f32.mrf.mxu0
      %4009 = vmatprep.mubr.bf16.mxu0 0
      %4010 = vmatmul.mubr.bf16.gmra.mxu0 %v3547
      %v4011 = vpop.f32.mrf.mxu0
      %v4012 = vadd.f32 0.0, %v4011
      %v4013 = vpop.f32.mrf.mxu0
      %v4014 = vpop.f32.mrf.mxu0
      %v4015 = vadd.f32 0.0, %v4014
      %v4016 = vpop.f32.mrf.mxu0
      %4017 = vmatprep.mubr.bf16.mxu0 0
      %4018 = vmatmul.mubr.bf16.gmra.mxu0 %v3548
      %v4019 = vpop.f32.mrf.mxu0
      %v4020 = vadd.f32 0.0, %v4019
      %v4021 = vpop.f32.mrf.mxu0
      %v4022 = vpop.f32.mrf.mxu0
      %v4023 = vadd.f32 0.0, %v4022
      %v4024 = vpop.f32.mrf.mxu0
      %4025 = vmatprep.mubr.bf16.mxu0 0
      %4026 = vmatmul.mubr.bf16.gmra.mxu0 %v3549
      %v4027 = vpop.f32.mrf.mxu0
      %v4028 = vadd.f32 0.0, %v4027
      %v4029 = vpop.f32.mrf.mxu0
      %v4030 = vpop.f32.mrf.mxu0
      %v4031 = vadd.f32 0.0, %v4030
      %v4032 = vpop.f32.mrf.mxu0
      %4033 = vmatprep.mubr.bf16.mxu0 0
      %4034 = vmatmul.mubr.bf16.gmra.mxu0 %v3550
      %v4035 = vpop.f32.mrf.mxu0
      %v4036 = vadd.f32 0.0, %v4035
      %v4037 = vpop.f32.mrf.mxu0
      %v4038 = vpop.f32.mrf.mxu0
      %v4039 = vadd.f32 0.0, %v4038
      %v4040 = vpop.f32.mrf.mxu0
      %4041 = vmatprep.mubr.bf16.mxu0 0
      %4042 = vmatmul.mubr.bf16.gmra.mxu0 %v3551
      %v4043 = vpop.f32.mrf.mxu0
      %v4044 = vadd.f32 0.0, %v4043
      %v4045 = vpop.f32.mrf.mxu0
      %v4046 = vpop.f32.mrf.mxu0
      %v4047 = vadd.f32 0.0, %v4046
      %v4048 = vpop.f32.mrf.mxu0
      %4049 = vdwg.mxu0
      %v4082 = vunpack.c.l.b16 %v3342
      %v4083 = vunpack.c.l.b16 %v3343
      %v4084 = vunpack.c.l.b16 %v3344
      %v4085 = vunpack.c.l.b16 %v3345
      %v4086 = vunpack.c.l.b16 %v3346
      %v4087 = vunpack.c.l.b16 %v3347
      %v4088 = vunpack.c.l.b16 %v3348
      %v4089 = vunpack.c.l.b16 %v3349
      %v4090 = vunpack.c.l.b16 %v3350
      %v4091 = vunpack.c.l.b16 %v3351
      %v4092 = vunpack.c.l.b16 %v3352
      %v4093 = vunpack.c.l.b16 %v3353
      %v4094 = vunpack.c.l.b16 %v3354
      %v4095 = vunpack.c.l.b16 %v3355
      %v4096 = vunpack.c.l.b16 %v3356
      %v4097 = vunpack.c.l.b16 %v3357
      %v4098 = vunpack.c.l.b16 %v3358
      %v4099 = vunpack.c.l.b16 %v3359
      %v4100 = vunpack.c.l.b16 %v3360
      %v4101 = vunpack.c.l.b16 %v3361
      %v4102 = vunpack.c.l.b16 %v3362
      %v4103 = vunpack.c.l.b16 %v3363
      %v4104 = vunpack.c.l.b16 %v3364
      %v4105 = vunpack.c.l.b16 %v3365
      %v4106 = vunpack.c.l.b16 %v3366
      %v4107 = vunpack.c.l.b16 %v3367
      %v4108 = vunpack.c.l.b16 %v3368
      %v4109 = vunpack.c.l.b16 %v3369
      %v4110 = vunpack.c.l.b16 %v3370
      %v4111 = vunpack.c.l.b16 %v3371
      %v4112 = vunpack.c.l.b16 %v3372
      %v4113 = vunpack.c.l.b16 %v3373
      %v4114 = vpack.c.b16 %v4083, %v4082
      %v4115 = vpack.c.b16 %v4085, %v4084
      %v4116 = vpack.c.b16 %v4087, %v4086
      %v4117 = vpack.c.b16 %v4089, %v4088
      %v4118 = vpack.c.b16 %v4091, %v4090
      %v4119 = vpack.c.b16 %v4093, %v4092
      %v4120 = vpack.c.b16 %v4095, %v4094
      %v4121 = vpack.c.b16 %v4097, %v4096
      %v4122 = vpack.c.b16 %v4099, %v4098
      %v4123 = vpack.c.b16 %v4101, %v4100
      %v4124 = vpack.c.b16 %v4103, %v4102
      %v4125 = vpack.c.b16 %v4105, %v4104
      %v4126 = vpack.c.b16 %v4107, %v4106
      %v4127 = vpack.c.b16 %v4109, %v4108
      %v4128 = vpack.c.b16 %v4111, %v4110
      %v4129 = vpack.c.b16 %v4113, %v4112
      %v4178 = vunpack.c.l.b16 %v3374
      %v4179 = vunpack.c.h.b16 %v3374
      %v4180 = vunpack.c.l.b16 %v3375
      %v4181 = vunpack.c.l.b16 %v3376
      %v4182 = vunpack.c.h.b16 %v3376
      %v4183 = vunpack.c.l.b16 %v3377
      %v4184 = vunpack.c.l.b16 %v3378
      %v4185 = vunpack.c.h.b16 %v3378
      %v4186 = vunpack.c.l.b16 %v3379
      %v4187 = vunpack.c.l.b16 %v3380
      %v4188 = vunpack.c.h.b16 %v3380
      %v4189 = vunpack.c.l.b16 %v3381
      %v4190 = vunpack.c.l.b16 %v3382
      %v4191 = vunpack.c.h.b16 %v3382
      %v4192 = vunpack.c.l.b16 %v3383
      %v4193 = vunpack.c.l.b16 %v3384
      %v4194 = vunpack.c.h.b16 %v3384
      %v4195 = vunpack.c.l.b16 %v3385
      %v4196 = vunpack.c.l.b16 %v3386
      %v4197 = vunpack.c.h.b16 %v3386
      %v4198 = vunpack.c.l.b16 %v3387
      %v4199 = vunpack.c.l.b16 %v3388
      %v4200 = vunpack.c.h.b16 %v3388
      %v4201 = vunpack.c.l.b16 %v3389
      %v4202 = vunpack.c.l.b16 %v3390
      %v4203 = vunpack.c.h.b16 %v3390
      %v4204 = vunpack.c.l.b16 %v3391
      %v4205 = vunpack.c.l.b16 %v3392
      %v4206 = vunpack.c.h.b16 %v3392
      %v4207 = vunpack.c.l.b16 %v3393
      %v4208 = vunpack.c.l.b16 %v3394
      %v4209 = vunpack.c.h.b16 %v3394
      %v4210 = vunpack.c.l.b16 %v3395
      %v4211 = vunpack.c.l.b16 %v3396
      %v4212 = vunpack.c.h.b16 %v3396
      %v4213 = vunpack.c.l.b16 %v3397
      %v4214 = vunpack.c.l.b16 %v3398
      %v4215 = vunpack.c.h.b16 %v3398
      %v4216 = vunpack.c.l.b16 %v3399
      %v4217 = vunpack.c.l.b16 %v3400
      %v4218 = vunpack.c.h.b16 %v3400
      %v4219 = vunpack.c.l.b16 %v3401
      %v4220 = vunpack.c.l.b16 %v3402
      %v4221 = vunpack.c.h.b16 %v3402
      %v4222 = vunpack.c.l.b16 %v3403
      %v4223 = vunpack.c.l.b16 %v3404
      %v4224 = vunpack.c.h.b16 %v3404
      %v4225 = vunpack.c.l.b16 %v3405
      %v4226 = vpack.c.b16 %v4181, %v4178
      %v4227 = vpack.c.b16 %v4182, %v4179
      %v4228 = vpack.c.b16 %v4183, %v4180
      %v4229 = vpack.c.b16 %v4187, %v4184
      %v4230 = vpack.c.b16 %v4188, %v4185
      %v4231 = vpack.c.b16 %v4189, %v4186
      %v4232 = vpack.c.b16 %v4193, %v4190
      %v4233 = vpack.c.b16 %v4194, %v4191
      %v4234 = vpack.c.b16 %v4195, %v4192
      %v4235 = vpack.c.b16 %v4199, %v4196
      %v4236 = vpack.c.b16 %v4200, %v4197
      %v4237 = vpack.c.b16 %v4201, %v4198
      %v4238 = vpack.c.b16 %v4205, %v4202
      %v4239 = vpack.c.b16 %v4206, %v4203
      %v4240 = vpack.c.b16 %v4207, %v4204
      %v4241 = vpack.c.b16 %v4211, %v4208
      %v4242 = vpack.c.b16 %v4212, %v4209
      %v4243 = vpack.c.b16 %v4213, %v4210
      %v4244 = vpack.c.b16 %v4217, %v4214
      %v4245 = vpack.c.b16 %v4218, %v4215
      %v4246 = vpack.c.b16 %v4219, %v4216
      %v4247 = vpack.c.b16 %v4223, %v4220
      %v4248 = vpack.c.b16 %v4224, %v4221
      %v4249 = vpack.c.b16 %v4225, %v4222
      %4274 = vmatprep.subr.bf16.mxu0 %v4248
      %4275 = vmatpush1.bf16.msra.mxu0 %v4247
      %4276 = vmatprep.subr.bf16.mxu0 %v4245
      %4277 = vmatpush1.bf16.msra.mxu0 %v4244
      %4278 = vmatprep.subr.bf16.mxu0 %v4242
      %4279 = vmatpush1.bf16.msra.mxu0 %v4241
      %4280 = vmatprep.subr.bf16.mxu0 %v4239
      %4281 = vmatpush1.bf16.msra.mxu0 %v4238
      %4282 = vmatprep.subr.bf16.mxu0 %v4236
      %4283 = vmatpush1.bf16.msra.mxu0 %v4235
      %4284 = vmatprep.subr.bf16.mxu0 %v4233
      %4285 = vmatpush1.bf16.msra.mxu0 %v4232
      %4286 = vmatprep.subr.bf16.mxu0 %v4230
      %4287 = vmatpush1.bf16.msra.mxu0 %v4229
      %4288 = vmatprep.subr.bf16.mxu0 %v4227
      %4289 = vmatpush1.bf16.msra.mxu0 %v4226
      %4290 = vmatprep.subr.bf16.mxu0 0
      %4291 = vmatpush2.bf16.msra.mxu0 0
      %4292 = vmatprep.subr.bf16.mxu0 0
      %4293 = vmatpush2.bf16.msra.mxu0 0
      %4294 = vmatprep.subr.bf16.mxu0 0
      %4295 = vmatpush2.bf16.msra.mxu0 0
      %4296 = vmatprep.subr.bf16.mxu0 0
      %4297 = vmatpush2.bf16.msra.mxu0 0
      %4298 = vmatprep.subr.bf16.mxu0 0
      %4299 = vmatpush2.bf16.msra.mxu0 0
      %4300 = vmatprep.subr.bf16.mxu0 0
      %4301 = vmatpush2.bf16.msra.mxu0 0
      %4302 = vmatprep.subr.bf16.mxu0 0
      %4303 = vmatpush2.bf16.msra.mxu0 0
      %4304 = vmatprep.subr.bf16.mxu0 0
      %4305 = vmatpush2.bf16.msra.mxu0 0
      %4306 = vmatprep.mubr.bf16.mxu0 0
      %4307 = vmatmul.mubr.bf16.gmra.mxu0 %v4114
      %v4308 = vpop.f32.mrf.mxu0
      %v4309 = vadd.f32 %v3731, %v4308
      %v4310 = vpop.f32.mrf.mxu0
      %v4311 = vadd.f32 %v3733, %v4310
      %v4312 = vpop.f32.mrf.mxu0
      %v4313 = vadd.f32 %v3735, %v4312
      %v4314 = vpop.f32.mrf.mxu0
      %v4315 = vadd.f32 %v3737, %v4314
      %4316 = vmatprep.mubr.bf16.mxu0 0
      %4317 = vmatmul.mubr.bf16.gmra.mxu0 %v4115
      %v4318 = vpop.f32.mrf.mxu0
      %v4319 = vadd.f32 %v3741, %v4318
      %v4320 = vpop.f32.mrf.mxu0
      %v4321 = vadd.f32 %v3743, %v4320
      %v4322 = vpop.f32.mrf.mxu0
      %v4323 = vadd.f32 %v3745, %v4322
      %v4324 = vpop.f32.mrf.mxu0
      %v4325 = vadd.f32 %v3747, %v4324
      %4326 = vmatprep.mubr.bf16.mxu0 0
      %4327 = vmatmul.mubr.bf16.gmra.mxu0 %v4116
      %v4328 = vpop.f32.mrf.mxu0
      %v4329 = vadd.f32 %v3751, %v4328
      %v4330 = vpop.f32.mrf.mxu0
      %v4331 = vadd.f32 %v3753, %v4330
      %v4332 = vpop.f32.mrf.mxu0
      %v4333 = vadd.f32 %v3755, %v4332
      %v4334 = vpop.f32.mrf.mxu0
      %v4335 = vadd.f32 %v3757, %v4334
      %4336 = vmatprep.mubr.bf16.mxu0 0
      %4337 = vmatmul.mubr.bf16.gmra.mxu0 %v4117
      %v4338 = vpop.f32.mrf.mxu0
      %v4339 = vadd.f32 %v3761, %v4338
      %v4340 = vpop.f32.mrf.mxu0
      %v4341 = vadd.f32 %v3763, %v4340
      %v4342 = vpop.f32.mrf.mxu0
      %v4343 = vadd.f32 %v3765, %v4342
      %v4344 = vpop.f32.mrf.mxu0
      %v4345 = vadd.f32 %v3767, %v4344
      %4346 = vmatprep.mubr.bf16.mxu0 0
      %4347 = vmatmul.mubr.bf16.gmra.mxu0 %v4118
      %v4348 = vpop.f32.mrf.mxu0
      %v4349 = vadd.f32 %v3771, %v4348
      %v4350 = vpop.f32.mrf.mxu0
      %v4351 = vadd.f32 %v3773, %v4350
      %v4352 = vpop.f32.mrf.mxu0
      %v4353 = vadd.f32 %v3775, %v4352
      %v4354 = vpop.f32.mrf.mxu0
      %v4355 = vadd.f32 %v3777, %v4354
      %4356 = vmatprep.mubr.bf16.mxu0 0
      %4357 = vmatmul.mubr.bf16.gmra.mxu0 %v4119
      %v4358 = vpop.f32.mrf.mxu0
      %v4359 = vadd.f32 %v3781, %v4358
      %v4360 = vpop.f32.mrf.mxu0
      %v4361 = vadd.f32 %v3783, %v4360
      %v4362 = vpop.f32.mrf.mxu0
      %v4363 = vadd.f32 %v3785, %v4362
      %v4364 = vpop.f32.mrf.mxu0
      %v4365 = vadd.f32 %v3787, %v4364
      %4366 = vmatprep.mubr.bf16.mxu0 0
      %4367 = vmatmul.mubr.bf16.gmra.mxu0 %v4120
      %v4368 = vpop.f32.mrf.mxu0
      %v4369 = vadd.f32 %v3791, %v4368
      %v4370 = vpop.f32.mrf.mxu0
      %v4371 = vadd.f32 %v3793, %v4370
      %v4372 = vpop.f32.mrf.mxu0
      %v4373 = vadd.f32 %v3795, %v4372
      %v4374 = vpop.f32.mrf.mxu0
      %v4375 = vadd.f32 %v3797, %v4374
      %4376 = vmatprep.mubr.bf16.mxu0 0
      %4377 = vmatmul.mubr.bf16.gmra.mxu0 %v4121
      %v4378 = vpop.f32.mrf.mxu0
      %v4379 = vadd.f32 %v3801, %v4378
      %v4380 = vpop.f32.mrf.mxu0
      %v4381 = vadd.f32 %v3803, %v4380
      %v4382 = vpop.f32.mrf.mxu0
      %v4383 = vadd.f32 %v3805, %v4382
      %v4384 = vpop.f32.mrf.mxu0
      %v4385 = vadd.f32 %v3807, %v4384
      %4386 = vmatprep.mubr.bf16.mxu0 0
      %4387 = vmatmul.mubr.bf16.gmra.mxu0 %v4122
      %v4388 = vpop.f32.mrf.mxu0
      %v4389 = vadd.f32 %v3811, %v4388
      %v4390 = vpop.f32.mrf.mxu0
      %v4391 = vadd.f32 %v3813, %v4390
      %v4392 = vpop.f32.mrf.mxu0
      %v4393 = vadd.f32 %v3815, %v4392
      %v4394 = vpop.f32.mrf.mxu0
      %v4395 = vadd.f32 %v3817, %v4394
      %4396 = vmatprep.mubr.bf16.mxu0 0
      %4397 = vmatmul.mubr.bf16.gmra.mxu0 %v4123
      %v4398 = vpop.f32.mrf.mxu0
      %v4399 = vadd.f32 %v3821, %v4398
      %v4400 = vpop.f32.mrf.mxu0
      %v4401 = vadd.f32 %v3823, %v4400
      %v4402 = vpop.f32.mrf.mxu0
      %v4403 = vadd.f32 %v3825, %v4402
      %v4404 = vpop.f32.mrf.mxu0
      %v4405 = vadd.f32 %v3827, %v4404
      %4406 = vmatprep.mubr.bf16.mxu0 0
      %4407 = vmatmul.mubr.bf16.gmra.mxu0 %v4124
      %v4408 = vpop.f32.mrf.mxu0
      %v4409 = vadd.f32 %v3831, %v4408
      %v4410 = vpop.f32.mrf.mxu0
      %v4411 = vadd.f32 %v3833, %v4410
      %v4412 = vpop.f32.mrf.mxu0
      %v4413 = vadd.f32 %v3835, %v4412
      %v4414 = vpop.f32.mrf.mxu0
      %v4415 = vadd.f32 %v3837, %v4414
      %4416 = vmatprep.mubr.bf16.mxu0 0
      %4417 = vmatmul.mubr.bf16.gmra.mxu0 %v4125
      %v4418 = vpop.f32.mrf.mxu0
      %v4419 = vadd.f32 %v3841, %v4418
      %v4420 = vpop.f32.mrf.mxu0
      %v4421 = vadd.f32 %v3843, %v4420
      %v4422 = vpop.f32.mrf.mxu0
      %v4423 = vadd.f32 %v3845, %v4422
      %v4424 = vpop.f32.mrf.mxu0
      %v4425 = vadd.f32 %v3847, %v4424
      %4426 = vmatprep.mubr.bf16.mxu0 0
      %4427 = vmatmul.mubr.bf16.gmra.mxu0 %v4126
      %v4428 = vpop.f32.mrf.mxu0
      %v4429 = vadd.f32 %v3851, %v4428
      %v4430 = vpop.f32.mrf.mxu0
      %v4431 = vadd.f32 %v3853, %v4430
      %v4432 = vpop.f32.mrf.mxu0
      %v4433 = vadd.f32 %v3855, %v4432
      %v4434 = vpop.f32.mrf.mxu0
      %v4435 = vadd.f32 %v3857, %v4434
      %4436 = vmatprep.mubr.bf16.mxu0 0
      %4437 = vmatmul.mubr.bf16.gmra.mxu0 %v4127
      %v4438 = vpop.f32.mrf.mxu0
      %v4439 = vadd.f32 %v3861, %v4438
      %v4440 = vpop.f32.mrf.mxu0
      %v4441 = vadd.f32 %v3863, %v4440
      %v4442 = vpop.f32.mrf.mxu0
      %v4443 = vadd.f32 %v3865, %v4442
      %v4444 = vpop.f32.mrf.mxu0
      %v4445 = vadd.f32 %v3867, %v4444
      %4446 = vmatprep.mubr.bf16.mxu0 0
      %4447 = vmatmul.mubr.bf16.gmra.mxu0 %v4128
      %v4448 = vpop.f32.mrf.mxu0
      %v4449 = vadd.f32 %v3871, %v4448
      %v4450 = vpop.f32.mrf.mxu0
      %v4451 = vadd.f32 %v3873, %v4450
      %v4452 = vpop.f32.mrf.mxu0
      %v4453 = vadd.f32 %v3875, %v4452
      %v4454 = vpop.f32.mrf.mxu0
      %v4455 = vadd.f32 %v3877, %v4454
      %4456 = vmatprep.mubr.bf16.mxu0 0
      %4457 = vmatmul.mubr.bf16.gmra.mxu0 %v4129
      %v4458 = vpop.f32.mrf.mxu0
      %v4459 = vadd.f32 %v3881, %v4458
      %v4460 = vpop.f32.mrf.mxu0
      %v4461 = vadd.f32 %v3883, %v4460
      %v4462 = vpop.f32.mrf.mxu0
      %v4463 = vadd.f32 %v3885, %v4462
      %v4464 = vpop.f32.mrf.mxu0
      %v4465 = vadd.f32 %v3887, %v4464
      %4466 = vdwg.mxu0
      %4467 = vmatprep.subr.bf16.mxu0 0
      %4468 = vmatpush1.bf16.msra.mxu0 %v4249
      %4469 = vmatprep.subr.bf16.mxu0 0
      %4470 = vmatpush1.bf16.msra.mxu0 %v4246
      %4471 = vmatprep.subr.bf16.mxu0 0
      %4472 = vmatpush1.bf16.msra.mxu0 %v4243
      %4473 = vmatprep.subr.bf16.mxu0 0
      %4474 = vmatpush1.bf16.msra.mxu0 %v4240
      %4475 = vmatprep.subr.bf16.mxu0 0
      %4476 = vmatpush1.bf16.msra.mxu0 %v4237
      %4477 = vmatprep.subr.bf16.mxu0 0
      %4478 = vmatpush1.bf16.msra.mxu0 %v4234
      %4479 = vmatprep.subr.bf16.mxu0 0
      %4480 = vmatpush1.bf16.msra.mxu0 %v4231
      %4481 = vmatprep.subr.bf16.mxu0 0
      %4482 = vmatpush1.bf16.msra.mxu0 %v4228
      %4483 = vmatprep.subr.bf16.mxu0 0
      %4484 = vmatpush2.bf16.msra.mxu0 0
      %4485 = vmatprep.subr.bf16.mxu0 0
      %4486 = vmatpush2.bf16.msra.mxu0 0
      %4487 = vmatprep.subr.bf16.mxu0 0
      %4488 = vmatpush2.bf16.msra.mxu0 0
      %4489 = vmatprep.subr.bf16.mxu0 0
      %4490 = vmatpush2.bf16.msra.mxu0 0
      %4491 = vmatprep.subr.bf16.mxu0 0
      %4492 = vmatpush2.bf16.msra.mxu0 0
      %4493 = vmatprep.subr.bf16.mxu0 0
      %4494 = vmatpush2.bf16.msra.mxu0 0
      %4495 = vmatprep.subr.bf16.mxu0 0
      %4496 = vmatpush2.bf16.msra.mxu0 0
      %4497 = vmatprep.subr.bf16.mxu0 0
      %4498 = vmatpush2.bf16.msra.mxu0 0
      %4499 = vmatprep.mubr.bf16.mxu0 0
      %4500 = vmatmul.mubr.bf16.gmra.mxu0 %v4114
      %v4501 = vpop.f32.mrf.mxu0
      %v4502 = vadd.f32 %v3924, %v4501
      %v4503 = vpop.f32.mrf.mxu0
      %v4504 = vpop.f32.mrf.mxu0
      %v4505 = vadd.f32 %v3927, %v4504
      %v4506 = vpop.f32.mrf.mxu0
      %4507 = vmatprep.mubr.bf16.mxu0 0
      %4508 = vmatmul.mubr.bf16.gmra.mxu0 %v4115
      %v4509 = vpop.f32.mrf.mxu0
      %v4510 = vadd.f32 %v3932, %v4509
      %v4511 = vpop.f32.mrf.mxu0
      %v4512 = vpop.f32.mrf.mxu0
      %v4513 = vadd.f32 %v3935, %v4512
      %v4514 = vpop.f32.mrf.mxu0
      %4515 = vmatprep.mubr.bf16.mxu0 0
      %4516 = vmatmul.mubr.bf16.gmra.mxu0 %v4116
      %v4517 = vpop.f32.mrf.mxu0
      %v4518 = vadd.f32 %v3940, %v4517
      %v4519 = vpop.f32.mrf.mxu0
      %v4520 = vpop.f32.mrf.mxu0
      %v4521 = vadd.f32 %v3943, %v4520
      %v4522 = vpop.f32.mrf.mxu0
      %4523 = vmatprep.mubr.bf16.mxu0 0
      %4524 = vmatmul.mubr.bf16.gmra.mxu0 %v4117
      %v4525 = vpop.f32.mrf.mxu0
      %v4526 = vadd.f32 %v3948, %v4525
      %v4527 = vpop.f32.mrf.mxu0
      %v4528 = vpop.f32.mrf.mxu0
      %v4529 = vadd.f32 %v3951, %v4528
      %v4530 = vpop.f32.mrf.mxu0
      %4531 = vmatprep.mubr.bf16.mxu0 0
      %4532 = vmatmul.mubr.bf16.gmra.mxu0 %v4118
      %v4533 = vpop.f32.mrf.mxu0
      %v4534 = vadd.f32 %v3956, %v4533
      %v4535 = vpop.f32.mrf.mxu0
      %v4536 = vpop.f32.mrf.mxu0
      %v4537 = vadd.f32 %v3959, %v4536
      %v4538 = vpop.f32.mrf.mxu0
      %4539 = vmatprep.mubr.bf16.mxu0 0
      %4540 = vmatmul.mubr.bf16.gmra.mxu0 %v4119
      %v4541 = vpop.f32.mrf.mxu0
      %v4542 = vadd.f32 %v3964, %v4541
      %v4543 = vpop.f32.mrf.mxu0
      %v4544 = vpop.f32.mrf.mxu0
      %v4545 = vadd.f32 %v3967, %v4544
      %v4546 = vpop.f32.mrf.mxu0
      %4547 = vmatprep.mubr.bf16.mxu0 0
      %4548 = vmatmul.mubr.bf16.gmra.mxu0 %v4120
      %v4549 = vpop.f32.mrf.mxu0
      %v4550 = vadd.f32 %v3972, %v4549
      %v4551 = vpop.f32.mrf.mxu0
      %v4552 = vpop.f32.mrf.mxu0
      %v4553 = vadd.f32 %v3975, %v4552
      %v4554 = vpop.f32.mrf.mxu0
      %4555 = vmatprep.mubr.bf16.mxu0 0
      %4556 = vmatmul.mubr.bf16.gmra.mxu0 %v4121
      %v4557 = vpop.f32.mrf.mxu0
      %v4558 = vadd.f32 %v3980, %v4557
      %v4559 = vpop.f32.mrf.mxu0
      %v4560 = vpop.f32.mrf.mxu0
      %v4561 = vadd.f32 %v3983, %v4560
      %v4562 = vpop.f32.mrf.mxu0
      %4563 = vmatprep.mubr.bf16.mxu0 0
      %4564 = vmatmul.mubr.bf16.gmra.mxu0 %v4122
      %v4565 = vpop.f32.mrf.mxu0
      %v4566 = vadd.f32 %v3988, %v4565
      %v4567 = vpop.f32.mrf.mxu0
      %v4568 = vpop.f32.mrf.mxu0
      %v4569 = vadd.f32 %v3991, %v4568
      %v4570 = vpop.f32.mrf.mxu0
      %4571 = vmatprep.mubr.bf16.mxu0 0
      %4572 = vmatmul.mubr.bf16.gmra.mxu0 %v4123
      %v4573 = vpop.f32.mrf.mxu0
      %v4574 = vadd.f32 %v3996, %v4573
      %v4575 = vpop.f32.mrf.mxu0
      %v4576 = vpop.f32.mrf.mxu0
      %v4577 = vadd.f32 %v3999, %v4576
      %v4578 = vpop.f32.mrf.mxu0
      %4579 = vmatprep.mubr.bf16.mxu0 0
      %4580 = vmatmul.mubr.bf16.gmra.mxu0 %v4124
      %v4581 = vpop.f32.mrf.mxu0
      %v4582 = vadd.f32 %v4004, %v4581
      %v4583 = vpop.f32.mrf.mxu0
      %v4584 = vpop.f32.mrf.mxu0
      %v4585 = vadd.f32 %v4007, %v4584
      %v4586 = vpop.f32.mrf.mxu0
      %4587 = vmatprep.mubr.bf16.mxu0 0
      %4588 = vmatmul.mubr.bf16.gmra.mxu0 %v4125
      %v4589 = vpop.f32.mrf.mxu0
      %v4590 = vadd.f32 %v4012, %v4589
      %v4591 = vpop.f32.mrf.mxu0
      %v4592 = vpop.f32.mrf.mxu0
      %v4593 = vadd.f32 %v4015, %v4592
      %v4594 = vpop.f32.mrf.mxu0
      %4595 = vmatprep.mubr.bf16.mxu0 0
      %4596 = vmatmul.mubr.bf16.gmra.mxu0 %v4126
      %v4597 = vpop.f32.mrf.mxu0
      %v4598 = vadd.f32 %v4020, %v4597
      %v4599 = vpop.f32.mrf.mxu0
      %v4600 = vpop.f32.mrf.mxu0
      %v4601 = vadd.f32 %v4023, %v4600
      %v4602 = vpop.f32.mrf.mxu0
      %4603 = vmatprep.mubr.bf16.mxu0 0
      %4604 = vmatmul.mubr.bf16.gmra.mxu0 %v4127
      %v4605 = vpop.f32.mrf.mxu0
      %v4606 = vadd.f32 %v4028, %v4605
      %v4607 = vpop.f32.mrf.mxu0
      %v4608 = vpop.f32.mrf.mxu0
      %v4609 = vadd.f32 %v4031, %v4608
      %v4610 = vpop.f32.mrf.mxu0
      %4611 = vmatprep.mubr.bf16.mxu0 0
      %4612 = vmatmul.mubr.bf16.gmra.mxu0 %v4128
      %v4613 = vpop.f32.mrf.mxu0
      %v4614 = vadd.f32 %v4036, %v4613
      %v4615 = vpop.f32.mrf.mxu0
      %v4616 = vpop.f32.mrf.mxu0
      %v4617 = vadd.f32 %v4039, %v4616
      %v4618 = vpop.f32.mrf.mxu0
      %4619 = vmatprep.mubr.bf16.mxu0 0
      %4620 = vmatmul.mubr.bf16.gmra.mxu0 %v4129
      %v4621 = vpop.f32.mrf.mxu0
      %v4622 = vadd.f32 %v4044, %v4621
      %v4623 = vpop.f32.mrf.mxu0
      %v4624 = vpop.f32.mrf.mxu0
      %v4625 = vadd.f32 %v4047, %v4624
      %v4626 = vpop.f32.mrf.mxu0
      %4627 = vdwg.mxu0
      %s4628 = scalar_lea.vmem [#allocation3], 16
      %v4629 = vld [vmem:[%s4628] sm:$0xf]
      %v4630 = vld [vmem:[%s4628 + $0x4] sm:$0xf]
      %v4631 = vld [vmem:[%s4628 + $0x8] sm:$0xf]
      %v4632 = vld [vmem:[%s4628 + $0xc] sm:$0xf]
      %v4633 = vld [vmem:[%s4628 + $0x10] sm:$0xf]
      %v4634 = vld [vmem:[%s4628 + $0x14] sm:$0xf]
      %v4635 = vld [vmem:[%s4628 + $0x18] sm:$0xf]
      %v4636 = vld [vmem:[%s4628 + $0x1c] sm:$0xf]
      %v4637 = vld [vmem:[%s4628 + $0x20] sm:$0xf]
      %v4638 = vld [vmem:[%s4628 + $0x24] sm:$0xf]
      %v4639 = vld [vmem:[%s4628 + $0x28] sm:$0xf]
      %v4640 = vld [vmem:[%s4628 + $0x2c] sm:$0xf]
      %v4641 = vld [vmem:[%s4628 + $0x30] sm:$0xf]
      %v4642 = vld [vmem:[%s4628 + $0x34] sm:$0xf]
      %v4643 = vld [vmem:[%s4628 + $0x38] sm:$0xf]
      %v4644 = vld [vmem:[%s4628 + $0x3c] sm:$0xf]
      %v4645 = vld [vmem:[%s4628 + $0x40] sm:$0xf]
      %v4646 = vld [vmem:[%s4628 + $0x44] sm:$0xf]
      %v4647 = vld [vmem:[%s4628 + $0x48] sm:$0xf]
      %v4648 = vld [vmem:[%s4628 + $0x4c] sm:$0xf]
      %v4649 = vld [vmem:[%s4628 + $0x50] sm:$0xf]
      %v4650 = vld [vmem:[%s4628 + $0x54] sm:$0xf]
      %v4651 = vld [vmem:[%s4628 + $0x58] sm:$0xf]
      %v4652 = vld [vmem:[%s4628 + $0x5c] sm:$0xf]
      %v4653 = vld [vmem:[%s4628 + $0x60] sm:$0xf]
      %v4654 = vld [vmem:[%s4628 + $0x64] sm:$0xf]
      %v4655 = vld [vmem:[%s4628 + $0x68] sm:$0xf]
      %v4656 = vld [vmem:[%s4628 + $0x6c] sm:$0xf]
      %v4657 = vld [vmem:[%s4628 + $0x70] sm:$0xf]
      %v4658 = vld [vmem:[%s4628 + $0x74] sm:$0xf]
      %v4659 = vld [vmem:[%s4628 + $0x78] sm:$0xf]
      %v4660 = vld [vmem:[%s4628 + $0x7c] sm:$0xf]
      %s4661 = scalar_lea.vmem %s4, 384
      %v4662 = vld [vmem:[%s4661] sm:$0xff]
      %v4663 = vld [vmem:[%s4661 + $0x8] sm:$0xf]
      %v4664 = vld [vmem:[%s4661 + $0xc] sm:$0xff]
      %v4665 = vld [vmem:[%s4661 + $0x14] sm:$0xf]
      %v4666 = vld [vmem:[%s4661 + $0x18] sm:$0xff]
      %v4667 = vld [vmem:[%s4661 + $0x20] sm:$0xf]
      %v4668 = vld [vmem:[%s4661 + $0x24] sm:$0xff]
      %v4669 = vld [vmem:[%s4661 + $0x2c] sm:$0xf]
      %v4670 = vld [vmem:[%s4661 + $0x30] sm:$0xff]
      %v4671 = vld [vmem:[%s4661 + $0x38] sm:$0xf]
      %v4672 = vld [vmem:[%s4661 + $0x3c] sm:$0xff]
      %v4673 = vld [vmem:[%s4661 + $0x44] sm:$0xf]
      %v4674 = vld [vmem:[%s4661 + $0x48] sm:$0xff]
      %v4675 = vld [vmem:[%s4661 + $0x50] sm:$0xf]
      %v4676 = vld [vmem:[%s4661 + $0x54] sm:$0xff]
      %v4677 = vld [vmem:[%s4661 + $0x5c] sm:$0xf]
      %v4678 = vld [vmem:[%s4661 + $0x60] sm:$0xff]
      %v4679 = vld [vmem:[%s4661 + $0x68] sm:$0xf]
      %v4680 = vld [vmem:[%s4661 + $0x6c] sm:$0xff]
      %v4681 = vld [vmem:[%s4661 + $0x74] sm:$0xf]
      %v4682 = vld [vmem:[%s4661 + $0x78] sm:$0xff]
      %v4683 = vld [vmem:[%s4661 + $0x80] sm:$0xf]
      %v4684 = vld [vmem:[%s4661 + $0x84] sm:$0xff]
      %v4685 = vld [vmem:[%s4661 + $0x8c] sm:$0xf]
      %v4686 = vld [vmem:[%s4661 + $0x90] sm:$0xff]
      %v4687 = vld [vmem:[%s4661 + $0x98] sm:$0xf]
      %v4688 = vld [vmem:[%s4661 + $0x9c] sm:$0xff]
      %v4689 = vld [vmem:[%s4661 + $0xa4] sm:$0xf]
      %v4690 = vld [vmem:[%s4661 + $0xa8] sm:$0xff]
      %v4691 = vld [vmem:[%s4661 + $0xb0] sm:$0xf]
      %v4692 = vld [vmem:[%s4661 + $0xb4] sm:$0xff]
      %v4693 = vld [vmem:[%s4661 + $0xbc] sm:$0xf]
      %v4726 = vunpack.c.l.b16 %v4629
      %v4727 = vunpack.c.l.b16 %v4630
      %v4728 = vunpack.c.l.b16 %v4631
      %v4729 = vunpack.c.l.b16 %v4632
      %v4730 = vunpack.c.l.b16 %v4633
      %v4731 = vunpack.c.l.b16 %v4634
      %v4732 = vunpack.c.l.b16 %v4635
      %v4733 = vunpack.c.l.b16 %v4636
      %v4734 = vunpack.c.l.b16 %v4637
      %v4735 = vunpack.c.l.b16 %v4638
      %v4736 = vunpack.c.l.b16 %v4639
      %v4737 = vunpack.c.l.b16 %v4640
      %v4738 = vunpack.c.l.b16 %v4641
      %v4739 = vunpack.c.l.b16 %v4642
      %v4740 = vunpack.c.l.b16 %v4643
      %v4741 = vunpack.c.l.b16 %v4644
      %v4742 = vunpack.c.l.b16 %v4645
      %v4743 = vunpack.c.l.b16 %v4646
      %v4744 = vunpack.c.l.b16 %v4647
      %v4745 = vunpack.c.l.b16 %v4648
      %v4746 = vunpack.c.l.b16 %v4649
      %v4747 = vunpack.c.l.b16 %v4650
      %v4748 = vunpack.c.l.b16 %v4651
      %v4749 = vunpack.c.l.b16 %v4652
      %v4750 = vunpack.c.l.b16 %v4653
      %v4751 = vunpack.c.l.b16 %v4654
      %v4752 = vunpack.c.l.b16 %v4655
      %v4753 = vunpack.c.l.b16 %v4656
      %v4754 = vunpack.c.l.b16 %v4657
      %v4755 = vunpack.c.l.b16 %v4658
      %v4756 = vunpack.c.l.b16 %v4659
      %v4757 = vunpack.c.l.b16 %v4660
      %v4758 = vpack.c.b16 %v4727, %v4726
      %v4759 = vpack.c.b16 %v4729, %v4728
      %v4760 = vpack.c.b16 %v4731, %v4730
      %v4761 = vpack.c.b16 %v4733, %v4732
      %v4762 = vpack.c.b16 %v4735, %v4734
      %v4763 = vpack.c.b16 %v4737, %v4736
      %v4764 = vpack.c.b16 %v4739, %v4738
      %v4765 = vpack.c.b16 %v4741, %v4740
      %v4766 = vpack.c.b16 %v4743, %v4742
      %v4767 = vpack.c.b16 %v4745, %v4744
      %v4768 = vpack.c.b16 %v4747, %v4746
      %v4769 = vpack.c.b16 %v4749, %v4748
      %v4770 = vpack.c.b16 %v4751, %v4750
      %v4771 = vpack.c.b16 %v4753, %v4752
      %v4772 = vpack.c.b16 %v4755, %v4754
      %v4773 = vpack.c.b16 %v4757, %v4756
      %v4822 = vunpack.c.l.b16 %v4662
      %v4823 = vunpack.c.h.b16 %v4662
      %v4824 = vunpack.c.l.b16 %v4663
      %v4825 = vunpack.c.l.b16 %v4664
      %v4826 = vunpack.c.h.b16 %v4664
      %v4827 = vunpack.c.l.b16 %v4665
      %v4828 = vunpack.c.l.b16 %v4666
      %v4829 = vunpack.c.h.b16 %v4666
      %v4830 = vunpack.c.l.b16 %v4667
      %v4831 = vunpack.c.l.b16 %v4668
      %v4832 = vunpack.c.h.b16 %v4668
      %v4833 = vunpack.c.l.b16 %v4669
      %v4834 = vunpack.c.l.b16 %v4670
      %v4835 = vunpack.c.h.b16 %v4670
      %v4836 = vunpack.c.l.b16 %v4671
      %v4837 = vunpack.c.l.b16 %v4672
      %v4838 = vunpack.c.h.b16 %v4672
      %v4839 = vunpack.c.l.b16 %v4673
      %v4840 = vunpack.c.l.b16 %v4674
      %v4841 = vunpack.c.h.b16 %v4674
      %v4842 = vunpack.c.l.b16 %v4675
      %v4843 = vunpack.c.l.b16 %v4676
      %v4844 = vunpack.c.h.b16 %v4676
      %v4845 = vunpack.c.l.b16 %v4677
      %v4846 = vunpack.c.l.b16 %v4678
      %v4847 = vunpack.c.h.b16 %v4678
      %v4848 = vunpack.c.l.b16 %v4679
      %v4849 = vunpack.c.l.b16 %v4680
      %v4850 = vunpack.c.h.b16 %v4680
      %v4851 = vunpack.c.l.b16 %v4681
      %v4852 = vunpack.c.l.b16 %v4682
      %v4853 = vunpack.c.h.b16 %v4682
      %v4854 = vunpack.c.l.b16 %v4683
      %v4855 = vunpack.c.l.b16 %v4684
      %v4856 = vunpack.c.h.b16 %v4684
      %v4857 = vunpack.c.l.b16 %v4685
      %v4858 = vunpack.c.l.b16 %v4686
      %v4859 = vunpack.c.h.b16 %v4686
      %v4860 = vunpack.c.l.b16 %v4687
      %v4861 = vunpack.c.l.b16 %v4688
      %v4862 = vunpack.c.h.b16 %v4688
      %v4863 = vunpack.c.l.b16 %v4689
      %v4864 = vunpack.c.l.b16 %v4690
      %v4865 = vunpack.c.h.b16 %v4690
      %v4866 = vunpack.c.l.b16 %v4691
      %v4867 = vunpack.c.l.b16 %v4692
      %v4868 = vunpack.c.h.b16 %v4692
      %v4869 = vunpack.c.l.b16 %v4693
      %v4870 = vpack.c.b16 %v4825, %v4822
      %v4871 = vpack.c.b16 %v4826, %v4823
      %v4872 = vpack.c.b16 %v4827, %v4824
      %v4873 = vpack.c.b16 %v4831, %v4828
      %v4874 = vpack.c.b16 %v4832, %v4829
      %v4875 = vpack.c.b16 %v4833, %v4830
      %v4876 = vpack.c.b16 %v4837, %v4834
      %v4877 = vpack.c.b16 %v4838, %v4835
      %v4878 = vpack.c.b16 %v4839, %v4836
      %v4879 = vpack.c.b16 %v4843, %v4840
      %v4880 = vpack.c.b16 %v4844, %v4841
      %v4881 = vpack.c.b16 %v4845, %v4842
      %v4882 = vpack.c.b16 %v4849, %v4846
      %v4883 = vpack.c.b16 %v4850, %v4847
      %v4884 = vpack.c.b16 %v4851, %v4848
      %v4885 = vpack.c.b16 %v4855, %v4852
      %v4886 = vpack.c.b16 %v4856, %v4853
      %v4887 = vpack.c.b16 %v4857, %v4854
      %v4888 = vpack.c.b16 %v4861, %v4858
      %v4889 = vpack.c.b16 %v4862, %v4859
      %v4890 = vpack.c.b16 %v4863, %v4860
      %v4891 = vpack.c.b16 %v4867, %v4864
      %v4892 = vpack.c.b16 %v4868, %v4865
      %v4893 = vpack.c.b16 %v4869, %v4866
      %4918 = vmatprep.subr.bf16.mxu0 %v4892
      %4919 = vmatpush1.bf16.msra.mxu0 %v4891
      %4920 = vmatprep.subr.bf16.mxu0 %v4889
      %4921 = vmatpush1.bf16.msra.mxu0 %v4888
      %4922 = vmatprep.subr.bf16.mxu0 %v4886
      %4923 = vmatpush1.bf16.msra.mxu0 %v4885
      %4924 = vmatprep.subr.bf16.mxu0 %v4883
      %4925 = vmatpush1.bf16.msra.mxu0 %v4882
      %4926 = vmatprep.subr.bf16.mxu0 %v4880
      %4927 = vmatpush1.bf16.msra.mxu0 %v4879
      %4928 = vmatprep.subr.bf16.mxu0 %v4877
      %4929 = vmatpush1.bf16.msra.mxu0 %v4876
      %4930 = vmatprep.subr.bf16.mxu0 %v4874
      %4931 = vmatpush1.bf16.msra.mxu0 %v4873
      %4932 = vmatprep.subr.bf16.mxu0 %v4871
      %4933 = vmatpush1.bf16.msra.mxu0 %v4870
      %4934 = vmatprep.subr.bf16.mxu0 0
      %4935 = vmatpush2.bf16.msra.mxu0 0
      %4936 = vmatprep.subr.bf16.mxu0 0
      %4937 = vmatpush2.bf16.msra.mxu0 0
      %4938 = vmatprep.subr.bf16.mxu0 0
      %4939 = vmatpush2.bf16.msra.mxu0 0
      %4940 = vmatprep.subr.bf16.mxu0 0
      %4941 = vmatpush2.bf16.msra.mxu0 0
      %4942 = vmatprep.subr.bf16.mxu0 0
      %4943 = vmatpush2.bf16.msra.mxu0 0
      %4944 = vmatprep.subr.bf16.mxu0 0
      %4945 = vmatpush2.bf16.msra.mxu0 0
      %4946 = vmatprep.subr.bf16.mxu0 0
      %4947 = vmatpush2.bf16.msra.mxu0 0
      %4948 = vmatprep.subr.bf16.mxu0 0
      %4949 = vmatpush2.bf16.msra.mxu0 0
      %4950 = vmatprep.mubr.bf16.mxu0 0
      %4951 = vmatmul.mubr.bf16.gmra.mxu0 %v4758
      %v4952 = vpop.f32.mrf.mxu0
      %v4953 = vadd.f32 0.0, %v4952
      %v4954 = vpop.f32.mrf.mxu0
      %v4955 = vadd.f32 0.0, %v4954
      %v4956 = vpop.f32.mrf.mxu0
      %v4957 = vadd.f32 0.0, %v4956
      %v4958 = vpop.f32.mrf.mxu0
      %v4959 = vadd.f32 0.0, %v4958
      %4960 = vmatprep.mubr.bf16.mxu0 0
      %4961 = vmatmul.mubr.bf16.gmra.mxu0 %v4759
      %v4962 = vpop.f32.mrf.mxu0
      %v4963 = vadd.f32 0.0, %v4962
      %v4964 = vpop.f32.mrf.mxu0
      %v4965 = vadd.f32 0.0, %v4964
      %v4966 = vpop.f32.mrf.mxu0
      %v4967 = vadd.f32 0.0, %v4966
      %v4968 = vpop.f32.mrf.mxu0
      %v4969 = vadd.f32 0.0, %v4968
      %4970 = vmatprep.mubr.bf16.mxu0 0
      %4971 = vmatmul.mubr.bf16.gmra.mxu0 %v4760
      %v4972 = vpop.f32.mrf.mxu0
      %v4973 = vadd.f32 0.0, %v4972
      %v4974 = vpop.f32.mrf.mxu0
      %v4975 = vadd.f32 0.0, %v4974
      %v4976 = vpop.f32.mrf.mxu0
      %v4977 = vadd.f32 0.0, %v4976
      %v4978 = vpop.f32.mrf.mxu0
      %v4979 = vadd.f32 0.0, %v4978
      %4980 = vmatprep.mubr.bf16.mxu0 0
      %4981 = vmatmul.mubr.bf16.gmra.mxu0 %v4761
      %v4982 = vpop.f32.mrf.mxu0
      %v4983 = vadd.f32 0.0, %v4982
      %v4984 = vpop.f32.mrf.mxu0
      %v4985 = vadd.f32 0.0, %v4984
      %v4986 = vpop.f32.mrf.mxu0
      %v4987 = vadd.f32 0.0, %v4986
      %v4988 = vpop.f32.mrf.mxu0
      %v4989 = vadd.f32 0.0, %v4988
      %4990 = vmatprep.mubr.bf16.mxu0 0
      %4991 = vmatmul.mubr.bf16.gmra.mxu0 %v4762
      %v4992 = vpop.f32.mrf.mxu0
      %v4993 = vadd.f32 0.0, %v4992
      %v4994 = vpop.f32.mrf.mxu0
      %v4995 = vadd.f32 0.0, %v4994
      %v4996 = vpop.f32.mrf.mxu0
      %v4997 = vadd.f32 0.0, %v4996
      %v4998 = vpop.f32.mrf.mxu0
      %v4999 = vadd.f32 0.0, %v4998
      %5000 = vmatprep.mubr.bf16.mxu0 0
      %5001 = vmatmul.mubr.bf16.gmra.mxu0 %v4763
      %v5002 = vpop.f32.mrf.mxu0
      %v5003 = vadd.f32 0.0, %v5002
      %v5004 = vpop.f32.mrf.mxu0
      %v5005 = vadd.f32 0.0, %v5004
      %v5006 = vpop.f32.mrf.mxu0
      %v5007 = vadd.f32 0.0, %v5006
      %v5008 = vpop.f32.mrf.mxu0
      %v5009 = vadd.f32 0.0, %v5008
      %5010 = vmatprep.mubr.bf16.mxu0 0
      %5011 = vmatmul.mubr.bf16.gmra.mxu0 %v4764
      %v5012 = vpop.f32.mrf.mxu0
      %v5013 = vadd.f32 0.0, %v5012
      %v5014 = vpop.f32.mrf.mxu0
      %v5015 = vadd.f32 0.0, %v5014
      %v5016 = vpop.f32.mrf.mxu0
      %v5017 = vadd.f32 0.0, %v5016
      %v5018 = vpop.f32.mrf.mxu0
      %v5019 = vadd.f32 0.0, %v5018
      %5020 = vmatprep.mubr.bf16.mxu0 0
      %5021 = vmatmul.mubr.bf16.gmra.mxu0 %v4765
      %v5022 = vpop.f32.mrf.mxu0
      %v5023 = vadd.f32 0.0, %v5022
      %v5024 = vpop.f32.mrf.mxu0
      %v5025 = vadd.f32 0.0, %v5024
      %v5026 = vpop.f32.mrf.mxu0
      %v5027 = vadd.f32 0.0, %v5026
      %v5028 = vpop.f32.mrf.mxu0
      %v5029 = vadd.f32 0.0, %v5028
      %5030 = vmatprep.mubr.bf16.mxu0 0
      %5031 = vmatmul.mubr.bf16.gmra.mxu0 %v4766
      %v5032 = vpop.f32.mrf.mxu0
      %v5033 = vadd.f32 0.0, %v5032
      %v5034 = vpop.f32.mrf.mxu0
      %v5035 = vadd.f32 0.0, %v5034
      %v5036 = vpop.f32.mrf.mxu0
      %v5037 = vadd.f32 0.0, %v5036
      %v5038 = vpop.f32.mrf.mxu0
      %v5039 = vadd.f32 0.0, %v5038
      %5040 = vmatprep.mubr.bf16.mxu0 0
      %5041 = vmatmul.mubr.bf16.gmra.mxu0 %v4767
      %v5042 = vpop.f32.mrf.mxu0
      %v5043 = vadd.f32 0.0, %v5042
      %v5044 = vpop.f32.mrf.mxu0
      %v5045 = vadd.f32 0.0, %v5044
      %v5046 = vpop.f32.mrf.mxu0
      %v5047 = vadd.f32 0.0, %v5046
      %v5048 = vpop.f32.mrf.mxu0
      %v5049 = vadd.f32 0.0, %v5048
      %5050 = vmatprep.mubr.bf16.mxu0 0
      %5051 = vmatmul.mubr.bf16.gmra.mxu0 %v4768
      %v5052 = vpop.f32.mrf.mxu0
      %v5053 = vadd.f32 0.0, %v5052
      %v5054 = vpop.f32.mrf.mxu0
      %v5055 = vadd.f32 0.0, %v5054
      %v5056 = vpop.f32.mrf.mxu0
      %v5057 = vadd.f32 0.0, %v5056
      %v5058 = vpop.f32.mrf.mxu0
      %v5059 = vadd.f32 0.0, %v5058
      %5060 = vmatprep.mubr.bf16.mxu0 0
      %5061 = vmatmul.mubr.bf16.gmra.mxu0 %v4769
      %v5062 = vpop.f32.mrf.mxu0
      %v5063 = vadd.f32 0.0, %v5062
      %v5064 = vpop.f32.mrf.mxu0
      %v5065 = vadd.f32 0.0, %v5064
      %v5066 = vpop.f32.mrf.mxu0
      %v5067 = vadd.f32 0.0, %v5066
      %v5068 = vpop.f32.mrf.mxu0
      %v5069 = vadd.f32 0.0, %v5068
      %5070 = vmatprep.mubr.bf16.mxu0 0
      %5071 = vmatmul.mubr.bf16.gmra.mxu0 %v4770
      %v5072 = vpop.f32.mrf.mxu0
      %v5073 = vadd.f32 0.0, %v5072
      %v5074 = vpop.f32.mrf.mxu0
      %v5075 = vadd.f32 0.0, %v5074
      %v5076 = vpop.f32.mrf.mxu0
      %v5077 = vadd.f32 0.0, %v5076
      %v5078 = vpop.f32.mrf.mxu0
      %v5079 = vadd.f32 0.0, %v5078
      %5080 = vmatprep.mubr.bf16.mxu0 0
      %5081 = vmatmul.mubr.bf16.gmra.mxu0 %v4771
      %v5082 = vpop.f32.mrf.mxu0
      %v5083 = vadd.f32 0.0, %v5082
      %v5084 = vpop.f32.mrf.mxu0
      %v5085 = vadd.f32 0.0, %v5084
      %v5086 = vpop.f32.mrf.mxu0
      %v5087 = vadd.f32 0.0, %v5086
      %v5088 = vpop.f32.mrf.mxu0
      %v5089 = vadd.f32 0.0, %v5088
      %5090 = vmatprep.mubr.bf16.mxu0 0
      %5091 = vmatmul.mubr.bf16.gmra.mxu0 %v4772
      %v5092 = vpop.f32.mrf.mxu0
      %v5093 = vadd.f32 0.0, %v5092
      %v5094 = vpop.f32.mrf.mxu0
      %v5095 = vadd.f32 0.0, %v5094
      %v5096 = vpop.f32.mrf.mxu0
      %v5097 = vadd.f32 0.0, %v5096
      %v5098 = vpop.f32.mrf.mxu0
      %v5099 = vadd.f32 0.0, %v5098
      %5100 = vmatprep.mubr.bf16.mxu0 0
      %5101 = vmatmul.mubr.bf16.gmra.mxu0 %v4773
      %v5102 = vpop.f32.mrf.mxu0
      %v5103 = vadd.f32 0.0, %v5102
      %v5104 = vpop.f32.mrf.mxu0
      %v5105 = vadd.f32 0.0, %v5104
      %v5106 = vpop.f32.mrf.mxu0
      %v5107 = vadd.f32 0.0, %v5106
      %v5108 = vpop.f32.mrf.mxu0
      %v5109 = vadd.f32 0.0, %v5108
      %5110 = vdwg.mxu0
      %5111 = vmatprep.subr.bf16.mxu0 0
      %5112 = vmatpush1.bf16.msra.mxu0 %v4893
      %5113 = vmatprep.subr.bf16.mxu0 0
      %5114 = vmatpush1.bf16.msra.mxu0 %v4890
      %5115 = vmatprep.subr.bf16.mxu0 0
      %5116 = vmatpush1.bf16.msra.mxu0 %v4887
      %5117 = vmatprep.subr.bf16.mxu0 0
      %5118 = vmatpush1.bf16.msra.mxu0 %v4884
      %5119 = vmatprep.subr.bf16.mxu0 0
      %5120 = vmatpush1.bf16.msra.mxu0 %v4881
      %5121 = vmatprep.subr.bf16.mxu0 0
      %5122 = vmatpush1.bf16.msra.mxu0 %v4878
      %5123 = vmatprep.subr.bf16.mxu0 0
      %5124 = vmatpush1.bf16.msra.mxu0 %v4875
      %5125 = vmatprep.subr.bf16.mxu0 0
      %5126 = vmatpush1.bf16.msra.mxu0 %v4872
      %5127 = vmatprep.subr.bf16.mxu0 0
      %5128 = vmatpush2.bf16.msra.mxu0 0
      %5129 = vmatprep.subr.bf16.mxu0 0
      %5130 = vmatpush2.bf16.msra.mxu0 0
      %5131 = vmatprep.subr.bf16.mxu0 0
      %5132 = vmatpush2.bf16.msra.mxu0 0
      %5133 = vmatprep.subr.bf16.mxu0 0
      %5134 = vmatpush2.bf16.msra.mxu0 0
      %5135 = vmatprep.subr.bf16.mxu0 0
      %5136 = vmatpush2.bf16.msra.mxu0 0
      %5137 = vmatprep.subr.bf16.mxu0 0
      %5138 = vmatpush2.bf16.msra.mxu0 0
      %5139 = vmatprep.subr.bf16.mxu0 0
      %5140 = vmatpush2.bf16.msra.mxu0 0
      %5141 = vmatprep.subr.bf16.mxu0 0
      %5142 = vmatpush2.bf16.msra.mxu0 0
      %5143 = vmatprep.mubr.bf16.mxu0 0
      %5144 = vmatmul.mubr.bf16.gmra.mxu0 %v4758
      %v5145 = vpop.f32.mrf.mxu0
      %v5146 = vadd.f32 0.0, %v5145
      %v5147 = vpop.f32.mrf.mxu0
      %v5148 = vpop.f32.mrf.mxu0
      %v5149 = vadd.f32 0.0, %v5148
      %v5150 = vpop.f32.mrf.mxu0
      %5151 = vmatprep.mubr.bf16.mxu0 0
      %5152 = vmatmul.mubr.bf16.gmra.mxu0 %v4759
      %v5153 = vpop.f32.mrf.mxu0
      %v5154 = vadd.f32 0.0, %v5153
      %v5155 = vpop.f32.mrf.mxu0
      %v5156 = vpop.f32.mrf.mxu0
      %v5157 = vadd.f32 0.0, %v5156
      %v5158 = vpop.f32.mrf.mxu0
      %5159 = vmatprep.mubr.bf16.mxu0 0
      %5160 = vmatmul.mubr.bf16.gmra.mxu0 %v4760
      %v5161 = vpop.f32.mrf.mxu0
      %v5162 = vadd.f32 0.0, %v5161
      %v5163 = vpop.f32.mrf.mxu0
      %v5164 = vpop.f32.mrf.mxu0
      %v5165 = vadd.f32 0.0, %v5164
      %v5166 = vpop.f32.mrf.mxu0
      %5167 = vmatprep.mubr.bf16.mxu0 0
      %5168 = vmatmul.mubr.bf16.gmra.mxu0 %v4761
      %v5169 = vpop.f32.mrf.mxu0
      %v5170 = vadd.f32 0.0, %v5169
      %v5171 = vpop.f32.mrf.mxu0
      %v5172 = vpop.f32.mrf.mxu0
      %v5173 = vadd.f32 0.0, %v5172
      %v5174 = vpop.f32.mrf.mxu0
      %5175 = vmatprep.mubr.bf16.mxu0 0
      %5176 = vmatmul.mubr.bf16.gmra.mxu0 %v4762
      %v5177 = vpop.f32.mrf.mxu0
      %v5178 = vadd.f32 0.0, %v5177
      %v5179 = vpop.f32.mrf.mxu0
      %v5180 = vpop.f32.mrf.mxu0
      %v5181 = vadd.f32 0.0, %v5180
      %v5182 = vpop.f32.mrf.mxu0
      %5183 = vmatprep.mubr.bf16.mxu0 0
      %5184 = vmatmul.mubr.bf16.gmra.mxu0 %v4763
      %v5185 = vpop.f32.mrf.mxu0
      %v5186 = vadd.f32 0.0, %v5185
      %v5187 = vpop.f32.mrf.mxu0
      %v5188 = vpop.f32.mrf.mxu0
      %v5189 = vadd.f32 0.0, %v5188
      %v5190 = vpop.f32.mrf.mxu0
      %5191 = vmatprep.mubr.bf16.mxu0 0
      %5192 = vmatmul.mubr.bf16.gmra.mxu0 %v4764
      %v5193 = vpop.f32.mrf.mxu0
      %v5194 = vadd.f32 0.0, %v5193
      %v5195 = vpop.f32.mrf.mxu0
      %v5196 = vpop.f32.mrf.mxu0
      %v5197 = vadd.f32 0.0, %v5196
      %v5198 = vpop.f32.mrf.mxu0
      %5199 = vmatprep.mubr.bf16.mxu0 0
      %5200 = vmatmul.mubr.bf16.gmra.mxu0 %v4765
      %v5201 = vpop.f32.mrf.mxu0
      %v5202 = vadd.f32 0.0, %v5201
      %v5203 = vpop.f32.mrf.mxu0
      %v5204 = vpop.f32.mrf.mxu0
      %v5205 = vadd.f32 0.0, %v5204
      %v5206 = vpop.f32.mrf.mxu0
      %5207 = vmatprep.mubr.bf16.mxu0 0
      %5208 = vmatmul.mubr.bf16.gmra.mxu0 %v4766
      %v5209 = vpop.f32.mrf.mxu0
      %v5210 = vadd.f32 0.0, %v5209
      %v5211 = vpop.f32.mrf.mxu0
      %v5212 = vpop.f32.mrf.mxu0
      %v5213 = vadd.f32 0.0, %v5212
      %v5214 = vpop.f32.mrf.mxu0
      %5215 = vmatprep.mubr.bf16.mxu0 0
      %5216 = vmatmul.mubr.bf16.gmra.mxu0 %v4767
      %v5217 = vpop.f32.mrf.mxu0
      %v5218 = vadd.f32 0.0, %v5217
      %v5219 = vpop.f32.mrf.mxu0
      %v5220 = vpop.f32.mrf.mxu0
      %v5221 = vadd.f32 0.0, %v5220
      %v5222 = vpop.f32.mrf.mxu0
      %5223 = vmatprep.mubr.bf16.mxu0 0
      %5224 = vmatmul.mubr.bf16.gmra.mxu0 %v4768
      %v5225 = vpop.f32.mrf.mxu0
      %v5226 = vadd.f32 0.0, %v5225
      %v5227 = vpop.f32.mrf.mxu0
      %v5228 = vpop.f32.mrf.mxu0
      %v5229 = vadd.f32 0.0, %v5228
      %v5230 = vpop.f32.mrf.mxu0
      %5231 = vmatprep.mubr.bf16.mxu0 0
      %5232 = vmatmul.mubr.bf16.gmra.mxu0 %v4769
      %v5233 = vpop.f32.mrf.mxu0
      %v5234 = vadd.f32 0.0, %v5233
      %v5235 = vpop.f32.mrf.mxu0
      %v5236 = vpop.f32.mrf.mxu0
      %v5237 = vadd.f32 0.0, %v5236
      %v5238 = vpop.f32.mrf.mxu0
      %5239 = vmatprep.mubr.bf16.mxu0 0
      %5240 = vmatmul.mubr.bf16.gmra.mxu0 %v4770
      %v5241 = vpop.f32.mrf.mxu0
      %v5242 = vadd.f32 0.0, %v5241
      %v5243 = vpop.f32.mrf.mxu0
      %v5244 = vpop.f32.mrf.mxu0
      %v5245 = vadd.f32 0.0, %v5244
      %v5246 = vpop.f32.mrf.mxu0
      %5247 = vmatprep.mubr.bf16.mxu0 0
      %5248 = vmatmul.mubr.bf16.gmra.mxu0 %v4771
      %v5249 = vpop.f32.mrf.mxu0
      %v5250 = vadd.f32 0.0, %v5249
      %v5251 = vpop.f32.mrf.mxu0
      %v5252 = vpop.f32.mrf.mxu0
      %v5253 = vadd.f32 0.0, %v5252
      %v5254 = vpop.f32.mrf.mxu0
      %5255 = vmatprep.mubr.bf16.mxu0 0
      %5256 = vmatmul.mubr.bf16.gmra.mxu0 %v4772
      %v5257 = vpop.f32.mrf.mxu0
      %v5258 = vadd.f32 0.0, %v5257
      %v5259 = vpop.f32.mrf.mxu0
      %v5260 = vpop.f32.mrf.mxu0
      %v5261 = vadd.f32 0.0, %v5260
      %v5262 = vpop.f32.mrf.mxu0
      %5263 = vmatprep.mubr.bf16.mxu0 0
      %5264 = vmatmul.mubr.bf16.gmra.mxu0 %v4773
      %v5265 = vpop.f32.mrf.mxu0
      %v5266 = vadd.f32 0.0, %v5265
      %v5267 = vpop.f32.mrf.mxu0
      %v5268 = vpop.f32.mrf.mxu0
      %v5269 = vadd.f32 0.0, %v5268
      %v5270 = vpop.f32.mrf.mxu0
      %5271 = vdwg.mxu0
      %v5272 = vadd.f32 %v4309, %v4953
      %v5273 = vadd.f32 %v4311, %v4955
      %v5274 = vadd.f32 %v4502, %v5146
      %v5275 = vadd.f32 %v4313, %v4957
      %v5276 = vadd.f32 %v4315, %v4959
      %v5277 = vadd.f32 %v4505, %v5149
      %v5278 = vadd.f32 %v4319, %v4963
      %v5279 = vadd.f32 %v4321, %v4965
      %v5280 = vadd.f32 %v4510, %v5154
      %v5281 = vadd.f32 %v4323, %v4967
      %v5282 = vadd.f32 %v4325, %v4969
      %v5283 = vadd.f32 %v4513, %v5157
      %v5284 = vadd.f32 %v4329, %v4973
      %v5285 = vadd.f32 %v4331, %v4975
      %v5286 = vadd.f32 %v4518, %v5162
      %v5287 = vadd.f32 %v4333, %v4977
      %v5288 = vadd.f32 %v4335, %v4979
      %v5289 = vadd.f32 %v4521, %v5165
      %v5290 = vadd.f32 %v4339, %v4983
      %v5291 = vadd.f32 %v4341, %v4985
      %v5292 = vadd.f32 %v4526, %v5170
      %v5293 = vadd.f32 %v4343, %v4987
      %v5294 = vadd.f32 %v4345, %v4989
      %v5295 = vadd.f32 %v4529, %v5173
      %v5296 = vadd.f32 %v4349, %v4993
      %v5297 = vadd.f32 %v4351, %v4995
      %v5298 = vadd.f32 %v4534, %v5178
      %v5299 = vadd.f32 %v4353, %v4997
      %v5300 = vadd.f32 %v4355, %v4999
      %v5301 = vadd.f32 %v4537, %v5181
      %v5302 = vadd.f32 %v4359, %v5003
      %v5303 = vadd.f32 %v4361, %v5005
      %v5304 = vadd.f32 %v4542, %v5186
      %v5305 = vadd.f32 %v4363, %v5007
      %v5306 = vadd.f32 %v4365, %v5009
      %v5307 = vadd.f32 %v4545, %v5189
      %v5308 = vadd.f32 %v4369, %v5013
      %v5309 = vadd.f32 %v4371, %v5015
      %v5310 = vadd.f32 %v4550, %v5194
      %v5311 = vadd.f32 %v4373, %v5017
      %v5312 = vadd.f32 %v4375, %v5019
      %v5313 = vadd.f32 %v4553, %v5197
      %v5314 = vadd.f32 %v4379, %v5023
      %v5315 = vadd.f32 %v4381, %v5025
      %v5316 = vadd.f32 %v4558, %v5202
      %v5317 = vadd.f32 %v4383, %v5027
      %v5318 = vadd.f32 %v4385, %v5029
      %v5319 = vadd.f32 %v4561, %v5205
      %v5320 = vadd.f32 %v4389, %v5033
      %v5321 = vadd.f32 %v4391, %v5035
      %v5322 = vadd.f32 %v4566, %v5210
      %v5323 = vadd.f32 %v4393, %v5037
      %v5324 = vadd.f32 %v4395, %v5039
      %v5325 = vadd.f32 %v4569, %v5213
      %v5326 = vadd.f32 %v4399, %v5043
      %v5327 = vadd.f32 %v4401, %v5045
      %v5328 = vadd.f32 %v4574, %v5218
      %v5329 = vadd.f32 %v4403, %v5047
      %v5330 = vadd.f32 %v4405, %v5049
      %v5331 = vadd.f32 %v4577, %v5221
      %v5332 = vadd.f32 %v4409, %v5053
      %v5333 = vadd.f32 %v4411, %v5055
      %v5334 = vadd.f32 %v4582, %v5226
      %v5335 = vadd.f32 %v4413, %v5057
      %v5336 = vadd.f32 %v4415, %v5059
      %v5337 = vadd.f32 %v4585, %v5229
      %v5338 = vadd.f32 %v4419, %v5063
      %v5339 = vadd.f32 %v4421, %v5065
      %v5340 = vadd.f32 %v4590, %v5234
      %v5341 = vadd.f32 %v4423, %v5067
      %v5342 = vadd.f32 %v4425, %v5069
      %v5343 = vadd.f32 %v4593, %v5237
      %v5344 = vadd.f32 %v4429, %v5073
      %v5345 = vadd.f32 %v4431, %v5075
      %v5346 = vadd.f32 %v4598, %v5242
      %v5347 = vadd.f32 %v4433, %v5077
      %v5348 = vadd.f32 %v4435, %v5079
      %v5349 = vadd.f32 %v4601, %v5245
      %v5350 = vadd.f32 %v4439, %v5083
      %v5351 = vadd.f32 %v4441, %v5085
      %v5352 = vadd.f32 %v4606, %v5250
      %v5353 = vadd.f32 %v4443, %v5087
      %v5354 = vadd.f32 %v4445, %v5089
      %v5355 = vadd.f32 %v4609, %v5253
      %v5356 = vadd.f32 %v4449, %v5093
      %v5357 = vadd.f32 %v4451, %v5095
      %v5358 = vadd.f32 %v4614, %v5258
      %v5359 = vadd.f32 %v4453, %v5097
      %v5360 = vadd.f32 %v4455, %v5099
      %v5361 = vadd.f32 %v4617, %v5261
      %v5362 = vadd.f32 %v4459, %v5103
      %v5363 = vadd.f32 %v4461, %v5105
      %v5364 = vadd.f32 %v4622, %v5266
      %v5365 = vadd.f32 %v4463, %v5107
      %v5366 = vadd.f32 %v4465, %v5109
      %v5367 = vadd.f32 %v4625, %v5269
      %v5400 = vrot.slane %v5272, 7
      %v5401 = vrot.slane %v5275, 7
      %v5402 = vsel %vm2706, %v5400, %v5401
      %v5403 = vrot.slane %v5278, 7
      %v5404 = vrot.slane %v5281, 7
      %v5405 = vsel %vm2706, %v5403, %v5404
      %v5406 = vrot.slane %v5284, 7
      %v5407 = vrot.slane %v5287, 7
      %v5408 = vsel %vm2706, %v5406, %v5407
      %v5409 = vrot.slane %v5290, 7
      %v5410 = vrot.slane %v5293, 7
      %v5411 = vsel %vm2706, %v5409, %v5410
      %v5412 = vrot.slane %v5296, 7
      %v5413 = vrot.slane %v5299, 7
      %v5414 = vsel %vm2706, %v5412, %v5413
      %v5415 = vrot.slane %v5302, 7
      %v5416 = vrot.slane %v5305, 7
      %v5417 = vsel %vm2706, %v5415, %v5416
      %v5418 = vrot.slane %v5308, 7
      %v5419 = vrot.slane %v5311, 7
      %v5420 = vsel %vm2706, %v5418, %v5419
      %v5421 = vrot.slane %v5314, 7
      %v5422 = vrot.slane %v5317, 7
      %v5423 = vsel %vm2706, %v5421, %v5422
      %v5424 = vrot.slane %v5320, 7
      %v5425 = vrot.slane %v5323, 7
      %v5426 = vsel %vm2706, %v5424, %v5425
      %v5427 = vrot.slane %v5326, 7
      %v5428 = vrot.slane %v5329, 7
      %v5429 = vsel %vm2706, %v5427, %v5428
      %v5430 = vrot.slane %v5332, 7
      %v5431 = vrot.slane %v5335, 7
      %v5432 = vsel %vm2706, %v5430, %v5431
      %v5433 = vrot.slane %v5338, 7
      %v5434 = vrot.slane %v5341, 7
      %v5435 = vsel %vm2706, %v5433, %v5434
      %v5436 = vrot.slane %v5344, 7
      %v5437 = vrot.slane %v5347, 7
      %v5438 = vsel %vm2706, %v5436, %v5437
      %v5439 = vrot.slane %v5350, 7
      %v5440 = vrot.slane %v5353, 7
      %v5441 = vsel %vm2706, %v5439, %v5440
      %v5442 = vrot.slane %v5356, 7
      %v5443 = vrot.slane %v5359, 7
      %v5444 = vsel %vm2706, %v5442, %v5443
      %v5445 = vrot.slane %v5362, 7
      %v5446 = vrot.slane %v5365, 7
      %v5447 = vsel %vm2706, %v5445, %v5446
      %v5480 = vsel %vm2706, 0.0, %v5400
      %v5481 = vsel %vm2706, 0.0, %v5403
      %v5482 = vsel %vm2706, 0.0, %v5406
      %v5483 = vsel %vm2706, 0.0, %v5409
      %v5484 = vsel %vm2706, 0.0, %v5412
      %v5485 = vsel %vm2706, 0.0, %v5415
      %v5486 = vsel %vm2706, 0.0, %v5418
      %v5487 = vsel %vm2706, 0.0, %v5421
      %v5488 = vsel %vm2706, 0.0, %v5424
      %v5489 = vsel %vm2706, 0.0, %v5427
      %v5490 = vsel %vm2706, 0.0, %v5430
      %v5491 = vsel %vm2706, 0.0, %v5433
      %v5492 = vsel %vm2706, 0.0, %v5436
      %v5493 = vsel %vm2706, 0.0, %v5439
      %v5494 = vsel %vm2706, 0.0, %v5442
      %v5495 = vsel %vm2706, 0.0, %v5445
      %v5496 = vadd.f32 %v5273, %v5480
      %v5497 = vadd.f32 %v5276, %v5402
      %v5498 = vadd.f32 %v5279, %v5481
      %v5499 = vadd.f32 %v5282, %v5405
      %v5500 = vadd.f32 %v5285, %v5482
      %v5501 = vadd.f32 %v5288, %v5408
      %v5502 = vadd.f32 %v5291, %v5483
      %v5503 = vadd.f32 %v5294, %v5411
      %v5504 = vadd.f32 %v5297, %v5484
      %v5505 = vadd.f32 %v5300, %v5414
      %v5506 = vadd.f32 %v5303, %v5485
      %v5507 = vadd.f32 %v5306, %v5417
      %v5508 = vadd.f32 %v5309, %v5486
      %v5509 = vadd.f32 %v5312, %v5420
      %v5510 = vadd.f32 %v5315, %v5487
      %v5511 = vadd.f32 %v5318, %v5423
      %v5512 = vadd.f32 %v5321, %v5488
      %v5513 = vadd.f32 %v5324, %v5426
      %v5514 = vadd.f32 %v5327, %v5489
      %v5515 = vadd.f32 %v5330, %v5429
      %v5516 = vadd.f32 %v5333, %v5490
      %v5517 = vadd.f32 %v5336, %v5432
      %v5518 = vadd.f32 %v5339, %v5491
      %v5519 = vadd.f32 %v5342, %v5435
      %v5520 = vadd.f32 %v5345, %v5492
      %v5521 = vadd.f32 %v5348, %v5438
      %v5522 = vadd.f32 %v5351, %v5493
      %v5523 = vadd.f32 %v5354, %v5441
      %v5524 = vadd.f32 %v5357, %v5494
      %v5525 = vadd.f32 %v5360, %v5444
      %v5526 = vadd.f32 %v5363, %v5495
      %v5527 = vadd.f32 %v5366, %v5447
      %v5560 = vrot.slane %v5274, 1
      %v5561 = vrot.slane %v5277, 1
      %v5562 = vsel %vm2887, %v5560, %v5561
      %v5563 = vrot.slane %v5280, 1
      %v5564 = vrot.slane %v5283, 1
      %v5565 = vsel %vm2887, %v5563, %v5564
      %v5566 = vrot.slane %v5286, 1
      %v5567 = vrot.slane %v5289, 1
      %v5568 = vsel %vm2887, %v5566, %v5567
      %v5569 = vrot.slane %v5292, 1
      %v5570 = vrot.slane %v5295, 1
      %v5571 = vsel %vm2887, %v5569, %v5570
      %v5572 = vrot.slane %v5298, 1
      %v5573 = vrot.slane %v5301, 1
      %v5574 = vsel %vm2887, %v5572, %v5573
      %v5575 = vrot.slane %v5304, 1
      %v5576 = vrot.slane %v5307, 1
      %v5577 = vsel %vm2887, %v5575, %v5576
      %v5578 = vrot.slane %v5310, 1
      %v5579 = vrot.slane %v5313, 1
      %v5580 = vsel %vm2887, %v5578, %v5579
      %v5581 = vrot.slane %v5316, 1
      %v5582 = vrot.slane %v5319, 1
      %v5583 = vsel %vm2887, %v5581, %v5582
      %v5584 = vrot.slane %v5322, 1
      %v5585 = vrot.slane %v5325, 1
      %v5586 = vsel %vm2887, %v5584, %v5585
      %v5587 = vrot.slane %v5328, 1
      %v5588 = vrot.slane %v5331, 1
      %v5589 = vsel %vm2887, %v5587, %v5588
      %v5590 = vrot.slane %v5334, 1
      %v5591 = vrot.slane %v5337, 1
      %v5592 = vsel %vm2887, %v5590, %v5591
      %v5593 = vrot.slane %v5340, 1
      %v5594 = vrot.slane %v5343, 1
      %v5595 = vsel %vm2887, %v5593, %v5594
      %v5596 = vrot.slane %v5346, 1
      %v5597 = vrot.slane %v5349, 1
      %v5598 = vsel %vm2887, %v5596, %v5597
      %v5599 = vrot.slane %v5352, 1
      %v5600 = vrot.slane %v5355, 1
      %v5601 = vsel %vm2887, %v5599, %v5600
      %v5602 = vrot.slane %v5358, 1
      %v5603 = vrot.slane %v5361, 1
      %v5604 = vsel %vm2887, %v5602, %v5603
      %v5605 = vrot.slane %v5364, 1
      %v5606 = vrot.slane %v5367, 1
      %v5607 = vsel %vm2887, %v5605, %v5606
      %v5640 = vsel %vm2887, %v5561, 0.0
      %v5641 = vsel %vm2887, %v5564, 0.0
      %v5642 = vsel %vm2887, %v5567, 0.0
      %v5643 = vsel %vm2887, %v5570, 0.0
      %v5644 = vsel %vm2887, %v5573, 0.0
      %v5645 = vsel %vm2887, %v5576, 0.0
      %v5646 = vsel %vm2887, %v5579, 0.0
      %v5647 = vsel %vm2887, %v5582, 0.0
      %v5648 = vsel %vm2887, %v5585, 0.0
      %v5649 = vsel %vm2887, %v5588, 0.0
      %v5650 = vsel %vm2887, %v5591, 0.0
      %v5651 = vsel %vm2887, %v5594, 0.0
      %v5652 = vsel %vm2887, %v5597, 0.0
      %v5653 = vsel %vm2887, %v5600, 0.0
      %v5654 = vsel %vm2887, %v5603, 0.0
      %v5655 = vsel %vm2887, %v5606, 0.0
      %v5656 = vadd.f32 %v5496, %v5562
      %v5657 = vadd.f32 %v5497, %v5640
      %v5658 = vadd.f32 %v5498, %v5565
      %v5659 = vadd.f32 %v5499, %v5641
      %v5660 = vadd.f32 %v5500, %v5568
      %v5661 = vadd.f32 %v5501, %v5642
      %v5662 = vadd.f32 %v5502, %v5571
      %v5663 = vadd.f32 %v5503, %v5643
      %v5664 = vadd.f32 %v5504, %v5574
      %v5665 = vadd.f32 %v5505, %v5644
      %v5666 = vadd.f32 %v5506, %v5577
      %v5667 = vadd.f32 %v5507, %v5645
      %v5668 = vadd.f32 %v5508, %v5580
      %v5669 = vadd.f32 %v5509, %v5646
      %v5670 = vadd.f32 %v5510, %v5583
      %v5671 = vadd.f32 %v5511, %v5647
      %v5672 = vadd.f32 %v5512, %v5586
      %v5673 = vadd.f32 %v5513, %v5648
      %v5674 = vadd.f32 %v5514, %v5589
      %v5675 = vadd.f32 %v5515, %v5649
      %v5676 = vadd.f32 %v5516, %v5592
      %v5677 = vadd.f32 %v5517, %v5650
      %v5678 = vadd.f32 %v5518, %v5595
      %v5679 = vadd.f32 %v5519, %v5651
      %v5680 = vadd.f32 %v5520, %v5598
      %v5681 = vadd.f32 %v5521, %v5652
      %v5682 = vadd.f32 %v5522, %v5601
      %v5683 = vadd.f32 %v5523, %v5653
      %v5684 = vadd.f32 %v5524, %v5604
      %v5685 = vadd.f32 %v5525, %v5654
      %v5686 = vadd.f32 %v5526, %v5607
      %v5687 = vadd.f32 %v5527, %v5655
      %v5688 = vld [vmem:[%s1866] sm:$0xf]
      %v5689 = vld [vmem:[%s1866 + $0x4] sm:$0xf]
      %v5690 = vld [vmem:[%s1866 + $0x8] sm:$0xf]
      %v5691 = vld [vmem:[%s1866 + $0xc] sm:$0xf]
      %v5692 = vld [vmem:[%s1866 + $0x10] sm:$0xf]
      %v5693 = vld [vmem:[%s1866 + $0x14] sm:$0xf]
      %v5694 = vld [vmem:[%s1866 + $0x18] sm:$0xf]
      %v5695 = vld [vmem:[%s1866 + $0x1c] sm:$0xf]
      %v5696 = vld [vmem:[%s1866 + $0x20] sm:$0xf]
      %v5697 = vld [vmem:[%s1866 + $0x24] sm:$0xf]
      %v5698 = vld [vmem:[%s1866 + $0x28] sm:$0xf]
      %v5699 = vld [vmem:[%s1866 + $0x2c] sm:$0xf]
      %v5700 = vld [vmem:[%s1866 + $0x30] sm:$0xf]
      %v5701 = vld [vmem:[%s1866 + $0x34] sm:$0xf]
      %v5702 = vld [vmem:[%s1866 + $0x38] sm:$0xf]
      %v5703 = vld [vmem:[%s1866 + $0x3c] sm:$0xf]
      %v5704 = vld [vmem:[%s1866 + $0x40] sm:$0xf]
      %v5705 = vld [vmem:[%s1866 + $0x44] sm:$0xf]
      %v5706 = vld [vmem:[%s1866 + $0x48] sm:$0xf]
      %v5707 = vld [vmem:[%s1866 + $0x4c] sm:$0xf]
      %v5708 = vld [vmem:[%s1866 + $0x50] sm:$0xf]
      %v5709 = vld [vmem:[%s1866 + $0x54] sm:$0xf]
      %v5710 = vld [vmem:[%s1866 + $0x58] sm:$0xf]
      %v5711 = vld [vmem:[%s1866 + $0x5c] sm:$0xf]
      %v5712 = vld [vmem:[%s1866 + $0x60] sm:$0xf]
      %v5713 = vld [vmem:[%s1866 + $0x64] sm:$0xf]
      %v5714 = vld [vmem:[%s1866 + $0x68] sm:$0xf]
      %v5715 = vld [vmem:[%s1866 + $0x6c] sm:$0xf]
      %v5716 = vld [vmem:[%s1866 + $0x70] sm:$0xf]
      %v5717 = vld [vmem:[%s1866 + $0x74] sm:$0xf]
      %v5718 = vld [vmem:[%s1866 + $0x78] sm:$0xf]
      %v5719 = vld [vmem:[%s1866 + $0x7c] sm:$0xf]
      %v5720 = vunpack.c.l.bf16 %v5688
      %v5721 = vunpack.c.l.bf16 %v5689
      %v5722 = vunpack.c.l.bf16 %v5690
      %v5723 = vunpack.c.l.bf16 %v5691
      %v5724 = vunpack.c.l.bf16 %v5692
      %v5725 = vunpack.c.l.bf16 %v5693
      %v5726 = vunpack.c.l.bf16 %v5694
      %v5727 = vunpack.c.l.bf16 %v5695
      %v5728 = vunpack.c.l.bf16 %v5696
      %v5729 = vunpack.c.l.bf16 %v5697
      %v5730 = vunpack.c.l.bf16 %v5698
      %v5731 = vunpack.c.l.bf16 %v5699
      %v5732 = vunpack.c.l.bf16 %v5700
      %v5733 = vunpack.c.l.bf16 %v5701
      %v5734 = vunpack.c.l.bf16 %v5702
      %v5735 = vunpack.c.l.bf16 %v5703
      %v5736 = vunpack.c.l.bf16 %v5704
      %v5737 = vunpack.c.l.bf16 %v5705
      %v5738 = vunpack.c.l.bf16 %v5706
      %v5739 = vunpack.c.l.bf16 %v5707
      %v5740 = vunpack.c.l.bf16 %v5708
      %v5741 = vunpack.c.l.bf16 %v5709
      %v5742 = vunpack.c.l.bf16 %v5710
      %v5743 = vunpack.c.l.bf16 %v5711
      %v5744 = vunpack.c.l.bf16 %v5712
      %v5745 = vunpack.c.l.bf16 %v5713
      %v5746 = vunpack.c.l.bf16 %v5714
      %v5747 = vunpack.c.l.bf16 %v5715
      %v5748 = vunpack.c.l.bf16 %v5716
      %v5749 = vunpack.c.l.bf16 %v5717
      %v5750 = vunpack.c.l.bf16 %v5718
      %v5751 = vunpack.c.l.bf16 %v5719
      %v5752 = vld [vmem:[%s5] sm:$0x1]
      %v5754 = vlaneseq
      %v5755 = vshrl.u32 %v5754, 7
      %v5756 = vsub.s32 0, %v5755
      %v5757 = vrot.slane %v5752, %v5756
      %v5759 = vmul.f32 %v5656, %v5757
      %v5760 = vmul.f32 %v5657, %v5757
      %v5761 = vmul.f32 %v5658, %v5757
      %v5762 = vmul.f32 %v5659, %v5757
      %v5763 = vmul.f32 %v5660, %v5757
      %v5764 = vmul.f32 %v5661, %v5757
      %v5765 = vmul.f32 %v5662, %v5757
      %v5766 = vmul.f32 %v5663, %v5757
      %v5767 = vmul.f32 %v5664, %v5757
      %v5768 = vmul.f32 %v5665, %v5757
      %v5769 = vmul.f32 %v5666, %v5757
      %v5770 = vmul.f32 %v5667, %v5757
      %v5771 = vmul.f32 %v5668, %v5757
      %v5772 = vmul.f32 %v5669, %v5757
      %v5773 = vmul.f32 %v5670, %v5757
      %v5774 = vmul.f32 %v5671, %v5757
      %v5775 = vmul.f32 %v5672, %v5757
      %v5776 = vmul.f32 %v5673, %v5757
      %v5777 = vmul.f32 %v5674, %v5757
      %v5778 = vmul.f32 %v5675, %v5757
      %v5779 = vmul.f32 %v5676, %v5757
      %v5780 = vmul.f32 %v5677, %v5757
      %v5781 = vmul.f32 %v5678, %v5757
      %v5782 = vmul.f32 %v5679, %v5757
      %v5783 = vmul.f32 %v5680, %v5757
      %v5784 = vmul.f32 %v5681, %v5757
      %v5785 = vmul.f32 %v5682, %v5757
      %v5786 = vmul.f32 %v5683, %v5757
      %v5787 = vmul.f32 %v5684, %v5757
      %v5788 = vmul.f32 %v5685, %v5757
      %v5789 = vmul.f32 %v5686, %v5757
      %v5790 = vmul.f32 %v5687, %v5757
      %v5791 = vld [vmem:[%s6] sm:$0x1]
      %v5793 = vlaneseq
      %v5794 = vshrl.u32 %v5793, 7
      %v5795 = vsub.s32 0, %v5794
      %v5796 = vrot.slane %v5791, %v5795
      %v5798 = vadd.f32 %v5759, %v5796
      %v5799 = vadd.f32 %v5760, %v5796
      %v5800 = vadd.f32 %v5761, %v5796
      %v5801 = vadd.f32 %v5762, %v5796
      %v5802 = vadd.f32 %v5763, %v5796
      %v5803 = vadd.f32 %v5764, %v5796
      %v5804 = vadd.f32 %v5765, %v5796
      %v5805 = vadd.f32 %v5766, %v5796
      %v5806 = vadd.f32 %v5767, %v5796
      %v5807 = vadd.f32 %v5768, %v5796
      %v5808 = vadd.f32 %v5769, %v5796
      %v5809 = vadd.f32 %v5770, %v5796
      %v5810 = vadd.f32 %v5771, %v5796
      %v5811 = vadd.f32 %v5772, %v5796
      %v5812 = vadd.f32 %v5773, %v5796
      %v5813 = vadd.f32 %v5774, %v5796
      %v5814 = vadd.f32 %v5775, %v5796
      %v5815 = vadd.f32 %v5776, %v5796
      %v5816 = vadd.f32 %v5777, %v5796
      %v5817 = vadd.f32 %v5778, %v5796
      %v5818 = vadd.f32 %v5779, %v5796
      %v5819 = vadd.f32 %v5780, %v5796
      %v5820 = vadd.f32 %v5781, %v5796
      %v5821 = vadd.f32 %v5782, %v5796
      %v5822 = vadd.f32 %v5783, %v5796
      %v5823 = vadd.f32 %v5784, %v5796
      %v5824 = vadd.f32 %v5785, %v5796
      %v5825 = vadd.f32 %v5786, %v5796
      %v5826 = vadd.f32 %v5787, %v5796
      %v5827 = vadd.f32 %v5788, %v5796
      %v5828 = vadd.f32 %v5789, %v5796
      %v5829 = vadd.f32 %v5790, %v5796
      %v5830 = vadd.f32 %v5798, %v5720
      %v5831 = vadd.f32 %v5799, %v5721
      %v5832 = vadd.f32 %v5800, %v5722
      %v5833 = vadd.f32 %v5801, %v5723
      %v5834 = vadd.f32 %v5802, %v5724
      %v5835 = vadd.f32 %v5803, %v5725
      %v5836 = vadd.f32 %v5804, %v5726
      %v5837 = vadd.f32 %v5805, %v5727
      %v5838 = vadd.f32 %v5806, %v5728
      %v5839 = vadd.f32 %v5807, %v5729
      %v5840 = vadd.f32 %v5808, %v5730
      %v5841 = vadd.f32 %v5809, %v5731
      %v5842 = vadd.f32 %v5810, %v5732
      %v5843 = vadd.f32 %v5811, %v5733
      %v5844 = vadd.f32 %v5812, %v5734
      %v5845 = vadd.f32 %v5813, %v5735
      %v5846 = vadd.f32 %v5814, %v5736
      %v5847 = vadd.f32 %v5815, %v5737
      %v5848 = vadd.f32 %v5816, %v5738
      %v5849 = vadd.f32 %v5817, %v5739
      %v5850 = vadd.f32 %v5818, %v5740
      %v5851 = vadd.f32 %v5819, %v5741
      %v5852 = vadd.f32 %v5820, %v5742
      %v5853 = vadd.f32 %v5821, %v5743
      %v5854 = vadd.f32 %v5822, %v5744
      %v5855 = vadd.f32 %v5823, %v5745
      %v5856 = vadd.f32 %v5824, %v5746
      %v5857 = vadd.f32 %v5825, %v5747
      %v5858 = vadd.f32 %v5826, %v5748
      %v5859 = vadd.f32 %v5827, %v5749
      %v5860 = vadd.f32 %v5828, %v5750
      %v5861 = vadd.f32 %v5829, %v5751
      %v5862 = vmax.f32 %v5830, 0.0
      %v5863 = vmax.f32 %v5831, 0.0
      %v5864 = vmax.f32 %v5832, 0.0
      %v5865 = vmax.f32 %v5833, 0.0
      %v5866 = vmax.f32 %v5834, 0.0
      %v5867 = vmax.f32 %v5835, 0.0
      %v5868 = vmax.f32 %v5836, 0.0
      %v5869 = vmax.f32 %v5837, 0.0
      %v5870 = vmax.f32 %v5838, 0.0
      %v5871 = vmax.f32 %v5839, 0.0
      %v5872 = vmax.f32 %v5840, 0.0
      %v5873 = vmax.f32 %v5841, 0.0
      %v5874 = vmax.f32 %v5842, 0.0
      %v5875 = vmax.f32 %v5843, 0.0
      %v5876 = vmax.f32 %v5844, 0.0
      %v5877 = vmax.f32 %v5845, 0.0
      %v5878 = vmax.f32 %v5846, 0.0
      %v5879 = vmax.f32 %v5847, 0.0
      %v5880 = vmax.f32 %v5848, 0.0
      %v5881 = vmax.f32 %v5849, 0.0
      %v5882 = vmax.f32 %v5850, 0.0
      %v5883 = vmax.f32 %v5851, 0.0
      %v5884 = vmax.f32 %v5852, 0.0
      %v5885 = vmax.f32 %v5853, 0.0
      %v5886 = vmax.f32 %v5854, 0.0
      %v5887 = vmax.f32 %v5855, 0.0
      %v5888 = vmax.f32 %v5856, 0.0
      %v5889 = vmax.f32 %v5857, 0.0
      %v5890 = vmax.f32 %v5858, 0.0
      %v5891 = vmax.f32 %v5859, 0.0
      %v5892 = vmax.f32 %v5860, 0.0
      %v5893 = vmax.f32 %v5861, 0.0
      %v5894 = vpack.c.bf16 %v5863, %v5862
      %v5895 = vpack.c.bf16 %v5865, %v5864
      %v5896 = vpack.c.bf16 %v5867, %v5866
      %v5897 = vpack.c.bf16 %v5869, %v5868
      %v5898 = vpack.c.bf16 %v5871, %v5870
      %v5899 = vpack.c.bf16 %v5873, %v5872
      %v5900 = vpack.c.bf16 %v5875, %v5874
      %v5901 = vpack.c.bf16 %v5877, %v5876
      %v5902 = vpack.c.bf16 %v5879, %v5878
      %v5903 = vpack.c.bf16 %v5881, %v5880
      %v5904 = vpack.c.bf16 %v5883, %v5882
      %v5905 = vpack.c.bf16 %v5885, %v5884
      %v5906 = vpack.c.bf16 %v5887, %v5886
      %v5907 = vpack.c.bf16 %v5889, %v5888
      %v5908 = vpack.c.bf16 %v5891, %v5890
      %v5909 = vpack.c.bf16 %v5893, %v5892
      %v5926 = vunpack.c.l.b16 %v5894
      %v5927 = vunpack.c.h.b16 %v5894
      %v5928 = vunpack.c.l.b16 %v5895
      %v5929 = vunpack.c.h.b16 %v5895
      %v5930 = vunpack.c.l.b16 %v5896
      %v5931 = vunpack.c.h.b16 %v5896
      %v5932 = vunpack.c.l.b16 %v5897
      %v5933 = vunpack.c.h.b16 %v5897
      %v5934 = vunpack.c.l.b16 %v5898
      %v5935 = vunpack.c.h.b16 %v5898
      %v5936 = vunpack.c.l.b16 %v5899
      %v5937 = vunpack.c.h.b16 %v5899
      %v5938 = vunpack.c.l.b16 %v5900
      %v5939 = vunpack.c.h.b16 %v5900
      %v5940 = vunpack.c.l.b16 %v5901
      %v5941 = vunpack.c.h.b16 %v5901
      %v5942 = vunpack.c.l.b16 %v5902
      %v5943 = vunpack.c.h.b16 %v5902
      %v5944 = vunpack.c.l.b16 %v5903
      %v5945 = vunpack.c.h.b16 %v5903
      %v5946 = vunpack.c.l.b16 %v5904
      %v5947 = vunpack.c.h.b16 %v5904
      %v5948 = vunpack.c.l.b16 %v5905
      %v5949 = vunpack.c.h.b16 %v5905
      %v5950 = vunpack.c.l.b16 %v5906
      %v5951 = vunpack.c.h.b16 %v5906
      %v5952 = vunpack.c.l.b16 %v5907
      %v5953 = vunpack.c.h.b16 %v5907
      %v5954 = vunpack.c.l.b16 %v5908
      %v5955 = vunpack.c.h.b16 %v5908
      %v5956 = vunpack.c.l.b16 %v5909
      %v5957 = vunpack.c.h.b16 %v5909
      %v5958 = vpack.c.b16 %v5926, %v5926
      %v5959 = vpack.c.b16 %v5927, %v5927
      %v5960 = vpack.c.b16 %v5928, %v5928
      %v5961 = vpack.c.b16 %v5929, %v5929
      %v5962 = vpack.c.b16 %v5930, %v5930
      %v5963 = vpack.c.b16 %v5931, %v5931
      %v5964 = vpack.c.b16 %v5932, %v5932
      %v5965 = vpack.c.b16 %v5933, %v5933
      %v5966 = vpack.c.b16 %v5934, %v5934
      %v5967 = vpack.c.b16 %v5935, %v5935
      %v5968 = vpack.c.b16 %v5936, %v5936
      %v5969 = vpack.c.b16 %v5937, %v5937
      %v5970 = vpack.c.b16 %v5938, %v5938
      %v5971 = vpack.c.b16 %v5939, %v5939
      %v5972 = vpack.c.b16 %v5940, %v5940
      %v5973 = vpack.c.b16 %v5941, %v5941
      %v5974 = vpack.c.b16 %v5942, %v5942
      %v5975 = vpack.c.b16 %v5943, %v5943
      %v5976 = vpack.c.b16 %v5944, %v5944
      %v5977 = vpack.c.b16 %v5945, %v5945
      %v5978 = vpack.c.b16 %v5946, %v5946
      %v5979 = vpack.c.b16 %v5947, %v5947
      %v5980 = vpack.c.b16 %v5948, %v5948
      %v5981 = vpack.c.b16 %v5949, %v5949
      %v5982 = vpack.c.b16 %v5950, %v5950
      %v5983 = vpack.c.b16 %v5951, %v5951
      %v5984 = vpack.c.b16 %v5952, %v5952
      %v5985 = vpack.c.b16 %v5953, %v5953
      %v5986 = vpack.c.b16 %v5954, %v5954
      %v5987 = vpack.c.b16 %v5955, %v5955
      %v5988 = vpack.c.b16 %v5956, %v5956
      %v5989 = vpack.c.b16 %v5957, %v5957
      %6022 = vst [vmem:[%s256] sm:$0xf] %v5958
      %6023 = vst [vmem:[%s256 + $0x4] sm:$0xf] %v5959
      %6024 = vst [vmem:[%s256 + $0x8] sm:$0xf] %v5960
      %6025 = vst [vmem:[%s256 + $0xc] sm:$0xf] %v5961
      %6026 = vst [vmem:[%s256 + $0x10] sm:$0xf] %v5962
      %6027 = vst [vmem:[%s256 + $0x14] sm:$0xf] %v5963
      %6028 = vst [vmem:[%s256 + $0x18] sm:$0xf] %v5964
      %6029 = vst [vmem:[%s256 + $0x1c] sm:$0xf] %v5965
      %6030 = vst [vmem:[%s256 + $0x20] sm:$0xf] %v5966
      %6031 = vst [vmem:[%s256 + $0x24] sm:$0xf] %v5967
      %6032 = vst [vmem:[%s256 + $0x28] sm:$0xf] %v5968
      %6033 = vst [vmem:[%s256 + $0x2c] sm:$0xf] %v5969
      %6034 = vst [vmem:[%s256 + $0x30] sm:$0xf] %v5970
      %6035 = vst [vmem:[%s256 + $0x34] sm:$0xf] %v5971
      %6036 = vst [vmem:[%s256 + $0x38] sm:$0xf] %v5972
      %6037 = vst [vmem:[%s256 + $0x3c] sm:$0xf] %v5973
      %6038 = vst [vmem:[%s256 + $0x40] sm:$0xf] %v5974
      %6039 = vst [vmem:[%s256 + $0x44] sm:$0xf] %v5975
      %6040 = vst [vmem:[%s256 + $0x48] sm:$0xf] %v5976
      %6041 = vst [vmem:[%s256 + $0x4c] sm:$0xf] %v5977
      %6042 = vst [vmem:[%s256 + $0x50] sm:$0xf] %v5978
      %6043 = vst [vmem:[%s256 + $0x54] sm:$0xf] %v5979
      %6044 = vst [vmem:[%s256 + $0x58] sm:$0xf] %v5980
      %6045 = vst [vmem:[%s256 + $0x5c] sm:$0xf] %v5981
      %6046 = vst [vmem:[%s256 + $0x60] sm:$0xf] %v5982
      %6047 = vst [vmem:[%s256 + $0x64] sm:$0xf] %v5983
      %6048 = vst [vmem:[%s256 + $0x68] sm:$0xf] %v5984
      %6049 = vst [vmem:[%s256 + $0x6c] sm:$0xf] %v5985
      %6050 = vst [vmem:[%s256 + $0x70] sm:$0xf] %v5986
      %6051 = vst [vmem:[%s256 + $0x74] sm:$0xf] %v5987
      %6052 = vst [vmem:[%s256 + $0x78] sm:$0xf] %v5988
      %6053 = vst [vmem:[%s256 + $0x7c] sm:$0xf] %v5989
      %s6054 = smul.u32 16, %s23
      %p6055 = scmp.lt.s32.totalorder %s22, 1
      %s6056 = scalar_select %p6055, %s22, 1
      %p6057 = scmp.lt.s32.totalorder %s6054, 15
      %s6058 = scalar_select %p6057, %s6054, 15
      %s6059 = smul.addr %s6058, 2
      %s6060 = smul.addr %s6056, 32
      %s6061 = sadd.s32 %s6059, %s6060
      %s6062 = smul.addr %s6061, 4
      %s6063 = scalar_lea.vmem %s7, %s6062
      // Predicated region
      $region125: #{basic_block_forward.1} parent=43 // pred_check
        %p6064 = pneg %p176
      $region126: #{basic_block_forward.1} parent=43 // pred_check_branch
        %6066 = sbr.rel (%p6064) target = $region128
      $region127: #{basic_block_forward.1} parent=43 // pred_region
        %s6067 = smul.u32 16, %s23
      $region128: #{basic_block_forward.1} parent=43 // pred_fallthru
        _
    $region44: #{basic_block_forward.1} parent=5 // pred_fallthru
      _
    %p6068 = scmp.le.s32.totalorder 2, %s13
    // Predicated region
    $region129: #{basic_block_forward.1} parent=5 // pred_check
      %p6069 = pneg %p6068
    $region130: #{basic_block_forward.1} parent=5 // pred_check_branch
      %6071 = sbr.rel (%p6069) target = $region132
    $region131: #{basic_block_forward.1} parent=5 // pred_region
      %s6072 = ssub.s32 %s13, 2
      // Predicated region
      $region133: #{basic_block_forward.1} parent=131 // pred_check
        %p6073 = pneg %p182
      $region134: #{basic_block_forward.1} parent=131 // pred_check_branch
        %6075 = sbr.rel (%p6073) target = $region136
      $region135: #{basic_block_forward.1} parent=131 // pred_region
        %s6076 = smul.u32 16, %s25
        %p6077 = scmp.lt.s32.totalorder %s24, 1
        %s6078 = scalar_select %p6077, %s24, 1
        %p6079 = scmp.lt.s32.totalorder %s6076, 15
        %s6080 = scalar_select %p6079, %s6076, 15
        %s6081 = smul.addr %s6080, 2
        %s6082 = smul.addr %s6078, 32
        %s6083 = sadd.s32 %s6081, %s6082
        %s6084 = smul.addr %s6083, 4
        %s6085 = scalar_lea.vmem %s7, %s6084
      $region136: #{basic_block_forward.1} parent=131 // pred_fallthru
        _
    $region132: #{basic_block_forward.1} parent=5 // pred_fallthru
      _
  $region6: #{basic_block_forward.1} parent=0 // loop_footer
    %s17 = sadd.s32 1, %s13
  $region7: #{basic_block_forward.1} parent=0 // loop_footer_branch
    %12 = sbr.rel target = $region3
  $region8: #{basic_block_forward.1} parent=0 // loop_exit
    _
  %6086 = vsyncmov [#allocation4]
  %s6087 = vpop.sfrf %6086
  %p6088 = scmp.eq.s32.totalorder %s6087, 0
  %p6089 = pneg %p6088
  %6091 = shalt.err (%p6089)
  %s6092 = scalar_lea.sflag [#allocation4], 1
  %6093 = vsyncmov %s6092
  %s6094 = vpop.sfrf %6093
  %p6095 = scmp.eq.s32.totalorder %s6094, 0
  %p6096 = pneg %p6095
  %6098 = shalt.err (%p6096)

</llo_original>
